<compile_context>
chip_gen: v5e
topology: v5e:2x2
jax: 0.10.0
libtpu: 0.0.40
codegen_flags: <defaults>
</compile_context>

<pallas_src>
import functools

import numpy as np
import jax
import jax.numpy as jnp
from jax.experimental import pallas as pl
from jax.experimental.pallas import tpu as pltpu


# --------------------------------- kernel -----------------------------------

def fde_kernel(patches_ref, masks_ref, scale_ref, shift_ref,
               w_low_ref, w_high_ref, w_n1_ref, w_n2_ref, w_n3_ref,
               w_a1l_ref, w_a1h_ref, w_a2_ref, bias_ref,
               out_ref, *, Wf):
    C2, N = out_ref.shape
    nm = w_n1_ref.shape[1]

    patches = patches_ref[...]            # [25*C2 + 1, N]  (trailing ones-row)
    biases = bias_ref[...]                # [max(nm, C2), 8] bias columns

    # low (3x3 embedded in 5x5 taps) / high (5x5) grouped convs:
    # one lane-dense MXU dot each; biases folded against the ones-row.
    low = jnp.dot(w_low_ref[...], patches, preferred_element_type=jnp.float32)
    high = jnp.dot(w_high_ref[...], patches, preferred_element_type=jnp.float32)

    def conv3(x, w_ref, b):
        # 'same' 3x3 conv on a flat [Cin, N] activation (batch folded into N):
        # per-tap lane roll (XLU) + boundary mask (VPU) + accumulating MXU dot.
        cout = w_ref.shape[1]
        acc = jnp.zeros((cout, N), jnp.float32)
        t = 0
        for di in (-1, 0, 1):
            for dj in (-1, 0, 1):
                s = di * Wf + dj                      # flat-lane source offset
                xs = x if s == 0 else pltpu.roll(x, shift=(-s) % N, axis=1)
                xs = xs * masks_ref[t]                # zero out-of-image taps
                acc = acc + jnp.dot(w_ref[t], xs,
                                    preferred_element_type=jnp.float32)
                t += 1
        return acc + b

    def leaky(v):
        return jnp.where(v > 0, v, 0.2 * v)

    # noise model on the high-frequency branch
    n1 = leaky(conv3(high, w_n1_ref, biases[:nm, 0:1]))
    n2 = leaky(conv3(n1, w_n2_ref, biases[:nm, 1:2]))
    noise = conv3(n2, w_n3_ref, biases[:C2, 2:3])
    high = high - noise

    # frequency attention (1x1 convs == channel matmuls); first layer split
    # into two accumulating dots so the [low; high] concat never materializes.
    ah = jnp.dot(w_a1l_ref[...], low, preferred_element_type=jnp.float32)
    ah = ah + jnp.dot(w_a1h_ref[...], high, preferred_element_type=jnp.float32)
    ah = jnp.maximum(ah + biases[:nm, 3:4], 0.0)
    z = jnp.dot(w_a2_ref[...], ah, preferred_element_type=jnp.float32) + biases[:C2, 4:5]
    att = 1.0 / (1.0 + jnp.exp(-z))

    balanced = low * att + high * (1.0 - att)

    # FiLM (gamma/beta) x light embedding, pre-expanded along lanes.
    out_ref[...] = balanced * scale_ref[...] + shift_ref[...]


# ------------------------------ parameter setup ------------------------------

def init_params(key, in_channels=3, low_k=3, high_k=5, nm_dim=16):
    C = in_channels
    C2 = 2 * C
    ks = jax.random.split(key, 18)

    def rnd(k, shape, scale=0.1):
        return (scale * jax.random.normal(k, shape)).astype(jnp.float32)

    p = {}
    # grouped convs: PyTorch OIHW weight [2C, 2, k, k], groups=C
    p["low_w"] = rnd(ks[0], (C2, 2, low_k, low_k)); p["low_b"] = rnd(ks[1], (C2,))
    p["high_w"] = rnd(ks[2], (C2, 2, high_k, high_k)); p["high_b"] = rnd(ks[3], (C2,))
    # noise model
    p["nm1_w"] = rnd(ks[4], (nm_dim, C2, 3, 3)); p["nm1_b"] = rnd(ks[5], (nm_dim,))
    p["nm2_w"] = rnd(ks[6], (nm_dim, nm_dim, 3, 3)); p["nm2_b"] = rnd(ks[7], (nm_dim,))
    p["nm3_w"] = rnd(ks[8], (C2, nm_dim, 3, 3)); p["nm3_b"] = rnd(ks[9], (C2,))
    # frequency attention (1x1 convs)
    p["att1_w"] = rnd(ks[10], (nm_dim, 2 * C2, 1, 1)); p["att1_b"] = rnd(ks[11], (nm_dim,))
    p["att2_w"] = rnd(ks[12], (C2, nm_dim, 1, 1)); p["att2_b"] = rnd(ks[13], (C2,))
    # FiLM
    p["gamma"] = jnp.ones((1, C2, 1, 1), jnp.float32)
    p["beta"] = jnp.zeros((1, C2, 1, 1), jnp.float32)
    # light embedding: Linear(1,16), Linear(16,2C)
    p["l1_w"] = rnd(ks[14], (16, 1)); p["l1_b"] = rnd(ks[15], (16,))
    p["l2_w"] = rnd(ks[16], (C2, 16)); p["l2_b"] = rnd(ks[17], (C2,))
    return p


def _grouped_to_dense(w, groups):
    """Grouped OIHW [Cout, Cin/groups, k, k] -> block-diagonal dense OIHW."""
    Cout, gin, k, _ = w.shape
    Cin = gin * groups
    opg = Cout // groups
    dense = jnp.zeros((Cout, Cin, k, k), jnp.float32)
    for g in range(groups):
        dense = dense.at[g * opg:(g + 1) * opg, g * gin:(g + 1) * gin].set(
            w[g * opg:(g + 1) * opg])
    return dense


def _cf_weight(w_oihw):
    """OIHW [Cout, Cin, k, k] -> [Cout, k*k*Cin] with (kh, kw, cin) column order
    -- matches the tap-major / channel-minor patch rows built in the wrapper."""
    Cout, Cin, k, _ = w_oihw.shape
    return jnp.transpose(w_oihw, (0, 2, 3, 1)).reshape(Cout, k * k * Cin)


def _taps3(w_oihw):
    """OIHW [Cout, Cin, 3, 3] -> [9, Cout, Cin] (tap-major, for per-tap dots)."""
    Cout, Cin, _, _ = w_oihw.shape
    return jnp.transpose(w_oihw, (2, 3, 0, 1)).reshape(9, Cout, Cin)


def pack_params(params, in_channels):
    """One-time repack of PyTorch-layout params into kernel layout (hoisted
    out of the traced forward per perf feedback)."""
    C = in_channels
    C2 = 2 * C
    low_dense = _grouped_to_dense(params["low_w"], C)        # [C2, C2, 3, 3]
    high_dense = _grouped_to_dense(params["high_w"], C)      # [C2, C2, 5, 5]
    # embed the 3x3 low-pass into the central taps of a 5x5 so both grouped
    # convs share the single wrapper-built 5x5 patch matrix
    low5 = jnp.zeros((C2, C2, 5, 5), jnp.float32).at[:, :, 1:4, 1:4].set(low_dense)
    w_low = jnp.concatenate([_cf_weight(low5), params["low_b"][:, None]], axis=1)
    w_high = jnp.concatenate([_cf_weight(high_dense), params["high_b"][:, None]], axis=1)

    w_a1 = params["att1_w"][:, :, 0, 0]                      # [nm, 2*C2]
    nm = w_a1.shape[0]
    BM = max(nm, C2)

    def col(b):
        return jnp.pad(b, (0, BM - b.shape[0]))

    bias_pack = jnp.stack(
        [col(params["nm1_b"]), col(params["nm2_b"]), col(params["nm3_b"]),
         col(params["att1_b"]), col(params["att2_b"]),
         jnp.zeros((BM,), jnp.float32), jnp.zeros((BM,), jnp.float32),
         jnp.zeros((BM,), jnp.float32)], axis=1)             # [BM, 8]

    packed = dict(
        w_low=w_low, w_high=w_high,
        w_n1=_taps3(params["nm1_w"]), w_n2=_taps3(params["nm2_w"]),
        w_n3=_taps3(params["nm3_w"]),
        w_a1l=w_a1[:, :C2], w_a1h=w_a1[:, C2:],
        w_a2=params["att2_w"][:, :, 0, 0],
        bias_pack=bias_pack,
        gamma=params["gamma"].reshape(-1), beta=params["beta"].reshape(-1),
        l1_w=params["l1_w"], l1_b=params["l1_b"],
        l2_w=params["l2_w"], l2_b=params["l2_b"])
    return jax.tree_util.tree_map(lambda a: jnp.asarray(a, jnp.float32), packed)


# --------------------------------- forward ----------------------------------

def frequency_domain_enhancer(packed, x, light_level=None):
    B, C, H, W = x.shape
    C2 = 2 * C

    # TODO(synk): rfft2 / irfft2 have no Pallas equivalent; XLA FFT around the kernel.
    xf = jnp.fft.rfft2(x.astype(jnp.float32))
    Wf = xf.shape[-1]
    x_freq = jnp.concatenate([jnp.real(xf), jnp.imag(xf)], axis=1)   # [B, C2, H, Wf]

    HW = H * Wf
    Nvalid = B * HW
    Npad = -(-Nvalid // 128) * 128          # lane axis: multiple of 128

    # wrapper-side 5x5 im2col (tap-major, channel-minor rows; batch folded
    # into the lane axis) + trailing ones-row for the folded conv biases.
    xpad = jnp.pad(x_freq, ((0, 0), (0, 0), (2, 2), (2, 2)))
    taps = [xpad[:, :, di:di + H, dj:dj + Wf]
            for di in range(5) for dj in range(5)]
    pat = jnp.stack(taps, axis=1).reshape(B, 25 * C2, HW)
    pat = jnp.transpose(pat, (1, 0, 2)).reshape(25 * C2, Nvalid)
    pat = jnp.pad(pat, ((0, 0), (0, Npad - Nvalid)))
    patches = jnp.concatenate([pat, jnp.ones((1, Npad), jnp.float32)], axis=0)

    # 3x3 tap validity masks over the flat lane axis (compile-time constants).
    idx = np.arange(Npad)
    within = idx < Nvalid
    p = idx % HW
    ii = p // Wf
    jj = p % Wf
    m = [within & (ii + di >= 0) & (ii + di < H) & (jj + dj >= 0) & (jj + dj < Wf)
         for di in (-1, 0, 1) for dj in (-1, 0, 1)]
    tap_masks = jnp.asarray(np.stack(m).astype(np.float32).reshape(9, 1, Npad))

    # FiLM (gamma/beta) x light embedding -> per-image scale/shift, expanded
    # along the batch-folded lane axis:  (g*x + b)*e == (g*e)*x + (b*e).
    if light_level is None:
        emb = jnp.ones((B, C2), jnp.float32)
    else:
        ll = light_level.reshape(B, 1).astype(jnp.float32)
        h1 = jnp.maximum(ll @ packed["l1_w"].T + packed["l1_b"][None, :], 0.0)
        emb = h1 @ packed["l2_w"].T + packed["l2_b"][None, :]
    scale = packed["gamma"][None, :] * emb                            # [B, C2]
    shift = packed["beta"][None, :] * emb
    scale_n = jnp.pad(jnp.repeat(scale.T, HW, axis=1), ((0, 0), (0, Npad - Nvalid)))
    shift_n = jnp.pad(jnp.repeat(shift.T, HW, axis=1), ((0, 0), (0, Npad - Nvalid)))

    args = [patches, tap_masks, scale_n.astype(jnp.float32), shift_n.astype(jnp.float32),
            packed["w_low"], packed["w_high"],
            packed["w_n1"], packed["w_n2"], packed["w_n3"],
            packed["w_a1l"], packed["w_a1h"], packed["w_a2"],
            packed["bias_pack"]]

    def fullspec(a):
        zeros = (0,) * a.ndim
        return pl.BlockSpec(a.shape, lambda g, _z=zeros: _z)

    out_flat = pl.pallas_call(
        functools.partial(fde_kernel, Wf=Wf),
        out_shape=jax.ShapeDtypeStruct((C2, Npad), jnp.float32),
        # batch folded into lanes -> single step (no per-image pipeline
        # overhead on 1-TC v5e/v6e; on v7x a 2-way N split with "parallel"
        # semantics could feed both TensorCores).
        grid=(1,),
        in_specs=[fullspec(a) for a in args],
        out_specs=pl.BlockSpec((C2, Npad), lambda g: (0, 0)),
        compiler_params=pltpu.CompilerParams(
            dimension_semantics=("arbitrary",)),
    )(*args)

    balanced = out_flat[:, :Nvalid].reshape(C2, B, H, Wf).transpose(1, 0, 2, 3)
    b_real, b_imag = balanced[:, :C], balanced[:, C:]
    # NOTE: s=(H, 2*Wf-2) mirrors the PyTorch module (original width for even W).
    enhanced = jnp.fft.irfft2(b_real + 1j * b_imag, s=(H, 2 * Wf - 2))
    # clamp fuses with the irfft epilogue under jit (no standalone kernel)
    return jnp.clip(enhanced, 0.0, 1.0).astype(jnp.float32)


# ------------------------- pure-JAX reference (check) ------------------------

def reference_forward(params, x, light_level):
    """XLA reference of the PyTorch module, used only to validate the kernel."""
    B, C, H, W = x.shape

    def conv(v, w, b, groups=1):
        y = jax.lax.conv_general_dilated(
            v, w, (1, 1), "SAME",
            dimension_numbers=("NCHW", "OIHW", "NCHW"),
            feature_group_count=groups, precision=jax.lax.Precision.HIGHEST)
        return y + b.reshape(1, -1, 1, 1)

    xf = jnp.fft.rfft2(x.astype(jnp.float32))
    x_freq = jnp.concatenate([jnp.real(xf), jnp.imag(xf)], axis=1)
    low = conv(x_freq, params["low_w"], params["low_b"], groups=C)
    high = conv(x_freq, params["high_w"], params["high_b"], groups=C)
    n = jax.nn.leaky_relu(conv(high, params["nm1_w"], params["nm1_b"]), 0.2)
    n = jax.nn.leaky_relu(conv(n, params["nm2_w"], params["nm2_b"]), 0.2)
    high = high - conv(n, params["nm3_w"], params["nm3_b"])
    att = jax.nn.sigmoid(conv(
        jax.nn.relu(conv(jnp.concatenate([low, high], axis=1),
                         params["att1_w"], params["att1_b"])),
        params["att2_w"], params["att2_b"]))
    bal = low * att + high * (1.0 - att)
    bal = bal * params["gamma"] + params["beta"]
    ll = light_level.reshape(B, 1).astype(jnp.float32)
    h1 = jax.nn.relu(ll @ params["l1_w"].T + params["l1_b"][None, :])
    emb = h1 @ params["l2_w"].T + params["l2_b"][None, :]
    bal = bal * emb.reshape(B, -1, 1, 1)
    br, bi = bal[:, :C], bal[:, C:]
    enh = jnp.fft.irfft2(br + 1j * bi, s=(H, bal.shape[-1] * 2 - 2))
    return jnp.clip(enh, 0.0, 1.0)


# ----------------------------------- main ------------------------------------

if __name__ == "__main__":
    key = jax.random.PRNGKey(0)
    k_x, k_l, k_p, k_g, k_b = jax.random.split(key, 5)

    B, C, H, W = 2, 3, 16, 16
    x = jax.random.uniform(k_x, (B, C, H, W), dtype=jnp.float32)
    light_level = jax.random.uniform(k_l, (B, 1), dtype=jnp.float32)

    params = init_params(k_p, in_channels=C)
    # perturb FiLM params away from their (1, 0) init so the folded
    # scale/shift path is actually exercised by the check below
    params["gamma"] = params["gamma"] + 0.1 * jax.random.normal(k_g, params["gamma"].shape)
    params["beta"] = params["beta"] + 0.1 * jax.random.normal(k_b, params["beta"].shape)

    packed = pack_params(params, in_channels=C)   # one-time weight repack

    fwd = jax.jit(frequency_domain_enhancer)
    out = jax.block_until_ready(fwd(packed, x, light_level))

    assert out.shape == (B, C, H, W), out.shape
    assert bool(jnp.all(out >= 0.0)) and bool(jnp.all(out <= 1.0))

    ref = jax.block_until_ready(jax.jit(reference_forward)(params, x, light_level))
    max_err = float(jnp.max(jnp.abs(out - ref)))
    assert max_err < 2e-3, f"kernel/reference mismatch: max_err={max_err}"

    print("KERNEL_OK")
</pallas_src>

<mosaic_0001>
module attributes {stable_mosaic.version = 11 : i64} {
  func.func @fde_kernel(%arg0: i32, %arg1: memref<151x384xf32, #tpu.memory_space<vmem>>, %arg2: memref<9x1x384xf32, #tpu.memory_space<vmem>>, %arg3: memref<6x384xf32, #tpu.memory_space<vmem>>, %arg4: memref<6x384xf32, #tpu.memory_space<vmem>>, %arg5: memref<6x151xf32, #tpu.memory_space<vmem>>, %arg6: memref<6x151xf32, #tpu.memory_space<vmem>>, %arg7: memref<9x16x6xf32, #tpu.memory_space<vmem>>, %arg8: memref<9x16x16xf32, #tpu.memory_space<vmem>>, %arg9: memref<9x6x16xf32, #tpu.memory_space<vmem>>, %arg10: memref<16x6xf32, #tpu.memory_space<vmem>>, %arg11: memref<16x6xf32, #tpu.memory_space<vmem>>, %arg12: memref<6x16xf32, #tpu.memory_space<vmem>>, %arg13: memref<16x8xf32, #tpu.memory_space<vmem>>, %arg14: memref<6x384xf32, #tpu.memory_space<vmem>>) attributes {dimension_semantics = [#tpu.dimension_semantics<arbitrary>], iteration_bounds = array<i64: 1>, scalar_prefetch = 0 : i64, scratch_operands = 0 : i64, tpu.core_type = #tpu.core_type<tc>, window_params = [{pipeline_mode = #tpu.pipeline_mode<synchronous>, transform_indices = @transform_0, window_bounds = array<i64: 151, 384>}, {pipeline_mode = #tpu.pipeline_mode<synchronous>, transform_indices = @transform_1, window_bounds = array<i64: 9, 1, 384>}, {pipeline_mode = #tpu.pipeline_mode<synchronous>, transform_indices = @transform_2, window_bounds = array<i64: 6, 384>}, {pipeline_mode = #tpu.pipeline_mode<synchronous>, transform_indices = @transform_3, window_bounds = array<i64: 6, 384>}, {pipeline_mode = #tpu.pipeline_mode<synchronous>, transform_indices = @transform_4, window_bounds = array<i64: 6, 151>}, {pipeline_mode = #tpu.pipeline_mode<synchronous>, transform_indices = @transform_5, window_bounds = array<i64: 6, 151>}, {pipeline_mode = #tpu.pipeline_mode<synchronous>, transform_indices = @transform_6, window_bounds = array<i64: 9, 16, 6>}, {pipeline_mode = #tpu.pipeline_mode<synchronous>, transform_indices = @transform_7, window_bounds = array<i64: 9, 16, 16>}, {pipeline_mode = #tpu.pipeline_mode<synchronous>, transform_indices = @transform_8, window_bounds = array<i64: 9, 6, 16>}, {pipeline_mode = #tpu.pipeline_mode<synchronous>, transform_indices = @transform_9, window_bounds = array<i64: 16, 6>}, {pipeline_mode = #tpu.pipeline_mode<synchronous>, transform_indices = @transform_10, window_bounds = array<i64: 16, 6>}, {pipeline_mode = #tpu.pipeline_mode<synchronous>, transform_indices = @transform_11, window_bounds = array<i64: 6, 16>}, {pipeline_mode = #tpu.pipeline_mode<synchronous>, transform_indices = @transform_12, window_bounds = array<i64: 16, 8>}, {pipeline_mode = #tpu.pipeline_mode<synchronous>, transform_indices = @transform_13, window_bounds = array<i64: 6, 384>}]} {
    %c0 = arith.constant 0 : index
    %c0_0 = arith.constant 0 : index
    %0 = vector.load %arg1[%c0, %c0_0] : memref<151x384xf32, #tpu.memory_space<vmem>>, vector<151x384xf32>
    %c0_1 = arith.constant 0 : index
    %c0_2 = arith.constant 0 : index
    %1 = vector.load %arg13[%c0_1, %c0_2] : memref<16x8xf32, #tpu.memory_space<vmem>>, vector<16x8xf32>
    %c0_3 = arith.constant 0 : index
    %c0_4 = arith.constant 0 : index
    %2 = vector.load %arg5[%c0_3, %c0_4] : memref<6x151xf32, #tpu.memory_space<vmem>>, vector<6x151xf32>
    %cst = arith.constant dense<0.000000e+00> : vector<6x384xf32>
    %3 = tpu.matmul %2, %0, %cst {dimension_numbers = #tpu.dot_dimension_numbers<[1], [0], [0], [1], [0, 0, 1, 1], [], []>} : vector<6x151xf32>, vector<151x384xf32>, vector<6x384xf32> -> vector<6x384xf32>
    %c0_5 = arith.constant 0 : index
    %c0_6 = arith.constant 0 : index
    %4 = vector.load %arg6[%c0_5, %c0_6] : memref<6x151xf32, #tpu.memory_space<vmem>>, vector<6x151xf32>
    %cst_7 = arith.constant dense<0.000000e+00> : vector<6x384xf32>
    %5 = tpu.matmul %4, %0, %cst_7 {dimension_numbers = #tpu.dot_dimension_numbers<[1], [0], [0], [1], [0, 0, 1, 1], [], []>} : vector<6x151xf32>, vector<151x384xf32>, vector<6x384xf32> -> vector<6x384xf32>
    %6 = vector.extract_strided_slice %1 {offsets = [0, 0], sizes = [16, 1], strides = [1, 1]} : vector<16x8xf32> to vector<16x1xf32>
    %cst_8 = arith.constant 0.000000e+00 : f32
    %7 = vector.broadcast %cst_8 : f32 to vector<16x384xf32>
    %c10_i32 = arith.constant 10 : i32
    %8 = tpu.dynamic_rotate %5 by %c10_i32 dim 1 : vector<6x384xf32>, i32 -> vector<6x384xf32>
    %c0_9 = arith.constant 0 : index
    %c0_10 = arith.constant 0 : index
    %c0_11 = arith.constant 0 : index
    %9 = vector.load %arg2[%c0_9, %c0_10, %c0_11] : memref<9x1x384xf32, #tpu.memory_space<vmem>>, vector<1x1x384xf32>
    %10 = vector.shape_cast %9 : vector<1x1x384xf32> to vector<1x384xf32>
    %11 = vector.broadcast %10 : vector<1x384xf32> to vector<6x384xf32>
    %12 = arith.mulf %8, %11 : vector<6x384xf32>
    %c0_12 = arith.constant 0 : index
    %c0_13 = arith.constant 0 : index
    %c0_14 = arith.constant 0 : index
    %13 = vector.load %arg7[%c0_12, %c0_13, %c0_14] : memref<9x16x6xf32, #tpu.memory_space<vmem>>, vector<1x16x6xf32>
    %14 = vector.shape_cast %13 : vector<1x16x6xf32> to vector<16x6xf32>
    %cst_15 = arith.constant dense<0.000000e+00> : vector<16x384xf32>
    %15 = tpu.matmul %14, %12, %cst_15 {dimension_numbers = #tpu.dot_dimension_numbers<[1], [0], [0], [1], [0, 0, 1, 1], [], []>} : vector<16x6xf32>, vector<6x384xf32>, vector<16x384xf32> -> vector<16x384xf32>
    %16 = arith.addf %7, %15 : vector<16x384xf32>
    %c9_i32 = arith.constant 9 : i32
    %17 = tpu.dynamic_rotate %5 by %c9_i32 dim 1 : vector<6x384xf32>, i32 -> vector<6x384xf32>
    %c1 = arith.constant 1 : index
    %c0_16 = arith.constant 0 : index
    %c0_17 = arith.constant 0 : index
    %18 = vector.load %arg2[%c1, %c0_16, %c0_17] : memref<9x1x384xf32, #tpu.memory_space<vmem>>, vector<1x1x384xf32>
    %19 = vector.shape_cast %18 : vector<1x1x384xf32> to vector<1x384xf32>
    %20 = vector.broadcast %19 : vector<1x384xf32> to vector<6x384xf32>
    %21 = arith.mulf %17, %20 : vector<6x384xf32>
    %c1_18 = arith.constant 1 : index
    %c0_19 = arith.constant 0 : index
    %c0_20 = arith.constant 0 : index
    %22 = vector.load %arg7[%c1_18, %c0_19, %c0_20] : memref<9x16x6xf32, #tpu.memory_space<vmem>>, vector<1x16x6xf32>
    %23 = vector.shape_cast %22 : vector<1x16x6xf32> to vector<16x6xf32>
    %cst_21 = arith.constant dense<0.000000e+00> : vector<16x384xf32>
    %24 = tpu.matmul %23, %21, %cst_21 {dimension_numbers = #tpu.dot_dimension_numbers<[1], [0], [0], [1], [0, 0, 1, 1], [], []>} : vector<16x6xf32>, vector<6x384xf32>, vector<16x384xf32> -> vector<16x384xf32>
    %25 = arith.addf %16, %24 : vector<16x384xf32>
    %c8_i32 = arith.constant 8 : i32
    %26 = tpu.dynamic_rotate %5 by %c8_i32 dim 1 : vector<6x384xf32>, i32 -> vector<6x384xf32>
    %c2 = arith.constant 2 : index
    %c0_22 = arith.constant 0 : index
    %c0_23 = arith.constant 0 : index
    %27 = vector.load %arg2[%c2, %c0_22, %c0_23] : memref<9x1x384xf32, #tpu.memory_space<vmem>>, vector<1x1x384xf32>
    %28 = vector.shape_cast %27 : vector<1x1x384xf32> to vector<1x384xf32>
    %29 = vector.broadcast %28 : vector<1x384xf32> to vector<6x384xf32>
    %30 = arith.mulf %26, %29 : vector<6x384xf32>
    %c2_24 = arith.constant 2 : index
    %c0_25 = arith.constant 0 : index
    %c0_26 = arith.constant 0 : index
    %31 = vector.load %arg7[%c2_24, %c0_25, %c0_26] : memref<9x16x6xf32, #tpu.memory_space<vmem>>, vector<1x16x6xf32>
    %32 = vector.shape_cast %31 : vector<1x16x6xf32> to vector<16x6xf32>
    %cst_27 = arith.constant dense<0.000000e+00> : vector<16x384xf32>
    %33 = tpu.matmul %32, %30, %cst_27 {dimension_numbers = #tpu.dot_dimension_numbers<[1], [0], [0], [1], [0, 0, 1, 1], [], []>} : vector<16x6xf32>, vector<6x384xf32>, vector<16x384xf32> -> vector<16x384xf32>
    %34 = arith.addf %25, %33 : vector<16x384xf32>
    %c1_i32 = arith.constant 1 : i32
    %35 = tpu.dynamic_rotate %5 by %c1_i32 dim 1 : vector<6x384xf32>, i32 -> vector<6x384xf32>
    %c3 = arith.constant 3 : index
    %c0_28 = arith.constant 0 : index
    %c0_29 = arith.constant 0 : index
    %36 = vector.load %arg2[%c3, %c0_28, %c0_29] : memref<9x1x384xf32, #tpu.memory_space<vmem>>, vector<1x1x384xf32>
    %37 = vector.shape_cast %36 : vector<1x1x384xf32> to vector<1x384xf32>
    %38 = vector.broadcast %37 : vector<1x384xf32> to vector<6x384xf32>
    %39 = arith.mulf %35, %38 : vector<6x384xf32>
    %c3_30 = arith.constant 3 : index
    %c0_31 = arith.constant 0 : index
    %c0_32 = arith.constant 0 : index
    %40 = vector.load %arg7[%c3_30, %c0_31, %c0_32] : memref<9x16x6xf32, #tpu.memory_space<vmem>>, vector<1x16x6xf32>
    %41 = vector.shape_cast %40 : vector<1x16x6xf32> to vector<16x6xf32>
    %cst_33 = arith.constant dense<0.000000e+00> : vector<16x384xf32>
    %42 = tpu.matmul %41, %39, %cst_33 {dimension_numbers = #tpu.dot_dimension_numbers<[1], [0], [0], [1], [0, 0, 1, 1], [], []>} : vector<16x6xf32>, vector<6x384xf32>, vector<16x384xf32> -> vector<16x384xf32>
    %43 = arith.addf %34, %42 : vector<16x384xf32>
    %c4 = arith.constant 4 : index
    %c0_34 = arith.constant 0 : index
    %c0_35 = arith.constant 0 : index
    %44 = vector.load %arg2[%c4, %c0_34, %c0_35] : memref<9x1x384xf32, #tpu.memory_space<vmem>>, vector<1x1x384xf32>
    %45 = vector.shape_cast %44 : vector<1x1x384xf32> to vector<1x384xf32>
    %46 = vector.broadcast %45 : vector<1x384xf32> to vector<6x384xf32>
    %47 = arith.mulf %5, %46 : vector<6x384xf32>
    %c4_36 = arith.constant 4 : index
    %c0_37 = arith.constant 0 : index
    %c0_38 = arith.constant 0 : index
    %48 = vector.load %arg7[%c4_36, %c0_37, %c0_38] : memref<9x16x6xf32, #tpu.memory_space<vmem>>, vector<1x16x6xf32>
    %49 = vector.shape_cast %48 : vector<1x16x6xf32> to vector<16x6xf32>
    %cst_39 = arith.constant dense<0.000000e+00> : vector<16x384xf32>
    %50 = tpu.matmul %49, %47, %cst_39 {dimension_numbers = #tpu.dot_dimension_numbers<[1], [0], [0], [1], [0, 0, 1, 1], [], []>} : vector<16x6xf32>, vector<6x384xf32>, vector<16x384xf32> -> vector<16x384xf32>
    %51 = arith.addf %43, %50 : vector<16x384xf32>
    %c383_i32 = arith.constant 383 : i32
    %52 = tpu.dynamic_rotate %5 by %c383_i32 dim 1 : vector<6x384xf32>, i32 -> vector<6x384xf32>
    %c5 = arith.constant 5 : index
    %c0_40 = arith.constant 0 : index
    %c0_41 = arith.constant 0 : index
    %53 = vector.load %arg2[%c5, %c0_40, %c0_41] : memref<9x1x384xf32, #tpu.memory_space<vmem>>, vector<1x1x384xf32>
    %54 = vector.shape_cast %53 : vector<1x1x384xf32> to vector<1x384xf32>
    %55 = vector.broadcast %54 : vector<1x384xf32> to vector<6x384xf32>
    %56 = arith.mulf %52, %55 : vector<6x384xf32>
    %c5_42 = arith.constant 5 : index
    %c0_43 = arith.constant 0 : index
    %c0_44 = arith.constant 0 : index
    %57 = vector.load %arg7[%c5_42, %c0_43, %c0_44] : memref<9x16x6xf32, #tpu.memory_space<vmem>>, vector<1x16x6xf32>
    %58 = vector.shape_cast %57 : vector<1x16x6xf32> to vector<16x6xf32>
    %cst_45 = arith.constant dense<0.000000e+00> : vector<16x384xf32>
    %59 = tpu.matmul %58, %56, %cst_45 {dimension_numbers = #tpu.dot_dimension_numbers<[1], [0], [0], [1], [0, 0, 1, 1], [], []>} : vector<16x6xf32>, vector<6x384xf32>, vector<16x384xf32> -> vector<16x384xf32>
    %60 = arith.addf %51, %59 : vector<16x384xf32>
    %c376_i32 = arith.constant 376 : i32
    %61 = tpu.dynamic_rotate %5 by %c376_i32 dim 1 : vector<6x384xf32>, i32 -> vector<6x384xf32>
    %c6 = arith.constant 6 : index
    %c0_46 = arith.constant 0 : index
    %c0_47 = arith.constant 0 : index
    %62 = vector.load %arg2[%c6, %c0_46, %c0_47] : memref<9x1x384xf32, #tpu.memory_space<vmem>>, vector<1x1x384xf32>
    %63 = vector.shape_cast %62 : vector<1x1x384xf32> to vector<1x384xf32>
    %64 = vector.broadcast %63 : vector<1x384xf32> to vector<6x384xf32>
    %65 = arith.mulf %61, %64 : vector<6x384xf32>
    %c6_48 = arith.constant 6 : index
    %c0_49 = arith.constant 0 : index
    %c0_50 = arith.constant 0 : index
    %66 = vector.load %arg7[%c6_48, %c0_49, %c0_50] : memref<9x16x6xf32, #tpu.memory_space<vmem>>, vector<1x16x6xf32>
    %67 = vector.shape_cast %66 : vector<1x16x6xf32> to vector<16x6xf32>
    %cst_51 = arith.constant dense<0.000000e+00> : vector<16x384xf32>
    %68 = tpu.matmul %67, %65, %cst_51 {dimension_numbers = #tpu.dot_dimension_numbers<[1], [0], [0], [1], [0, 0, 1, 1], [], []>} : vector<16x6xf32>, vector<6x384xf32>, vector<16x384xf32> -> vector<16x384xf32>
    %69 = arith.addf %60, %68 : vector<16x384xf32>
    %c375_i32 = arith.constant 375 : i32
    %70 = tpu.dynamic_rotate %5 by %c375_i32 dim 1 : vector<6x384xf32>, i32 -> vector<6x384xf32>
    %c7 = arith.constant 7 : index
    %c0_52 = arith.constant 0 : index
    %c0_53 = arith.constant 0 : index
    %71 = vector.load %arg2[%c7, %c0_52, %c0_53] : memref<9x1x384xf32, #tpu.memory_space<vmem>>, vector<1x1x384xf32>
    %72 = vector.shape_cast %71 : vector<1x1x384xf32> to vector<1x384xf32>
    %73 = vector.broadcast %72 : vector<1x384xf32> to vector<6x384xf32>
    %74 = arith.mulf %70, %73 : vector<6x384xf32>
    %c7_54 = arith.constant 7 : index
    %c0_55 = arith.constant 0 : index
    %c0_56 = arith.constant 0 : index
    %75 = vector.load %arg7[%c7_54, %c0_55, %c0_56] : memref<9x16x6xf32, #tpu.memory_space<vmem>>, vector<1x16x6xf32>
    %76 = vector.shape_cast %75 : vector<1x16x6xf32> to vector<16x6xf32>
    %cst_57 = arith.constant dense<0.000000e+00> : vector<16x384xf32>
    %77 = tpu.matmul %76, %74, %cst_57 {dimension_numbers = #tpu.dot_dimension_numbers<[1], [0], [0], [1], [0, 0, 1, 1], [], []>} : vector<16x6xf32>, vector<6x384xf32>, vector<16x384xf32> -> vector<16x384xf32>
    %78 = arith.addf %69, %77 : vector<16x384xf32>
    %c374_i32 = arith.constant 374 : i32
    %79 = tpu.dynamic_rotate %5 by %c374_i32 dim 1 : vector<6x384xf32>, i32 -> vector<6x384xf32>
    %c8 = arith.constant 8 : index
    %c0_58 = arith.constant 0 : index
    %c0_59 = arith.constant 0 : index
    %80 = vector.load %arg2[%c8, %c0_58, %c0_59] : memref<9x1x384xf32, #tpu.memory_space<vmem>>, vector<1x1x384xf32>
    %81 = vector.shape_cast %80 : vector<1x1x384xf32> to vector<1x384xf32>
    %82 = vector.broadcast %81 : vector<1x384xf32> to vector<6x384xf32>
    %83 = arith.mulf %79, %82 : vector<6x384xf32>
    %c8_60 = arith.constant 8 : index
    %c0_61 = arith.constant 0 : index
    %c0_62 = arith.constant 0 : index
    %84 = vector.load %arg7[%c8_60, %c0_61, %c0_62] : memref<9x16x6xf32, #tpu.memory_space<vmem>>, vector<1x16x6xf32>
    %85 = vector.shape_cast %84 : vector<1x16x6xf32> to vector<16x6xf32>
    %cst_63 = arith.constant dense<0.000000e+00> : vector<16x384xf32>
    %86 = tpu.matmul %85, %83, %cst_63 {dimension_numbers = #tpu.dot_dimension_numbers<[1], [0], [0], [1], [0, 0, 1, 1], [], []>} : vector<16x6xf32>, vector<6x384xf32>, vector<16x384xf32> -> vector<16x384xf32>
    %87 = arith.addf %78, %86 : vector<16x384xf32>
    %88 = vector.broadcast %6 : vector<16x1xf32> to vector<16x384xf32>
    %89 = arith.addf %87, %88 : vector<16x384xf32>
    %cst_64 = arith.constant 0.000000e+00 : f32
    %90 = vector.broadcast %cst_64 : f32 to vector<16x384xf32>
    %91 = arith.cmpf ogt, %89, %90 : vector<16x384xf32>
    %cst_65 = arith.constant 2.000000e-01 : f32
    %92 = vector.broadcast %cst_65 : f32 to vector<16x384xf32>
    %93 = arith.mulf %92, %89 : vector<16x384xf32>
    %94 = arith.select %91, %89, %93 : vector<16x384xi1>, vector<16x384xf32>
    %95 = vector.extract_strided_slice %1 {offsets = [0, 1], sizes = [16, 1], strides = [1, 1]} : vector<16x8xf32> to vector<16x1xf32>
    %cst_66 = arith.constant 0.000000e+00 : f32
    %96 = vector.broadcast %cst_66 : f32 to vector<16x384xf32>
    %c10_i32_67 = arith.constant 10 : i32
    %97 = tpu.dynamic_rotate %94 by %c10_i32_67 dim 1 : vector<16x384xf32>, i32 -> vector<16x384xf32>
    %c0_68 = arith.constant 0 : index
    %c0_69 = arith.constant 0 : index
    %c0_70 = arith.constant 0 : index
    %98 = vector.load %arg2[%c0_68, %c0_69, %c0_70] : memref<9x1x384xf32, #tpu.memory_space<vmem>>, vector<1x1x384xf32>
    %99 = vector.shape_cast %98 : vector<1x1x384xf32> to vector<1x384xf32>
    %100 = vector.broadcast %99 : vector<1x384xf32> to vector<16x384xf32>
    %101 = arith.mulf %97, %100 : vector<16x384xf32>
    %c0_71 = arith.constant 0 : index
    %c0_72 = arith.constant 0 : index
    %c0_73 = arith.constant 0 : index
    %102 = vector.load %arg8[%c0_71, %c0_72, %c0_73] : memref<9x16x16xf32, #tpu.memory_space<vmem>>, vector<1x16x16xf32>
    %103 = vector.shape_cast %102 : vector<1x16x16xf32> to vector<16x16xf32>
    %cst_74 = arith.constant dense<0.000000e+00> : vector<16x384xf32>
    %104 = tpu.matmul %103, %101, %cst_74 {dimension_numbers = #tpu.dot_dimension_numbers<[1], [0], [0], [1], [0, 0, 1, 1], [], []>} : vector<16x16xf32>, vector<16x384xf32>, vector<16x384xf32> -> vector<16x384xf32>
    %105 = arith.addf %96, %104 : vector<16x384xf32>
    %c9_i32_75 = arith.constant 9 : i32
    %106 = tpu.dynamic_rotate %94 by %c9_i32_75 dim 1 : vector<16x384xf32>, i32 -> vector<16x384xf32>
    %c1_76 = arith.constant 1 : index
    %c0_77 = arith.constant 0 : index
    %c0_78 = arith.constant 0 : index
    %107 = vector.load %arg2[%c1_76, %c0_77, %c0_78] : memref<9x1x384xf32, #tpu.memory_space<vmem>>, vector<1x1x384xf32>
    %108 = vector.shape_cast %107 : vector<1x1x384xf32> to vector<1x384xf32>
    %109 = vector.broadcast %108 : vector<1x384xf32> to vector<16x384xf32>
    %110 = arith.mulf %106, %109 : vector<16x384xf32>
    %c1_79 = arith.constant 1 : index
    %c0_80 = arith.constant 0 : index
    %c0_81 = arith.constant 0 : index
    %111 = vector.load %arg8[%c1_79, %c0_80, %c0_81] : memref<9x16x16xf32, #tpu.memory_space<vmem>>, vector<1x16x16xf32>
    %112 = vector.shape_cast %111 : vector<1x16x16xf32> to vector<16x16xf32>
    %cst_82 = arith.constant dense<0.000000e+00> : vector<16x384xf32>
    %113 = tpu.matmul %112, %110, %cst_82 {dimension_numbers = #tpu.dot_dimension_numbers<[1], [0], [0], [1], [0, 0, 1, 1], [], []>} : vector<16x16xf32>, vector<16x384xf32>, vector<16x384xf32> -> vector<16x384xf32>
    %114 = arith.addf %105, %113 : vector<16x384xf32>
    %c8_i32_83 = arith.constant 8 : i32
    %115 = tpu.dynamic_rotate %94 by %c8_i32_83 dim 1 : vector<16x384xf32>, i32 -> vector<16x384xf32>
    %c2_84 = arith.constant 2 : index
    %c0_85 = arith.constant 0 : index
    %c0_86 = arith.constant 0 : index
    %116 = vector.load %arg2[%c2_84, %c0_85, %c0_86] : memref<9x1x384xf32, #tpu.memory_space<vmem>>, vector<1x1x384xf32>
    %117 = vector.shape_cast %116 : vector<1x1x384xf32> to vector<1x384xf32>
    %118 = vector.broadcast %117 : vector<1x384xf32> to vector<16x384xf32>
    %119 = arith.mulf %115, %118 : vector<16x384xf32>
    %c2_87 = arith.constant 2 : index
    %c0_88 = arith.constant 0 : index
    %c0_89 = arith.constant 0 : index
    %120 = vector.load %arg8[%c2_87, %c0_88, %c0_89] : memref<9x16x16xf32, #tpu.memory_space<vmem>>, vector<1x16x16xf32>
    %121 = vector.shape_cast %120 : vector<1x16x16xf32> to vector<16x16xf32>
    %cst_90 = arith.constant dense<0.000000e+00> : vector<16x384xf32>
    %122 = tpu.matmul %121, %119, %cst_90 {dimension_numbers = #tpu.dot_dimension_numbers<[1], [0], [0], [1], [0, 0, 1, 1], [], []>} : vector<16x16xf32>, vector<16x384xf32>, vector<16x384xf32> -> vector<16x384xf32>
    %123 = arith.addf %114, %122 : vector<16x384xf32>
    %c1_i32_91 = arith.constant 1 : i32
    %124 = tpu.dynamic_rotate %94 by %c1_i32_91 dim 1 : vector<16x384xf32>, i32 -> vector<16x384xf32>
    %c3_92 = arith.constant 3 : index
    %c0_93 = arith.constant 0 : index
    %c0_94 = arith.constant 0 : index
    %125 = vector.load %arg2[%c3_92, %c0_93, %c0_94] : memref<9x1x384xf32, #tpu.memory_space<vmem>>, vector<1x1x384xf32>
    %126 = vector.shape_cast %125 : vector<1x1x384xf32> to vector<1x384xf32>
    %127 = vector.broadcast %126 : vector<1x384xf32> to vector<16x384xf32>
    %128 = arith.mulf %124, %127 : vector<16x384xf32>
    %c3_95 = arith.constant 3 : index
    %c0_96 = arith.constant 0 : index
    %c0_97 = arith.constant 0 : index
    %129 = vector.load %arg8[%c3_95, %c0_96, %c0_97] : memref<9x16x16xf32, #tpu.memory_space<vmem>>, vector<1x16x16xf32>
    %130 = vector.shape_cast %129 : vector<1x16x16xf32> to vector<16x16xf32>
    %cst_98 = arith.constant dense<0.000000e+00> : vector<16x384xf32>
    %131 = tpu.matmul %130, %128, %cst_98 {dimension_numbers = #tpu.dot_dimension_numbers<[1], [0], [0], [1], [0, 0, 1, 1], [], []>} : vector<16x16xf32>, vector<16x384xf32>, vector<16x384xf32> -> vector<16x384xf32>
    %132 = arith.addf %123, %131 : vector<16x384xf32>
    %c4_99 = arith.constant 4 : index
    %c0_100 = arith.constant 0 : index
    %c0_101 = arith.constant 0 : index
    %133 = vector.load %arg2[%c4_99, %c0_100, %c0_101] : memref<9x1x384xf32, #tpu.memory_space<vmem>>, vector<1x1x384xf32>
    %134 = vector.shape_cast %133 : vector<1x1x384xf32> to vector<1x384xf32>
    %135 = vector.broadcast %134 : vector<1x384xf32> to vector<16x384xf32>
    %136 = arith.mulf %94, %135 : vector<16x384xf32>
    %c4_102 = arith.constant 4 : index
    %c0_103 = arith.constant 0 : index
    %c0_104 = arith.constant 0 : index
    %137 = vector.load %arg8[%c4_102, %c0_103, %c0_104] : memref<9x16x16xf32, #tpu.memory_space<vmem>>, vector<1x16x16xf32>
    %138 = vector.shape_cast %137 : vector<1x16x16xf32> to vector<16x16xf32>
    %cst_105 = arith.constant dense<0.000000e+00> : vector<16x384xf32>
    %139 = tpu.matmul %138, %136, %cst_105 {dimension_numbers = #tpu.dot_dimension_numbers<[1], [0], [0], [1], [0, 0, 1, 1], [], []>} : vector<16x16xf32>, vector<16x384xf32>, vector<16x384xf32> -> vector<16x384xf32>
    %140 = arith.addf %132, %139 : vector<16x384xf32>
    %c383_i32_106 = arith.constant 383 : i32
    %141 = tpu.dynamic_rotate %94 by %c383_i32_106 dim 1 : vector<16x384xf32>, i32 -> vector<16x384xf32>
    %c5_107 = arith.constant 5 : index
    %c0_108 = arith.constant 0 : index
    %c0_109 = arith.constant 0 : index
    %142 = vector.load %arg2[%c5_107, %c0_108, %c0_109] : memref<9x1x384xf32, #tpu.memory_space<vmem>>, vector<1x1x384xf32>
    %143 = vector.shape_cast %142 : vector<1x1x384xf32> to vector<1x384xf32>
    %144 = vector.broadcast %143 : vector<1x384xf32> to vector<16x384xf32>
    %145 = arith.mulf %141, %144 : vector<16x384xf32>
    %c5_110 = arith.constant 5 : index
    %c0_111 = arith.constant 0 : index
    %c0_112 = arith.constant 0 : index
    %146 = vector.load %arg8[%c5_110, %c0_111, %c0_112] : memref<9x16x16xf32, #tpu.memory_space<vmem>>, vector<1x16x16xf32>
    %147 = vector.shape_cast %146 : vector<1x16x16xf32> to vector<16x16xf32>
    %cst_113 = arith.constant dense<0.000000e+00> : vector<16x384xf32>
    %148 = tpu.matmul %147, %145, %cst_113 {dimension_numbers = #tpu.dot_dimension_numbers<[1], [0], [0], [1], [0, 0, 1, 1], [], []>} : vector<16x16xf32>, vector<16x384xf32>, vector<16x384xf32> -> vector<16x384xf32>
    %149 = arith.addf %140, %148 : vector<16x384xf32>
    %c376_i32_114 = arith.constant 376 : i32
    %150 = tpu.dynamic_rotate %94 by %c376_i32_114 dim 1 : vector<16x384xf32>, i32 -> vector<16x384xf32>
    %c6_115 = arith.constant 6 : index
    %c0_116 = arith.constant 0 : index
    %c0_117 = arith.constant 0 : index
    %151 = vector.load %arg2[%c6_115, %c0_116, %c0_117] : memref<9x1x384xf32, #tpu.memory_space<vmem>>, vector<1x1x384xf32>
    %152 = vector.shape_cast %151 : vector<1x1x384xf32> to vector<1x384xf32>
    %153 = vector.broadcast %152 : vector<1x384xf32> to vector<16x384xf32>
    %154 = arith.mulf %150, %153 : vector<16x384xf32>
    %c6_118 = arith.constant 6 : index
    %c0_119 = arith.constant 0 : index
    %c0_120 = arith.constant 0 : index
    %155 = vector.load %arg8[%c6_118, %c0_119, %c0_120] : memref<9x16x16xf32, #tpu.memory_space<vmem>>, vector<1x16x16xf32>
    %156 = vector.shape_cast %155 : vector<1x16x16xf32> to vector<16x16xf32>
    %cst_121 = arith.constant dense<0.000000e+00> : vector<16x384xf32>
    %157 = tpu.matmul %156, %154, %cst_121 {dimension_numbers = #tpu.dot_dimension_numbers<[1], [0], [0], [1], [0, 0, 1, 1], [], []>} : vector<16x16xf32>, vector<16x384xf32>, vector<16x384xf32> -> vector<16x384xf32>
    %158 = arith.addf %149, %157 : vector<16x384xf32>
    %c375_i32_122 = arith.constant 375 : i32
    %159 = tpu.dynamic_rotate %94 by %c375_i32_122 dim 1 : vector<16x384xf32>, i32 -> vector<16x384xf32>
    %c7_123 = arith.constant 7 : index
    %c0_124 = arith.constant 0 : index
    %c0_125 = arith.constant 0 : index
    %160 = vector.load %arg2[%c7_123, %c0_124, %c0_125] : memref<9x1x384xf32, #tpu.memory_space<vmem>>, vector<1x1x384xf32>
    %161 = vector.shape_cast %160 : vector<1x1x384xf32> to vector<1x384xf32>
    %162 = vector.broadcast %161 : vector<1x384xf32> to vector<16x384xf32>
    %163 = arith.mulf %159, %162 : vector<16x384xf32>
    %c7_126 = arith.constant 7 : index
    %c0_127 = arith.constant 0 : index
    %c0_128 = arith.constant 0 : index
    %164 = vector.load %arg8[%c7_126, %c0_127, %c0_128] : memref<9x16x16xf32, #tpu.memory_space<vmem>>, vector<1x16x16xf32>
    %165 = vector.shape_cast %164 : vector<1x16x16xf32> to vector<16x16xf32>
    %cst_129 = arith.constant dense<0.000000e+00> : vector<16x384xf32>
    %166 = tpu.matmul %165, %163, %cst_129 {dimension_numbers = #tpu.dot_dimension_numbers<[1], [0], [0], [1], [0, 0, 1, 1], [], []>} : vector<16x16xf32>, vector<16x384xf32>, vector<16x384xf32> -> vector<16x384xf32>
    %167 = arith.addf %158, %166 : vector<16x384xf32>
    %c374_i32_130 = arith.constant 374 : i32
    %168 = tpu.dynamic_rotate %94 by %c374_i32_130 dim 1 : vector<16x384xf32>, i32 -> vector<16x384xf32>
    %c8_131 = arith.constant 8 : index
    %c0_132 = arith.constant 0 : index
    %c0_133 = arith.constant 0 : index
    %169 = vector.load %arg2[%c8_131, %c0_132, %c0_133] : memref<9x1x384xf32, #tpu.memory_space<vmem>>, vector<1x1x384xf32>
    %170 = vector.shape_cast %169 : vector<1x1x384xf32> to vector<1x384xf32>
    %171 = vector.broadcast %170 : vector<1x384xf32> to vector<16x384xf32>
    %172 = arith.mulf %168, %171 : vector<16x384xf32>
    %c8_134 = arith.constant 8 : index
    %c0_135 = arith.constant 0 : index
    %c0_136 = arith.constant 0 : index
    %173 = vector.load %arg8[%c8_134, %c0_135, %c0_136] : memref<9x16x16xf32, #tpu.memory_space<vmem>>, vector<1x16x16xf32>
    %174 = vector.shape_cast %173 : vector<1x16x16xf32> to vector<16x16xf32>
    %cst_137 = arith.constant dense<0.000000e+00> : vector<16x384xf32>
    %175 = tpu.matmul %174, %172, %cst_137 {dimension_numbers = #tpu.dot_dimension_numbers<[1], [0], [0], [1], [0, 0, 1, 1], [], []>} : vector<16x16xf32>, vector<16x384xf32>, vector<16x384xf32> -> vector<16x384xf32>
    %176 = arith.addf %167, %175 : vector<16x384xf32>
    %177 = vector.broadcast %95 : vector<16x1xf32> to vector<16x384xf32>
    %178 = arith.addf %176, %177 : vector<16x384xf32>
    %cst_138 = arith.constant 0.000000e+00 : f32
    %179 = vector.broadcast %cst_138 : f32 to vector<16x384xf32>
    %180 = arith.cmpf ogt, %178, %179 : vector<16x384xf32>
    %cst_139 = arith.constant 2.000000e-01 : f32
    %181 = vector.broadcast %cst_139 : f32 to vector<16x384xf32>
    %182 = arith.mulf %181, %178 : vector<16x384xf32>
    %183 = arith.select %180, %178, %182 : vector<16x384xi1>, vector<16x384xf32>
    %184 = vector.extract_strided_slice %1 {offsets = [0, 2], sizes = [6, 1], strides = [1, 1]} : vector<16x8xf32> to vector<6x1xf32>
    %cst_140 = arith.constant 0.000000e+00 : f32
    %185 = vector.broadcast %cst_140 : f32 to vector<6x384xf32>
    %c10_i32_141 = arith.constant 10 : i32
    %186 = tpu.dynamic_rotate %183 by %c10_i32_141 dim 1 : vector<16x384xf32>, i32 -> vector<16x384xf32>
    %c0_142 = arith.constant 0 : index
    %c0_143 = arith.constant 0 : index
    %c0_144 = arith.constant 0 : index
    %187 = vector.load %arg2[%c0_142, %c0_143, %c0_144] : memref<9x1x384xf32, #tpu.memory_space<vmem>>, vector<1x1x384xf32>
    %188 = vector.shape_cast %187 : vector<1x1x384xf32> to vector<1x384xf32>
    %189 = vector.broadcast %188 : vector<1x384xf32> to vector<16x384xf32>
    %190 = arith.mulf %186, %189 : vector<16x384xf32>
    %c0_145 = arith.constant 0 : index
    %c0_146 = arith.constant 0 : index
    %c0_147 = arith.constant 0 : index
    %191 = vector.load %arg9[%c0_145, %c0_146, %c0_147] : memref<9x6x16xf32, #tpu.memory_space<vmem>>, vector<1x6x16xf32>
    %192 = vector.shape_cast %191 : vector<1x6x16xf32> to vector<6x16xf32>
    %cst_148 = arith.constant dense<0.000000e+00> : vector<6x384xf32>
    %193 = tpu.matmul %192, %190, %cst_148 {dimension_numbers = #tpu.dot_dimension_numbers<[1], [0], [0], [1], [0, 0, 1, 1], [], []>} : vector<6x16xf32>, vector<16x384xf32>, vector<6x384xf32> -> vector<6x384xf32>
    %194 = arith.addf %185, %193 : vector<6x384xf32>
    %c9_i32_149 = arith.constant 9 : i32
    %195 = tpu.dynamic_rotate %183 by %c9_i32_149 dim 1 : vector<16x384xf32>, i32 -> vector<16x384xf32>
    %c1_150 = arith.constant 1 : index
    %c0_151 = arith.constant 0 : index
    %c0_152 = arith.constant 0 : index
    %196 = vector.load %arg2[%c1_150, %c0_151, %c0_152] : memref<9x1x384xf32, #tpu.memory_space<vmem>>, vector<1x1x384xf32>
    %197 = vector.shape_cast %196 : vector<1x1x384xf32> to vector<1x384xf32>
    %198 = vector.broadcast %197 : vector<1x384xf32> to vector<16x384xf32>
    %199 = arith.mulf %195, %198 : vector<16x384xf32>
    %c1_153 = arith.constant 1 : index
    %c0_154 = arith.constant 0 : index
    %c0_155 = arith.constant 0 : index
    %200 = vector.load %arg9[%c1_153, %c0_154, %c0_155] : memref<9x6x16xf32, #tpu.memory_space<vmem>>, vector<1x6x16xf32>
    %201 = vector.shape_cast %200 : vector<1x6x16xf32> to vector<6x16xf32>
    %cst_156 = arith.constant dense<0.000000e+00> : vector<6x384xf32>
    %202 = tpu.matmul %201, %199, %cst_156 {dimension_numbers = #tpu.dot_dimension_numbers<[1], [0], [0], [1], [0, 0, 1, 1], [], []>} : vector<6x16xf32>, vector<16x384xf32>, vector<6x384xf32> -> vector<6x384xf32>
    %203 = arith.addf %194, %202 : vector<6x384xf32>
    %c8_i32_157 = arith.constant 8 : i32
    %204 = tpu.dynamic_rotate %183 by %c8_i32_157 dim 1 : vector<16x384xf32>, i32 -> vector<16x384xf32>
    %c2_158 = arith.constant 2 : index
    %c0_159 = arith.constant 0 : index
    %c0_160 = arith.constant 0 : index
    %205 = vector.load %arg2[%c2_158, %c0_159, %c0_160] : memref<9x1x384xf32, #tpu.memory_space<vmem>>, vector<1x1x384xf32>
    %206 = vector.shape_cast %205 : vector<1x1x384xf32> to vector<1x384xf32>
    %207 = vector.broadcast %206 : vector<1x384xf32> to vector<16x384xf32>
    %208 = arith.mulf %204, %207 : vector<16x384xf32>
    %c2_161 = arith.constant 2 : index
    %c0_162 = arith.constant 0 : index
    %c0_163 = arith.constant 0 : index
    %209 = vector.load %arg9[%c2_161, %c0_162, %c0_163] : memref<9x6x16xf32, #tpu.memory_space<vmem>>, vector<1x6x16xf32>
    %210 = vector.shape_cast %209 : vector<1x6x16xf32> to vector<6x16xf32>
    %cst_164 = arith.constant dense<0.000000e+00> : vector<6x384xf32>
    %211 = tpu.matmul %210, %208, %cst_164 {dimension_numbers = #tpu.dot_dimension_numbers<[1], [0], [0], [1], [0, 0, 1, 1], [], []>} : vector<6x16xf32>, vector<16x384xf32>, vector<6x384xf32> -> vector<6x384xf32>
    %212 = arith.addf %203, %211 : vector<6x384xf32>
    %c1_i32_165 = arith.constant 1 : i32
    %213 = tpu.dynamic_rotate %183 by %c1_i32_165 dim 1 : vector<16x384xf32>, i32 -> vector<16x384xf32>
    %c3_166 = arith.constant 3 : index
    %c0_167 = arith.constant 0 : index
    %c0_168 = arith.constant 0 : index
    %214 = vector.load %arg2[%c3_166, %c0_167, %c0_168] : memref<9x1x384xf32, #tpu.memory_space<vmem>>, vector<1x1x384xf32>
    %215 = vector.shape_cast %214 : vector<1x1x384xf32> to vector<1x384xf32>
    %216 = vector.broadcast %215 : vector<1x384xf32> to vector<16x384xf32>
    %217 = arith.mulf %213, %216 : vector<16x384xf32>
    %c3_169 = arith.constant 3 : index
    %c0_170 = arith.constant 0 : index
    %c0_171 = arith.constant 0 : index
    %218 = vector.load %arg9[%c3_169, %c0_170, %c0_171] : memref<9x6x16xf32, #tpu.memory_space<vmem>>, vector<1x6x16xf32>
    %219 = vector.shape_cast %218 : vector<1x6x16xf32> to vector<6x16xf32>
    %cst_172 = arith.constant dense<0.000000e+00> : vector<6x384xf32>
    %220 = tpu.matmul %219, %217, %cst_172 {dimension_numbers = #tpu.dot_dimension_numbers<[1], [0], [0], [1], [0, 0, 1, 1], [], []>} : vector<6x16xf32>, vector<16x384xf32>, vector<6x384xf32> -> vector<6x384xf32>
    %221 = arith.addf %212, %220 : vector<6x384xf32>
    %c4_173 = arith.constant 4 : index
    %c0_174 = arith.constant 0 : index
    %c0_175 = arith.constant 0 : index
    %222 = vector.load %arg2[%c4_173, %c0_174, %c0_175] : memref<9x1x384xf32, #tpu.memory_space<vmem>>, vector<1x1x384xf32>
    %223 = vector.shape_cast %222 : vector<1x1x384xf32> to vector<1x384xf32>
    %224 = vector.broadcast %223 : vector<1x384xf32> to vector<16x384xf32>
    %225 = arith.mulf %183, %224 : vector<16x384xf32>
    %c4_176 = arith.constant 4 : index
    %c0_177 = arith.constant 0 : index
    %c0_178 = arith.constant 0 : index
    %226 = vector.load %arg9[%c4_176, %c0_177, %c0_178] : memref<9x6x16xf32, #tpu.memory_space<vmem>>, vector<1x6x16xf32>
    %227 = vector.shape_cast %226 : vector<1x6x16xf32> to vector<6x16xf32>
    %cst_179 = arith.constant dense<0.000000e+00> : vector<6x384xf32>
    %228 = tpu.matmul %227, %225, %cst_179 {dimension_numbers = #tpu.dot_dimension_numbers<[1], [0], [0], [1], [0, 0, 1, 1], [], []>} : vector<6x16xf32>, vector<16x384xf32>, vector<6x384xf32> -> vector<6x384xf32>
    %229 = arith.addf %221, %228 : vector<6x384xf32>
    %c383_i32_180 = arith.constant 383 : i32
    %230 = tpu.dynamic_rotate %183 by %c383_i32_180 dim 1 : vector<16x384xf32>, i32 -> vector<16x384xf32>
    %c5_181 = arith.constant 5 : index
    %c0_182 = arith.constant 0 : index
    %c0_183 = arith.constant 0 : index
    %231 = vector.load %arg2[%c5_181, %c0_182, %c0_183] : memref<9x1x384xf32, #tpu.memory_space<vmem>>, vector<1x1x384xf32>
    %232 = vector.shape_cast %231 : vector<1x1x384xf32> to vector<1x384xf32>
    %233 = vector.broadcast %232 : vector<1x384xf32> to vector<16x384xf32>
    %234 = arith.mulf %230, %233 : vector<16x384xf32>
    %c5_184 = arith.constant 5 : index
    %c0_185 = arith.constant 0 : index
    %c0_186 = arith.constant 0 : index
    %235 = vector.load %arg9[%c5_184, %c0_185, %c0_186] : memref<9x6x16xf32, #tpu.memory_space<vmem>>, vector<1x6x16xf32>
    %236 = vector.shape_cast %235 : vector<1x6x16xf32> to vector<6x16xf32>
    %cst_187 = arith.constant dense<0.000000e+00> : vector<6x384xf32>
    %237 = tpu.matmul %236, %234, %cst_187 {dimension_numbers = #tpu.dot_dimension_numbers<[1], [0], [0], [1], [0, 0, 1, 1], [], []>} : vector<6x16xf32>, vector<16x384xf32>, vector<6x384xf32> -> vector<6x384xf32>
    %238 = arith.addf %229, %237 : vector<6x384xf32>
    %c376_i32_188 = arith.constant 376 : i32
    %239 = tpu.dynamic_rotate %183 by %c376_i32_188 dim 1 : vector<16x384xf32>, i32 -> vector<16x384xf32>
    %c6_189 = arith.constant 6 : index
    %c0_190 = arith.constant 0 : index
    %c0_191 = arith.constant 0 : index
    %240 = vector.load %arg2[%c6_189, %c0_190, %c0_191] : memref<9x1x384xf32, #tpu.memory_space<vmem>>, vector<1x1x384xf32>
    %241 = vector.shape_cast %240 : vector<1x1x384xf32> to vector<1x384xf32>
    %242 = vector.broadcast %241 : vector<1x384xf32> to vector<16x384xf32>
    %243 = arith.mulf %239, %242 : vector<16x384xf32>
    %c6_192 = arith.constant 6 : index
    %c0_193 = arith.constant 0 : index
    %c0_194 = arith.constant 0 : index
    %244 = vector.load %arg9[%c6_192, %c0_193, %c0_194] : memref<9x6x16xf32, #tpu.memory_space<vmem>>, vector<1x6x16xf32>
    %245 = vector.shape_cast %244 : vector<1x6x16xf32> to vector<6x16xf32>
    %cst_195 = arith.constant dense<0.000000e+00> : vector<6x384xf32>
    %246 = tpu.matmul %245, %243, %cst_195 {dimension_numbers = #tpu.dot_dimension_numbers<[1], [0], [0], [1], [0, 0, 1, 1], [], []>} : vector<6x16xf32>, vector<16x384xf32>, vector<6x384xf32> -> vector<6x384xf32>
    %247 = arith.addf %238, %246 : vector<6x384xf32>
    %c375_i32_196 = arith.constant 375 : i32
    %248 = tpu.dynamic_rotate %183 by %c375_i32_196 dim 1 : vector<16x384xf32>, i32 -> vector<16x384xf32>
    %c7_197 = arith.constant 7 : index
    %c0_198 = arith.constant 0 : index
    %c0_199 = arith.constant 0 : index
    %249 = vector.load %arg2[%c7_197, %c0_198, %c0_199] : memref<9x1x384xf32, #tpu.memory_space<vmem>>, vector<1x1x384xf32>
    %250 = vector.shape_cast %249 : vector<1x1x384xf32> to vector<1x384xf32>
    %251 = vector.broadcast %250 : vector<1x384xf32> to vector<16x384xf32>
    %252 = arith.mulf %248, %251 : vector<16x384xf32>
    %c7_200 = arith.constant 7 : index
    %c0_201 = arith.constant 0 : index
    %c0_202 = arith.constant 0 : index
    %253 = vector.load %arg9[%c7_200, %c0_201, %c0_202] : memref<9x6x16xf32, #tpu.memory_space<vmem>>, vector<1x6x16xf32>
    %254 = vector.shape_cast %253 : vector<1x6x16xf32> to vector<6x16xf32>
    %cst_203 = arith.constant dense<0.000000e+00> : vector<6x384xf32>
    %255 = tpu.matmul %254, %252, %cst_203 {dimension_numbers = #tpu.dot_dimension_numbers<[1], [0], [0], [1], [0, 0, 1, 1], [], []>} : vector<6x16xf32>, vector<16x384xf32>, vector<6x384xf32> -> vector<6x384xf32>
    %256 = arith.addf %247, %255 : vector<6x384xf32>
    %c374_i32_204 = arith.constant 374 : i32
    %257 = tpu.dynamic_rotate %183 by %c374_i32_204 dim 1 : vector<16x384xf32>, i32 -> vector<16x384xf32>
    %c8_205 = arith.constant 8 : index
    %c0_206 = arith.constant 0 : index
    %c0_207 = arith.constant 0 : index
    %258 = vector.load %arg2[%c8_205, %c0_206, %c0_207] : memref<9x1x384xf32, #tpu.memory_space<vmem>>, vector<1x1x384xf32>
    %259 = vector.shape_cast %258 : vector<1x1x384xf32> to vector<1x384xf32>
    %260 = vector.broadcast %259 : vector<1x384xf32> to vector<16x384xf32>
    %261 = arith.mulf %257, %260 : vector<16x384xf32>
    %c8_208 = arith.constant 8 : index
    %c0_209 = arith.constant 0 : index
    %c0_210 = arith.constant 0 : index
    %262 = vector.load %arg9[%c8_208, %c0_209, %c0_210] : memref<9x6x16xf32, #tpu.memory_space<vmem>>, vector<1x6x16xf32>
    %263 = vector.shape_cast %262 : vector<1x6x16xf32> to vector<6x16xf32>
    %cst_211 = arith.constant dense<0.000000e+00> : vector<6x384xf32>
    %264 = tpu.matmul %263, %261, %cst_211 {dimension_numbers = #tpu.dot_dimension_numbers<[1], [0], [0], [1], [0, 0, 1, 1], [], []>} : vector<6x16xf32>, vector<16x384xf32>, vector<6x384xf32> -> vector<6x384xf32>
    %265 = arith.addf %256, %264 : vector<6x384xf32>
    %266 = vector.broadcast %184 : vector<6x1xf32> to vector<6x384xf32>
    %267 = arith.addf %265, %266 : vector<6x384xf32>
    %268 = arith.subf %5, %267 : vector<6x384xf32>
    %c0_212 = arith.constant 0 : index
    %c0_213 = arith.constant 0 : index
    %269 = vector.load %arg10[%c0_212, %c0_213] : memref<16x6xf32, #tpu.memory_space<vmem>>, vector<16x6xf32>
    %cst_214 = arith.constant dense<0.000000e+00> : vector<16x384xf32>
    %270 = tpu.matmul %269, %3, %cst_214 {dimension_numbers = #tpu.dot_dimension_numbers<[1], [0], [0], [1], [0, 0, 1, 1], [], []>} : vector<16x6xf32>, vector<6x384xf32>, vector<16x384xf32> -> vector<16x384xf32>
    %c0_215 = arith.constant 0 : index
    %c0_216 = arith.constant 0 : index
    %271 = vector.load %arg11[%c0_215, %c0_216] : memref<16x6xf32, #tpu.memory_space<vmem>>, vector<16x6xf32>
    %cst_217 = arith.constant dense<0.000000e+00> : vector<16x384xf32>
    %272 = tpu.matmul %271, %268, %cst_217 {dimension_numbers = #tpu.dot_dimension_numbers<[1], [0], [0], [1], [0, 0, 1, 1], [], []>} : vector<16x6xf32>, vector<6x384xf32>, vector<16x384xf32> -> vector<16x384xf32>
    %273 = arith.addf %270, %272 : vector<16x384xf32>
    %274 = vector.extract_strided_slice %1 {offsets = [0, 3], sizes = [16, 1], strides = [1, 1]} : vector<16x8xf32> to vector<16x1xf32>
    %275 = vector.broadcast %274 : vector<16x1xf32> to vector<16x384xf32>
    %276 = arith.addf %273, %275 : vector<16x384xf32>
    %cst_218 = arith.constant 0.000000e+00 : f32
    %277 = vector.broadcast %cst_218 : f32 to vector<16x384xf32>
    %278 = arith.maximumf %276, %277 : vector<16x384xf32>
    %c0_219 = arith.constant 0 : index
    %c0_220 = arith.constant 0 : index
    %279 = vector.load %arg12[%c0_219, %c0_220] : memref<6x16xf32, #tpu.memory_space<vmem>>, vector<6x16xf32>
    %cst_221 = arith.constant dense<0.000000e+00> : vector<6x384xf32>
    %280 = tpu.matmul %279, %278, %cst_221 {dimension_numbers = #tpu.dot_dimension_numbers<[1], [0], [0], [1], [0, 0, 1, 1], [], []>} : vector<6x16xf32>, vector<16x384xf32>, vector<6x384xf32> -> vector<6x384xf32>
    %281 = vector.extract_strided_slice %1 {offsets = [0, 4], sizes = [6, 1], strides = [1, 1]} : vector<16x8xf32> to vector<6x1xf32>
    %282 = vector.broadcast %281 : vector<6x1xf32> to vector<6x384xf32>
    %283 = arith.addf %280, %282 : vector<6x384xf32>
    %cst_222 = arith.constant 0.000000e+00 : f32
    %284 = vector.broadcast %cst_222 : f32 to vector<6x384xf32>
    %285 = arith.subf %284, %283 : vector<6x384xf32>
    %286 = math.exp %285 : vector<6x384xf32>
    %cst_223 = arith.constant 1.000000e+00 : f32
    %287 = vector.broadcast %cst_223 : f32 to vector<6x384xf32>
    %288 = arith.addf %287, %286 : vector<6x384xf32>
    %cst_224 = arith.constant 1.000000e+00 : f32
    %289 = vector.broadcast %cst_224 : f32 to vector<6x384xf32>
    %290 = arith.divf %289, %288 : vector<6x384xf32>
    %291 = arith.mulf %3, %290 : vector<6x384xf32>
    %cst_225 = arith.constant 1.000000e+00 : f32
    %292 = vector.broadcast %cst_225 : f32 to vector<6x384xf32>
    %293 = arith.subf %292, %290 : vector<6x384xf32>
    %294 = arith.mulf %268, %293 : vector<6x384xf32>
    %295 = arith.addf %291, %294 : vector<6x384xf32>
    %c0_226 = arith.constant 0 : index
    %c0_227 = arith.constant 0 : index
    %296 = vector.load %arg3[%c0_226, %c0_227] : memref<6x384xf32, #tpu.memory_space<vmem>>, vector<6x384xf32>
    %297 = arith.mulf %295, %296 : vector<6x384xf32>
    %c0_228 = arith.constant 0 : index
    %c0_229 = arith.constant 0 : index
    %298 = vector.load %arg4[%c0_228, %c0_229] : memref<6x384xf32, #tpu.memory_space<vmem>>, vector<6x384xf32>
    %299 = arith.addf %297, %298 : vector<6x384xf32>
    %c0_230 = arith.constant 0 : index
    %c0_231 = arith.constant 0 : index
    %300 = vector.load %arg14[%c0_230, %c0_231] : memref<6x384xf32, #tpu.memory_space<vmem>>, vector<6x384xf32>
    tpu.vector_store %arg14[%c0_230, %c0_231], %299 {strides = array<i32>} : memref<6x384xf32, #tpu.memory_space<vmem>>, vector<6x384xf32>,
    return
  }
  func.func @transform_0(%arg0: i32) -> (i32, i32) {
    %c0_i32 = arith.constant 0 : i32
    %c0_i32_0 = arith.constant 0 : i32
    %c0_i32_1 = arith.constant 0 : i32
    return %c0_i32, %c0_i32_0 : i32, i32
  }
  func.func @transform_1(%arg0: i32) -> (i32, i32, i32) {
    %c0_i32 = arith.constant 0 : i32
    %c0_i32_0 = arith.constant 0 : i32
    %c0_i32_1 = arith.constant 0 : i32
    %c0_i32_2 = arith.constant 0 : i32
    return %c0_i32, %c0_i32_0, %c0_i32_1 : i32, i32, i32
  }
  func.func @transform_2(%arg0: i32) -> (i32, i32) {
    %c0_i32 = arith.constant 0 : i32
    %c0_i32_0 = arith.constant 0 : i32
    %c0_i32_1 = arith.constant 0 : i32
    return %c0_i32, %c0_i32_0 : i32, i32
  }
  func.func @transform_3(%arg0: i32) -> (i32, i32) {
    %c0_i32 = arith.constant 0 : i32
    %c0_i32_0 = arith.constant 0 : i32
    %c0_i32_1 = arith.constant 0 : i32
    return %c0_i32, %c0_i32_0 : i32, i32
  }
  func.func @transform_4(%arg0: i32) -> (i32, i32) {
    %c0_i32 = arith.constant 0 : i32
    %c0_i32_0 = arith.constant 0 : i32
    %c0_i32_1 = arith.constant 0 : i32
    return %c0_i32, %c0_i32_0 : i32, i32
  }
  func.func @transform_5(%arg0: i32) -> (i32, i32) {
    %c0_i32 = arith.constant 0 : i32
    %c0_i32_0 = arith.constant 0 : i32
    %c0_i32_1 = arith.constant 0 : i32
    return %c0_i32, %c0_i32_0 : i32, i32
  }
  func.func @transform_6(%arg0: i32) -> (i32, i32, i32) {
    %c0_i32 = arith.constant 0 : i32
    %c0_i32_0 = arith.constant 0 : i32
    %c0_i32_1 = arith.constant 0 : i32
    %c0_i32_2 = arith.constant 0 : i32
    return %c0_i32, %c0_i32_0, %c0_i32_1 : i32, i32, i32
  }
  func.func @transform_7(%arg0: i32) -> (i32, i32, i32) {
    %c0_i32 = arith.constant 0 : i32
    %c0_i32_0 = arith.constant 0 : i32
    %c0_i32_1 = arith.constant 0 : i32
    %c0_i32_2 = arith.constant 0 : i32
    return %c0_i32, %c0_i32_0, %c0_i32_1 : i32, i32, i32
  }
  func.func @transform_8(%arg0: i32) -> (i32, i32, i32) {
    %c0_i32 = arith.constant 0 : i32
    %c0_i32_0 = arith.constant 0 : i32
    %c0_i32_1 = arith.constant 0 : i32
    %c0_i32_2 = arith.constant 0 : i32
    return %c0_i32, %c0_i32_0, %c0_i32_1 : i32, i32, i32
  }
  func.func @transform_9(%arg0: i32) -> (i32, i32) {
    %c0_i32 = arith.constant 0 : i32
    %c0_i32_0 = arith.constant 0 : i32
    %c0_i32_1 = arith.constant 0 : i32
    return %c0_i32, %c0_i32_0 : i32, i32
  }
  func.func @transform_10(%arg0: i32) -> (i32, i32) {
    %c0_i32 = arith.constant 0 : i32
    %c0_i32_0 = arith.constant 0 : i32
    %c0_i32_1 = arith.constant 0 : i32
    return %c0_i32, %c0_i32_0 : i32, i32
  }
  func.func @transform_11(%arg0: i32) -> (i32, i32) {
    %c0_i32 = arith.constant 0 : i32
    %c0_i32_0 = arith.constant 0 : i32
    %c0_i32_1 = arith.constant 0 : i32
    return %c0_i32, %c0_i32_0 : i32, i32
  }
  func.func @transform_12(%arg0: i32) -> (i32, i32) {
    %c0_i32 = arith.constant 0 : i32
    %c0_i32_0 = arith.constant 0 : i32
    %c0_i32_1 = arith.constant 0 : i32
    return %c0_i32, %c0_i32_0 : i32, i32
  }
  func.func @transform_13(%arg0: i32) -> (i32, i32) {
    %c0_i32 = arith.constant 0 : i32
    %c0_i32_0 = arith.constant 0 : i32
    %c0_i32_1 = arith.constant 0 : i32
    return %c0_i32, %c0_i32_0 : i32, i32
  }
}

</mosaic_0001>

<llo_original>
// kernel: reverse.0
$region0: #{reverse.0}
  %s0 = inlined_call_operand.vmem [shape: f32[2,3,16,7], index: 0, kind: input, shape index: {}]
  %s1 = inlined_call_operand.vmem [shape: f32[2,3,16,7], index: 1, kind: output, shape index: {}]
  $region1: #{reverse.0} parent=0
    #allocation0 [shape = 'u8[49152]{0}', space=vmem, size = 0xc000, scoped, tag = 'operand span for operand 0']
    #allocation1 [shape = 'u8[24576]{0}', space=vmem, size = 0x6000, scoped, tag = 'operand span for operand 1']
    %s2 = scalar_lea.vmem [#allocation0], 8
    // Predicated region
    $region2: #{reverse.0} parent=1 // pred_check
      _
    $region3: #{reverse.0} parent=1 // pred_check_branch
      %4 = sbr.rel (0) target = $region5
    $region4: #{reverse.0} parent=1 // pred_region
      // Predicated region
      $region6: #{reverse.0} parent=4 // pred_check
        _
      $region7: #{reverse.0} parent=4 // pred_check_branch
        %6 = sbr.rel (0) target = $region9
      $region8: #{reverse.0} parent=4 // pred_region
        // Predicated region
        $region21: #{reverse.0} parent=8 // pred_check
          _
        $region22: #{reverse.0} parent=8 // pred_check_branch
          %32 = sbr.rel (0) target = $region24
        $region23: #{reverse.0} parent=8 // pred_region
          loop: start=0, step=1, limit=1
          $region25: #{reverse.0} parent=23 // loop_pre_header
            _
          $region26: #{reverse.0} parent=23 // loop_header
            %s34 = sphi 0, %s38
            %p35 = scmp.ge.s32.totalorder %s34, 1
            %s39 = sphi %s0, %s0
            %s40 = sphi %s2, %s2
          $region27: #{reverse.0} parent=23 // loop_header_branch
            %37 = sbr.rel (%p35) target = $region31
          $region28: #{reverse.0} parent=23 // loop_body
            %v41 = vld [vmem:[%s39] sm:$0xff]
            %42 = vst [vmem:[%s40] sm:$0xff] %v41
            %v43 = vld [vmem:[%s39 + $0x8] sm:$0xff]
            %44 = vst [vmem:[%s40 + $0x10] sm:$0xff] %v43
            %v45 = vld [vmem:[%s39 + $0x10] sm:$0xff]
            %46 = vst [vmem:[%s40 + $0x20] sm:$0xff] %v45
            %v47 = vld [vmem:[%s39 + $0x18] sm:$0xff]
            %48 = vst [vmem:[%s40 + $0x30] sm:$0xff] %v47
            %v49 = vld [vmem:[%s39 + $0x20] sm:$0xff]
            %50 = vst [vmem:[%s40 + $0x40] sm:$0xff] %v49
            %v51 = vld [vmem:[%s39 + $0x28] sm:$0xff]
            %52 = vst [vmem:[%s40 + $0x50] sm:$0xff] %v51
          $region29: #{reverse.0} parent=23 // loop_footer
            %s38 = sadd.s32 1, %s34
          $region30: #{reverse.0} parent=23 // loop_footer_branch
            %33 = sbr.rel target = $region26
          $region31: #{reverse.0} parent=23 // loop_exit
            _
        $region24: #{reverse.0} parent=8 // pred_fallthru
          _
        // Predicated region
        $region32: #{reverse.0} parent=8 // pred_check
          _
        $region33: #{reverse.0} parent=8 // pred_check_branch
          %54 = sbr.rel target = $region35
        $region34: #{reverse.0} parent=8 // pred_region
          _
        $region35: #{reverse.0} parent=8 // pred_fallthru
          _
      $region9: #{reverse.0} parent=4 // pred_fallthru
        _
      // Predicated region
      $region10: #{reverse.0} parent=4 // pred_check
        _
      $region11: #{reverse.0} parent=4 // pred_check_branch
        %8 = sbr.rel target = $region13
      $region12: #{reverse.0} parent=4 // pred_region
        %s10 = ssub.s32 256, 1
        loop: start=0, step=1, limit=1
        $region14: #{reverse.0} parent=12 // loop_pre_header
          _
        $region15: #{reverse.0} parent=12 // loop_header
          %s12 = sphi 0, %s16
          %p13 = scmp.ge.s32.totalorder %s12, 1
          %s17 = sphi %s0, %s0
          %s18 = sphi %s2, %s2
        $region16: #{reverse.0} parent=12 // loop_header_branch
          %15 = sbr.rel (%p13) target = $region20
        $region17: #{reverse.0} parent=12 // loop_body
          %v19 = vld [vmem:[%s17] sm:%s10]
          %20 = vst [vmem:[%s18] sm:%s10] %v19
          %v21 = vld [vmem:[%s17 + $0x8] sm:%s10]
          %22 = vst [vmem:[%s18 + $0x10] sm:%s10] %v21
          %v23 = vld [vmem:[%s17 + $0x10] sm:%s10]
          %24 = vst [vmem:[%s18 + $0x20] sm:%s10] %v23
          %v25 = vld [vmem:[%s17 + $0x18] sm:%s10]
          %26 = vst [vmem:[%s18 + $0x30] sm:%s10] %v25
          %v27 = vld [vmem:[%s17 + $0x20] sm:%s10]
          %28 = vst [vmem:[%s18 + $0x40] sm:%s10] %v27
          %v29 = vld [vmem:[%s17 + $0x28] sm:%s10]
          %30 = vst [vmem:[%s18 + $0x50] sm:%s10] %v29
        $region18: #{reverse.0} parent=12 // loop_footer
          %s16 = sadd.s32 1, %s12
        $region19: #{reverse.0} parent=12 // loop_footer_branch
          %11 = sbr.rel target = $region15
        $region20: #{reverse.0} parent=12 // loop_exit
          _
      $region13: #{reverse.0} parent=4 // pred_fallthru
        _
    $region5: #{reverse.0} parent=1 // pred_fallthru
      _
    %55 = vnop
    %s56 = scalar_lea.vmem [#allocation0], 7
    %v57 = vld [vmem:[%s56] ss:$-1 sm:$0xff]
    %v58 = vrot.slane %v57, 1
    %59 = vst [vmem:[#allocation1] sm:$0xff] %v58
    %s60 = scalar_lea.vmem [#allocation0], 8
    %s61 = scalar_lea.vmem %s60, 7 [#allocation0]
    %v62 = vld [vmem:[%s61] ss:$-1 sm:$0xff]
    %v63 = vrot.slane %v62, 1
    %v64 = vlaneseq
    %v65 = vshrl.u32 %v64, 7
    %vm66 = vcmp.lt.s32.totalorder %v65, 7
    %67 = vst.msk [vmem:[#allocation1] sm:$0xff] %vm66, %v63
    %s68 = scalar_lea.vmem [#allocation1], 8
    %s69 = scalar_lea.vmem [#allocation0], 16
    %s70 = scalar_lea.vmem %s69, 7 [#allocation0]
    %v71 = vld [vmem:[%s70] ss:$-1 sm:$0xff]
    %v72 = vrot.slane %v71, 1
    %73 = vst [vmem:[%s68] sm:$0xff] %v72
    %s74 = scalar_lea.vmem %s69, 8 [#allocation0]
    %s75 = scalar_lea.vmem %s74, 7 [#allocation0]
    %v76 = vld [vmem:[%s75] ss:$-1 sm:$0xff]
    %v77 = vrot.slane %v76, 1
    %v78 = vlaneseq
    %v79 = vshrl.u32 %v78, 7
    %vm80 = vcmp.lt.s32.totalorder %v79, 7
    %81 = vst.msk [vmem:[%s68] sm:$0xff] %vm80, %v77
    %s82 = scalar_lea.vmem [#allocation1], 16
    %s83 = scalar_lea.vmem [#allocation0], 32
    %s84 = scalar_lea.vmem %s83, 7 [#allocation0]
    %v85 = vld [vmem:[%s84] ss:$-1 sm:$0xff]
    %v86 = vrot.slane %v85, 1
    %87 = vst [vmem:[%s82] sm:$0xff] %v86
    %s88 = scalar_lea.vmem %s83, 8 [#allocation0]
    %s89 = scalar_lea.vmem %s88, 7 [#allocation0]
    %v90 = vld [vmem:[%s89] ss:$-1 sm:$0xff]
    %v91 = vrot.slane %v90, 1
    %v92 = vlaneseq
    %v93 = vshrl.u32 %v92, 7
    %vm94 = vcmp.lt.s32.totalorder %v93, 7
    %95 = vst.msk [vmem:[%s82] sm:$0xff] %vm94, %v91
    %s96 = scalar_lea.vmem [#allocation1], 24
    %s97 = scalar_lea.vmem [#allocation0], 48
    %s98 = scalar_lea.vmem %s97, 7 [#allocation0]
    %v99 = vld [vmem:[%s98] ss:$-1 sm:$0xff]
    %v100 = vrot.slane %v99, 1
    %101 = vst [vmem:[%s96] sm:$0xff] %v100
    %s102 = scalar_lea.vmem %s97, 8 [#allocation0]
    %s103 = scalar_lea.vmem %s102, 7 [#allocation0]
    %v104 = vld [vmem:[%s103] ss:$-1 sm:$0xff]
    %v105 = vrot.slane %v104, 1
    %v106 = vlaneseq
    %v107 = vshrl.u32 %v106, 7
    %vm108 = vcmp.lt.s32.totalorder %v107, 7
    %109 = vst.msk [vmem:[%s96] sm:$0xff] %vm108, %v105
    %s110 = scalar_lea.vmem [#allocation1], 32
    %s111 = scalar_lea.vmem [#allocation0], 64
    %s112 = scalar_lea.vmem %s111, 7 [#allocation0]
    %v113 = vld [vmem:[%s112] ss:$-1 sm:$0xff]
    %v114 = vrot.slane %v113, 1
    %115 = vst [vmem:[%s110] sm:$0xff] %v114
    %s116 = scalar_lea.vmem %s111, 8 [#allocation0]
    %s117 = scalar_lea.vmem %s116, 7 [#allocation0]
    %v118 = vld [vmem:[%s117] ss:$-1 sm:$0xff]
    %v119 = vrot.slane %v118, 1
    %v120 = vlaneseq
    %v121 = vshrl.u32 %v120, 7
    %vm122 = vcmp.lt.s32.totalorder %v121, 7
    %123 = vst.msk [vmem:[%s110] sm:$0xff] %vm122, %v119
    %s124 = scalar_lea.vmem [#allocation1], 40
    %s125 = scalar_lea.vmem [#allocation0], 80
    %s126 = scalar_lea.vmem %s125, 7 [#allocation0]
    %v127 = vld [vmem:[%s126] ss:$-1 sm:$0xff]
    %v128 = vrot.slane %v127, 1
    %129 = vst [vmem:[%s124] sm:$0xff] %v128
    %s130 = scalar_lea.vmem %s125, 8 [#allocation0]
    %s131 = scalar_lea.vmem %s130, 7 [#allocation0]
    %v132 = vld [vmem:[%s131] ss:$-1 sm:$0xff]
    %v133 = vrot.slane %v132, 1
    %v134 = vlaneseq
    %v135 = vshrl.u32 %v134, 7
    %vm136 = vcmp.lt.s32.totalorder %v135, 7
    %137 = vst.msk [vmem:[%s124] sm:$0xff] %vm136, %v133
    // Predicated region
    $region36: #{reverse.0} parent=1 // pred_check
      _
    $region37: #{reverse.0} parent=1 // pred_check_branch
      %139 = sbr.rel (0) target = $region39
    $region38: #{reverse.0} parent=1 // pred_region
      // Predicated region
      $region40: #{reverse.0} parent=38 // pred_check
        _
      $region41: #{reverse.0} parent=38 // pred_check_branch
        %141 = sbr.rel (0) target = $region43
      $region42: #{reverse.0} parent=38 // pred_region
        // Predicated region
        $region55: #{reverse.0} parent=42 // pred_check
          _
        $region56: #{reverse.0} parent=42 // pred_check_branch
          %167 = sbr.rel (0) target = $region58
        $region57: #{reverse.0} parent=42 // pred_region
          loop: start=0, step=1, limit=1
          $region59: #{reverse.0} parent=57 // loop_pre_header
            _
          $region60: #{reverse.0} parent=57 // loop_header
            %s169 = sphi 0, %s173
            %p170 = scmp.ge.s32.totalorder %s169, 1
            %s174 = sphi [#allocation1], [#allocation1]
            %s175 = sphi %s1, %s1
          $region61: #{reverse.0} parent=57 // loop_header_branch
            %172 = sbr.rel (%p170) target = $region65
          $region62: #{reverse.0} parent=57 // loop_body
            %v176 = vld [vmem:[%s174] sm:$0xff]
            %177 = vst [vmem:[%s175] sm:$0xff] %v176
            %v178 = vld [vmem:[%s174 + $0x8] sm:$0xff]
            %179 = vst [vmem:[%s175 + $0x8] sm:$0xff] %v178
            %v180 = vld [vmem:[%s174 + $0x10] sm:$0xff]
            %181 = vst [vmem:[%s175 + $0x10] sm:$0xff] %v180
            %v182 = vld [vmem:[%s174 + $0x18] sm:$0xff]
            %183 = vst [vmem:[%s175 + $0x18] sm:$0xff] %v182
            %v184 = vld [vmem:[%s174 + $0x20] sm:$0xff]
            %185 = vst [vmem:[%s175 + $0x20] sm:$0xff] %v184
            %v186 = vld [vmem:[%s174 + $0x28] sm:$0xff]
            %187 = vst [vmem:[%s175 + $0x28] sm:$0xff] %v186
          $region63: #{reverse.0} parent=57 // loop_footer
            %s173 = sadd.s32 1, %s169
          $region64: #{reverse.0} parent=57 // loop_footer_branch
            %168 = sbr.rel target = $region60
          $region65: #{reverse.0} parent=57 // loop_exit
            _
        $region58: #{reverse.0} parent=42 // pred_fallthru
          _
        // Predicated region
        $region66: #{reverse.0} parent=42 // pred_check
          _
        $region67: #{reverse.0} parent=42 // pred_check_branch
          %189 = sbr.rel target = $region69
        $region68: #{reverse.0} parent=42 // pred_region
          _
        $region69: #{reverse.0} parent=42 // pred_fallthru
          _
      $region43: #{reverse.0} parent=38 // pred_fallthru
        _
      // Predicated region
      $region44: #{reverse.0} parent=38 // pred_check
        _
      $region45: #{reverse.0} parent=38 // pred_check_branch
        %143 = sbr.rel target = $region47
      $region46: #{reverse.0} parent=38 // pred_region
        %s145 = ssub.s32 256, 1
        loop: start=0, step=1, limit=1
        $region48: #{reverse.0} parent=46 // loop_pre_header
          _
        $region49: #{reverse.0} parent=46 // loop_header
          %s147 = sphi 0, %s151
          %p148 = scmp.ge.s32.totalorder %s147, 1
          %s152 = sphi [#allocation1], [#allocation1]
          %s153 = sphi %s1, %s1
        $region50: #{reverse.0} parent=46 // loop_header_branch
          %150 = sbr.rel (%p148) target = $region54
        $region51: #{reverse.0} parent=46 // loop_body
          %v154 = vld [vmem:[%s152] sm:%s145]
          %155 = vst [vmem:[%s153] sm:%s145] %v154
          %v156 = vld [vmem:[%s152 + $0x8] sm:%s145]
          %157 = vst [vmem:[%s153 + $0x8] sm:%s145] %v156
          %v158 = vld [vmem:[%s152 + $0x10] sm:%s145]
          %159 = vst [vmem:[%s153 + $0x10] sm:%s145] %v158
          %v160 = vld [vmem:[%s152 + $0x18] sm:%s145]
          %161 = vst [vmem:[%s153 + $0x18] sm:%s145] %v160
          %v162 = vld [vmem:[%s152 + $0x20] sm:%s145]
          %163 = vst [vmem:[%s153 + $0x20] sm:%s145] %v162
          %v164 = vld [vmem:[%s152 + $0x28] sm:%s145]
          %165 = vst [vmem:[%s153 + $0x28] sm:%s145] %v164
        $region52: #{reverse.0} parent=46 // loop_footer
          %s151 = sadd.s32 1, %s147
        $region53: #{reverse.0} parent=46 // loop_footer_branch
          %146 = sbr.rel target = $region49
        $region54: #{reverse.0} parent=46 // loop_exit
          _
      $region47: #{reverse.0} parent=38 // pred_fallthru
        _
    $region39: #{reverse.0} parent=1 // pred_fallthru
      _
    %190 = vnop

// kernel: frequency_domain_enhancer.1
$region0: #{frequency_domain_enhancer.1}
  #allocation0 [shape = 'u32[]', space=smem, size = 0x4, offset = 0x4, fixed_abs, tag = 'smem constant byte address 0x4 - core index']
  #allocation1 [shape = 'u32[72,128]{1,0:T(1,128)}', space=vmem, size = 0x9000, scoped, tag = 'internal scratch']
  %s0 = inlined_call_operand.vmem [shape: f32[151,384], index: 0, kind: input, shape index: {}]
  %s1 = inlined_call_operand.vmem [shape: f32[9,1,384], index: 1, kind: input, shape index: {}]
  %s2 = inlined_call_operand.vmem [shape: f32[6,384], index: 2, kind: input, shape index: {}]
  %s3 = inlined_call_operand.vmem [shape: f32[6,384], index: 3, kind: input, shape index: {}]
  %s4 = inlined_call_operand.vmem [shape: f32[6,151], index: 4, kind: input, shape index: {}]
  %s5 = inlined_call_operand.vmem [shape: f32[6,151], index: 5, kind: input, shape index: {}]
  %s6 = inlined_call_operand.vmem [shape: f32[9,16,6], index: 6, kind: input, shape index: {}]
  %s7 = inlined_call_operand.vmem [shape: f32[9,16,16], index: 7, kind: input, shape index: {}]
  %s8 = inlined_call_operand.vmem [shape: f32[9,6,16], index: 8, kind: input, shape index: {}]
  %s9 = inlined_call_operand.vmem [shape: f32[16,6], index: 9, kind: input, shape index: {}]
  %s10 = inlined_call_operand.vmem [shape: f32[16,6], index: 10, kind: input, shape index: {}]
  %s11 = inlined_call_operand.vmem [shape: f32[6,16], index: 11, kind: input, shape index: {}]
  %s12 = inlined_call_operand.vmem [shape: f32[16,8], index: 12, kind: input, shape index: {}]
  %s13 = inlined_call_operand.vmem [shape: f32[6,384], index: 13, kind: output, shape index: {}]
  %s14 = sld [smem:[#allocation0]]
  $region62: #{frequency_domain_enhancer.1} parent=0
    _
  %s16 = ssub.s32 1, %s14
  %s17 = scalar_select 0, %s16, %s14
  // Predicated region
  $region2: #{frequency_domain_enhancer.1} parent=0 // pred_check
    _
  $region3: #{frequency_domain_enhancer.1} parent=0 // pred_check_branch
    %19 = sbr.rel (0) target = $region5
  $region4: #{frequency_domain_enhancer.1} parent=0 // pred_region
    _
  $region5: #{frequency_domain_enhancer.1} parent=0 // pred_fallthru
    _
  // Predicated region
  $region6: #{frequency_domain_enhancer.1} parent=0 // pred_check
    _
  $region7: #{frequency_domain_enhancer.1} parent=0 // pred_check_branch
    %21 = sbr.rel (0) target = $region9
  $region8: #{frequency_domain_enhancer.1} parent=0 // pred_region
    _
  $region9: #{frequency_domain_enhancer.1} parent=0 // pred_fallthru
    _
  // Predicated region
  $region10: #{frequency_domain_enhancer.1} parent=0 // pred_check
    _
  $region11: #{frequency_domain_enhancer.1} parent=0 // pred_check_branch
    %23 = sbr.rel (0) target = $region13
  $region12: #{frequency_domain_enhancer.1} parent=0 // pred_region
    _
  $region13: #{frequency_domain_enhancer.1} parent=0 // pred_fallthru
    _
  // Predicated region
  $region14: #{frequency_domain_enhancer.1} parent=0 // pred_check
    _
  $region15: #{frequency_domain_enhancer.1} parent=0 // pred_check_branch
    %25 = sbr.rel (0) target = $region17
  $region16: #{frequency_domain_enhancer.1} parent=0 // pred_region
    _
  $region17: #{frequency_domain_enhancer.1} parent=0 // pred_fallthru
    _
  // Predicated region
  $region18: #{frequency_domain_enhancer.1} parent=0 // pred_check
    _
  $region19: #{frequency_domain_enhancer.1} parent=0 // pred_check_branch
    %27 = sbr.rel (0) target = $region21
  $region20: #{frequency_domain_enhancer.1} parent=0 // pred_region
    _
  $region21: #{frequency_domain_enhancer.1} parent=0 // pred_fallthru
    _
  // Predicated region
  $region22: #{frequency_domain_enhancer.1} parent=0 // pred_check
    _
  $region23: #{frequency_domain_enhancer.1} parent=0 // pred_check_branch
    %29 = sbr.rel (0) target = $region25
  $region24: #{frequency_domain_enhancer.1} parent=0 // pred_region
    _
  $region25: #{frequency_domain_enhancer.1} parent=0 // pred_fallthru
    _
  // Predicated region
  $region26: #{frequency_domain_enhancer.1} parent=0 // pred_check
    _
  $region27: #{frequency_domain_enhancer.1} parent=0 // pred_check_branch
    %31 = sbr.rel (0) target = $region29
  $region28: #{frequency_domain_enhancer.1} parent=0 // pred_region
    _
  $region29: #{frequency_domain_enhancer.1} parent=0 // pred_fallthru
    _
  // Predicated region
  $region30: #{frequency_domain_enhancer.1} parent=0 // pred_check
    _
  $region31: #{frequency_domain_enhancer.1} parent=0 // pred_check_branch
    %33 = sbr.rel (0) target = $region33
  $region32: #{frequency_domain_enhancer.1} parent=0 // pred_region
    _
  $region33: #{frequency_domain_enhancer.1} parent=0 // pred_fallthru
    _
  // Predicated region
  $region34: #{frequency_domain_enhancer.1} parent=0 // pred_check
    _
  $region35: #{frequency_domain_enhancer.1} parent=0 // pred_check_branch
    %35 = sbr.rel (0) target = $region37
  $region36: #{frequency_domain_enhancer.1} parent=0 // pred_region
    _
  $region37: #{frequency_domain_enhancer.1} parent=0 // pred_fallthru
    _
  // Predicated region
  $region38: #{frequency_domain_enhancer.1} parent=0 // pred_check
    _
  $region39: #{frequency_domain_enhancer.1} parent=0 // pred_check_branch
    %37 = sbr.rel (0) target = $region41
  $region40: #{frequency_domain_enhancer.1} parent=0 // pred_region
    _
  $region41: #{frequency_domain_enhancer.1} parent=0 // pred_fallthru
    _
  // Predicated region
  $region42: #{frequency_domain_enhancer.1} parent=0 // pred_check
    _
  $region43: #{frequency_domain_enhancer.1} parent=0 // pred_check_branch
    %39 = sbr.rel (0) target = $region45
  $region44: #{frequency_domain_enhancer.1} parent=0 // pred_region
    _
  $region45: #{frequency_domain_enhancer.1} parent=0 // pred_fallthru
    _
  // Predicated region
  $region46: #{frequency_domain_enhancer.1} parent=0 // pred_check
    _
  $region47: #{frequency_domain_enhancer.1} parent=0 // pred_check_branch
    %41 = sbr.rel (0) target = $region49
  $region48: #{frequency_domain_enhancer.1} parent=0 // pred_region
    _
  $region49: #{frequency_domain_enhancer.1} parent=0 // pred_fallthru
    _
  // Predicated region
  $region50: #{frequency_domain_enhancer.1} parent=0 // pred_check
    _
  $region51: #{frequency_domain_enhancer.1} parent=0 // pred_check_branch
    %43 = sbr.rel (0) target = $region53
  $region52: #{frequency_domain_enhancer.1} parent=0 // pred_region
    _
  $region53: #{frequency_domain_enhancer.1} parent=0 // pred_fallthru
    _
  %v44 = vld [vmem:[%s0] sm:$0xff]
  %v45 = vld [vmem:[%s0 + $0x8] sm:$0xff]
  %v46 = vld [vmem:[%s0 + $0x10] sm:$0xff]
  %v47 = vld [vmem:[%s0 + $0x18] sm:$0xff]
  %v48 = vld [vmem:[%s0 + $0x20] sm:$0xff]
  %v49 = vld [vmem:[%s0 + $0x28] sm:$0xff]
  %v50 = vld [vmem:[%s0 + $0x30] sm:$0xff]
  %v51 = vld [vmem:[%s0 + $0x38] sm:$0xff]
  %v52 = vld [vmem:[%s0 + $0x40] sm:$0xff]
  %v53 = vld [vmem:[%s0 + $0x48] sm:$0xff]
  %v54 = vld [vmem:[%s0 + $0x50] sm:$0xff]
  %v55 = vld [vmem:[%s0 + $0x58] sm:$0xff]
  %v56 = vld [vmem:[%s0 + $0x60] sm:$0xff]
  %v57 = vld [vmem:[%s0 + $0x68] sm:$0xff]
  %v58 = vld [vmem:[%s0 + $0x70] sm:$0xff]
  %v59 = vld [vmem:[%s0 + $0x78] sm:$0xff]
  %v60 = vld [vmem:[%s0 + $0x80] sm:$0xff]
  %v61 = vld [vmem:[%s0 + $0x88] sm:$0xff]
  %v62 = vld [vmem:[%s0 + $0x90] sm:$0xff]
  %v63 = vld [vmem:[%s0 + $0x98] sm:$0xff]
  %v64 = vld [vmem:[%s0 + $0xa0] sm:$0xff]
  %v65 = vld [vmem:[%s0 + $0xa8] sm:$0xff]
  %v66 = vld [vmem:[%s0 + $0xb0] sm:$0xff]
  %v67 = vld [vmem:[%s0 + $0xb8] sm:$0xff]
  %v68 = vld [vmem:[%s0 + $0xc0] sm:$0xff]
  %v69 = vld [vmem:[%s0 + $0xc8] sm:$0xff]
  %v70 = vld [vmem:[%s0 + $0xd0] sm:$0xff]
  %v71 = vld [vmem:[%s0 + $0xd8] sm:$0xff]
  %v72 = vld [vmem:[%s0 + $0xe0] sm:$0xff]
  %v73 = vld [vmem:[%s0 + $0xe8] sm:$0xff]
  %v74 = vld [vmem:[%s0 + $0xf0] sm:$0xff]
  %v75 = vld [vmem:[%s0 + $0xf8] sm:$0xff]
  %v76 = vld [vmem:[%s0 + $0x100] sm:$0xff]
  %v77 = vld [vmem:[%s0 + $0x108] sm:$0xff]
  %v78 = vld [vmem:[%s0 + $0x110] sm:$0xff]
  %v79 = vld [vmem:[%s0 + $0x118] sm:$0xff]
  %v80 = vld [vmem:[%s0 + $0x120] sm:$0xff]
  %v81 = vld [vmem:[%s0 + $0x128] sm:$0xff]
  %v82 = vld [vmem:[%s0 + $0x130] sm:$0xff]
  %v83 = vld [vmem:[%s0 + $0x138] sm:$0xff]
  %v84 = vld [vmem:[%s0 + $0x140] sm:$0xff]
  %v85 = vld [vmem:[%s0 + $0x148] sm:$0xff]
  %v86 = vld [vmem:[%s0 + $0x150] sm:$0xff]
  %v87 = vld [vmem:[%s0 + $0x158] sm:$0xff]
  %v88 = vld [vmem:[%s0 + $0x160] sm:$0xff]
  %v89 = vld [vmem:[%s0 + $0x168] sm:$0xff]
  %v90 = vld [vmem:[%s0 + $0x170] sm:$0xff]
  %v91 = vld [vmem:[%s0 + $0x178] sm:$0xff]
  %v92 = vld [vmem:[%s0 + $0x180] sm:$0xff]
  %v93 = vld [vmem:[%s0 + $0x188] sm:$0xff]
  %v94 = vld [vmem:[%s0 + $0x190] sm:$0xff]
  %v95 = vld [vmem:[%s0 + $0x198] sm:$0xff]
  %v96 = vld [vmem:[%s0 + $0x1a0] sm:$0xff]
  %v97 = vld [vmem:[%s0 + $0x1a8] sm:$0xff]
  %v98 = vld [vmem:[%s0 + $0x1b0] sm:$0x7f]
  %v99 = vld [vmem:[%s0 + $0x1b8] sm:$0x7f]
  %v100 = vld [vmem:[%s0 + $0x1c0] sm:$0x7f]
  %v101 = vld [vmem:[%s12] sm:$0xff]
  %v102 = vld [vmem:[%s12 + $0x8] sm:$0xff]
  %v103 = vld [vmem:[%s4] sm:$0x3f]
  %v104 = vld [vmem:[%s4 + $0x8] sm:$0x3f]
  %vm105 = vcmask 187392
  %v107 = vsel %vm105, %v104, 0
  %vm109 = vcmask 1046528
  %v111 = vsel %vm109, %v98, 0
  %v114 = vsel %vm109, %v99, 0
  %v117 = vsel %vm109, %v100, 0
  %119 = vmatpush.msra.mxu0 %v89
  %120 = vmatpush.msra.mxu0 %v86
  %121 = vmatpush.msra.mxu0 %v83
  %122 = vmatpush.msra.mxu0 %v80
  %123 = vmatpush.msra.mxu0 %v77
  %124 = vmatpush.msra.mxu0 %v74
  %125 = vmatpush.msra.mxu0 %v71
  %126 = vmatpush.msra.mxu0 %v68
  %127 = vmatpush.msra.mxu0 %v65
  %128 = vmatpush.msra.mxu0 %v62
  %129 = vmatpush.msra.mxu0 %v59
  %130 = vmatpush.msra.mxu0 %v56
  %131 = vmatpush.msra.mxu0 %v53
  %132 = vmatpush.msra.mxu0 %v50
  %133 = vmatpush.msra.mxu0 %v47
  %134 = vmatpush.msra.mxu0 %v44
  %135 = vmatmul.f32.gmra.mxu0 %v103
  %v136 = vpop.f32.mrf.mxu0
  %v137 = vadd.f32 0.0, %v136
  %138 = vdwg.mxu0
  %139 = vmatpush.msra.mxu0 0.0
  %140 = vmatpush.msra.mxu0 0.0
  %141 = vmatpush.msra.mxu0 0.0
  %142 = vmatpush.msra.mxu0 0.0
  %143 = vmatpush.msra.mxu0 0.0
  %144 = vmatpush.msra.mxu0 0.0
  %145 = vmatpush.msra.mxu0 0.0
  %146 = vmatpush.msra.mxu0 0.0
  %147 = vmatpush.msra.mxu0 0.0
  %148 = vmatpush.msra.mxu0 0.0
  %149 = vmatpush.msra.mxu0 0.0
  %150 = vmatpush.msra.mxu0 0.0
  %151 = vmatpush.msra.mxu0 0.0
  %152 = vmatpush.msra.mxu0 %v111
  %153 = vmatpush.msra.mxu0 %v95
  %154 = vmatpush.msra.mxu0 %v92
  %155 = vmatmul.f32.gmra.mxu0 %v107
  %v156 = vpop.f32.mrf.mxu0
  %v157 = vadd.f32 %v137, %v156
  %158 = vdwg.mxu0
  %159 = vmatpush.msra.mxu0 %v90
  %160 = vmatpush.msra.mxu0 %v87
  %161 = vmatpush.msra.mxu0 %v84
  %162 = vmatpush.msra.mxu0 %v81
  %163 = vmatpush.msra.mxu0 %v78
  %164 = vmatpush.msra.mxu0 %v75
  %165 = vmatpush.msra.mxu0 %v72
  %166 = vmatpush.msra.mxu0 %v69
  %167 = vmatpush.msra.mxu0 %v66
  %168 = vmatpush.msra.mxu0 %v63
  %169 = vmatpush.msra.mxu0 %v60
  %170 = vmatpush.msra.mxu0 %v57
  %171 = vmatpush.msra.mxu0 %v54
  %172 = vmatpush.msra.mxu0 %v51
  %173 = vmatpush.msra.mxu0 %v48
  %174 = vmatpush.msra.mxu0 %v45
  %175 = vmatmul.f32.gmra.mxu0 %v103
  %v176 = vpop.f32.mrf.mxu0
  %v177 = vadd.f32 0.0, %v176
  %178 = vdwg.mxu0
  %179 = vmatpush.msra.mxu0 0.0
  %180 = vmatpush.msra.mxu0 0.0
  %181 = vmatpush.msra.mxu0 0.0
  %182 = vmatpush.msra.mxu0 0.0
  %183 = vmatpush.msra.mxu0 0.0
  %184 = vmatpush.msra.mxu0 0.0
  %185 = vmatpush.msra.mxu0 0.0
  %186 = vmatpush.msra.mxu0 0.0
  %187 = vmatpush.msra.mxu0 0.0
  %188 = vmatpush.msra.mxu0 0.0
  %189 = vmatpush.msra.mxu0 0.0
  %190 = vmatpush.msra.mxu0 0.0
  %191 = vmatpush.msra.mxu0 0.0
  %192 = vmatpush.msra.mxu0 %v114
  %193 = vmatpush.msra.mxu0 %v96
  %194 = vmatpush.msra.mxu0 %v93
  %195 = vmatmul.f32.gmra.mxu0 %v107
  %v196 = vpop.f32.mrf.mxu0
  %v197 = vadd.f32 %v177, %v196
  %198 = vdwg.mxu0
  %199 = vmatpush.msra.mxu0 %v91
  %200 = vmatpush.msra.mxu0 %v88
  %201 = vmatpush.msra.mxu0 %v85
  %202 = vmatpush.msra.mxu0 %v82
  %203 = vmatpush.msra.mxu0 %v79
  %204 = vmatpush.msra.mxu0 %v76
  %205 = vmatpush.msra.mxu0 %v73
  %206 = vmatpush.msra.mxu0 %v70
  %207 = vmatpush.msra.mxu0 %v67
  %208 = vmatpush.msra.mxu0 %v64
  %209 = vmatpush.msra.mxu0 %v61
  %210 = vmatpush.msra.mxu0 %v58
  %211 = vmatpush.msra.mxu0 %v55
  %212 = vmatpush.msra.mxu0 %v52
  %213 = vmatpush.msra.mxu0 %v49
  %214 = vmatpush.msra.mxu0 %v46
  %215 = vmatmul.f32.gmra.mxu0 %v103
  %v216 = vpop.f32.mrf.mxu0
  %v217 = vadd.f32 0.0, %v216
  %218 = vdwg.mxu0
  %219 = vmatpush.msra.mxu0 0.0
  %220 = vmatpush.msra.mxu0 0.0
  %221 = vmatpush.msra.mxu0 0.0
  %222 = vmatpush.msra.mxu0 0.0
  %223 = vmatpush.msra.mxu0 0.0
  %224 = vmatpush.msra.mxu0 0.0
  %225 = vmatpush.msra.mxu0 0.0
  %226 = vmatpush.msra.mxu0 0.0
  %227 = vmatpush.msra.mxu0 0.0
  %228 = vmatpush.msra.mxu0 0.0
  %229 = vmatpush.msra.mxu0 0.0
  %230 = vmatpush.msra.mxu0 0.0
  %231 = vmatpush.msra.mxu0 0.0
  %232 = vmatpush.msra.mxu0 %v117
  %233 = vmatpush.msra.mxu0 %v97
  %234 = vmatpush.msra.mxu0 %v94
  %235 = vmatmul.f32.gmra.mxu0 %v107
  %v236 = vpop.f32.mrf.mxu0
  %v237 = vadd.f32 %v217, %v236
  %238 = vdwg.mxu0
  %v239 = vld [vmem:[%s5] sm:$0x3f]
  %v240 = vld [vmem:[%s5 + $0x8] sm:$0x3f]
  %v242 = vsel %vm105, %v240, 0
  %244 = vmatpush.msra.mxu0 %v89
  %245 = vmatpush.msra.mxu0 %v86
  %246 = vmatpush.msra.mxu0 %v83
  %247 = vmatpush.msra.mxu0 %v80
  %248 = vmatpush.msra.mxu0 %v77
  %249 = vmatpush.msra.mxu0 %v74
  %250 = vmatpush.msra.mxu0 %v71
  %251 = vmatpush.msra.mxu0 %v68
  %252 = vmatpush.msra.mxu0 %v65
  %253 = vmatpush.msra.mxu0 %v62
  %254 = vmatpush.msra.mxu0 %v59
  %255 = vmatpush.msra.mxu0 %v56
  %256 = vmatpush.msra.mxu0 %v53
  %257 = vmatpush.msra.mxu0 %v50
  %258 = vmatpush.msra.mxu0 %v47
  %259 = vmatpush.msra.mxu0 %v44
  %260 = vmatmul.f32.gmra.mxu0 %v239
  %v261 = vpop.f32.mrf.mxu0
  %v262 = vadd.f32 0.0, %v261
  %263 = vdwg.mxu0
  %264 = vmatpush.msra.mxu0 0.0
  %265 = vmatpush.msra.mxu0 0.0
  %266 = vmatpush.msra.mxu0 0.0
  %267 = vmatpush.msra.mxu0 0.0
  %268 = vmatpush.msra.mxu0 0.0
  %269 = vmatpush.msra.mxu0 0.0
  %270 = vmatpush.msra.mxu0 0.0
  %271 = vmatpush.msra.mxu0 0.0
  %272 = vmatpush.msra.mxu0 0.0
  %273 = vmatpush.msra.mxu0 0.0
  %274 = vmatpush.msra.mxu0 0.0
  %275 = vmatpush.msra.mxu0 0.0
  %276 = vmatpush.msra.mxu0 0.0
  %277 = vmatpush.msra.mxu0 %v111
  %278 = vmatpush.msra.mxu0 %v95
  %279 = vmatpush.msra.mxu0 %v92
  %280 = vmatmul.f32.gmra.mxu0 %v242
  %v281 = vpop.f32.mrf.mxu0
  %v282 = vadd.f32 %v262, %v281
  %283 = vdwg.mxu0
  %284 = vmatpush.msra.mxu0 %v90
  %285 = vmatpush.msra.mxu0 %v87
  %286 = vmatpush.msra.mxu0 %v84
  %287 = vmatpush.msra.mxu0 %v81
  %288 = vmatpush.msra.mxu0 %v78
  %289 = vmatpush.msra.mxu0 %v75
  %290 = vmatpush.msra.mxu0 %v72
  %291 = vmatpush.msra.mxu0 %v69
  %292 = vmatpush.msra.mxu0 %v66
  %293 = vmatpush.msra.mxu0 %v63
  %294 = vmatpush.msra.mxu0 %v60
  %295 = vmatpush.msra.mxu0 %v57
  %296 = vmatpush.msra.mxu0 %v54
  %297 = vmatpush.msra.mxu0 %v51
  %298 = vmatpush.msra.mxu0 %v48
  %299 = vmatpush.msra.mxu0 %v45
  %300 = vmatmul.f32.gmra.mxu0 %v239
  %v301 = vpop.f32.mrf.mxu0
  %v302 = vadd.f32 0.0, %v301
  %303 = vdwg.mxu0
  %304 = vmatpush.msra.mxu0 0.0
  %305 = vmatpush.msra.mxu0 0.0
  %306 = vmatpush.msra.mxu0 0.0
  %307 = vmatpush.msra.mxu0 0.0
  %308 = vmatpush.msra.mxu0 0.0
  %309 = vmatpush.msra.mxu0 0.0
  %310 = vmatpush.msra.mxu0 0.0
  %311 = vmatpush.msra.mxu0 0.0
  %312 = vmatpush.msra.mxu0 0.0
  %313 = vmatpush.msra.mxu0 0.0
  %314 = vmatpush.msra.mxu0 0.0
  %315 = vmatpush.msra.mxu0 0.0
  %316 = vmatpush.msra.mxu0 0.0
  %317 = vmatpush.msra.mxu0 %v114
  %318 = vmatpush.msra.mxu0 %v96
  %319 = vmatpush.msra.mxu0 %v93
  %320 = vmatmul.f32.gmra.mxu0 %v242
  %v321 = vpop.f32.mrf.mxu0
  %v322 = vadd.f32 %v302, %v321
  %323 = vdwg.mxu0
  %324 = vmatpush.msra.mxu0 %v91
  %325 = vmatpush.msra.mxu0 %v88
  %326 = vmatpush.msra.mxu0 %v85
  %327 = vmatpush.msra.mxu0 %v82
  %328 = vmatpush.msra.mxu0 %v79
  %329 = vmatpush.msra.mxu0 %v76
  %330 = vmatpush.msra.mxu0 %v73
  %331 = vmatpush.msra.mxu0 %v70
  %332 = vmatpush.msra.mxu0 %v67
  %333 = vmatpush.msra.mxu0 %v64
  %334 = vmatpush.msra.mxu0 %v61
  %335 = vmatpush.msra.mxu0 %v58
  %336 = vmatpush.msra.mxu0 %v55
  %337 = vmatpush.msra.mxu0 %v52
  %338 = vmatpush.msra.mxu0 %v49
  %339 = vmatpush.msra.mxu0 %v46
  %340 = vmatmul.f32.gmra.mxu0 %v239
  %v341 = vpop.f32.mrf.mxu0
  %v342 = vadd.f32 0.0, %v341
  %343 = vdwg.mxu0
  %344 = vmatpush.msra.mxu0 0.0
  %345 = vmatpush.msra.mxu0 0.0
  %346 = vmatpush.msra.mxu0 0.0
  %347 = vmatpush.msra.mxu0 0.0
  %348 = vmatpush.msra.mxu0 0.0
  %349 = vmatpush.msra.mxu0 0.0
  %350 = vmatpush.msra.mxu0 0.0
  %351 = vmatpush.msra.mxu0 0.0
  %352 = vmatpush.msra.mxu0 0.0
  %353 = vmatpush.msra.mxu0 0.0
  %354 = vmatpush.msra.mxu0 0.0
  %355 = vmatpush.msra.mxu0 0.0
  %356 = vmatpush.msra.mxu0 0.0
  %357 = vmatpush.msra.mxu0 %v117
  %358 = vmatpush.msra.mxu0 %v97
  %359 = vmatpush.msra.mxu0 %v94
  %360 = vmatmul.f32.gmra.mxu0 %v242
  %v361 = vpop.f32.mrf.mxu0
  %v362 = vadd.f32 %v342, %v361
  %363 = vdwg.mxu0
  %364 = vrot.lane.b32.xlu0 %v282, 10
  %v365 = vpop.permute.xlu0 %364
  %366 = vrot.lane.b32.xlu0 %v322, 10
  %v367 = vpop.permute.xlu0 %366
  %368 = vrot.lane.b32.xlu0 %v362, 10
  %v369 = vpop.permute.xlu0 %368
  %v370 = vlaneseq
  %v371 = vand.u32 %v370, 127
  %vm372 = vcmp.lt.s32.totalorder %v371, 10
  %v373 = vsel %vm372, %v367, %v369
  %v374 = vsel %vm372, %v365, %v367
  %v375 = vsel %vm372, %v369, %v365
  %v376 = vld [vmem:[%s1] sm:$0x7]
  %v378 = vperm.slane %v376, 0
  %v379 = vperm.slane %v376, 1
  %v380 = vperm.slane %v376, 2
  %v384 = vmul.f32 %v375, %v378
  %v385 = vmul.f32 %v374, %v379
  %v386 = vmul.f32 %v373, %v380
  %v387 = vld [vmem:[%s6] sm:$0xff]
  %v388 = vld [vmem:[%s6 + $0x8] sm:$0xff]
  %389 = vrot.lane.b32.xlu0 %v282, 9
  %v390 = vpop.permute.xlu0 %389
  %391 = vrot.lane.b32.xlu0 %v322, 9
  %v392 = vpop.permute.xlu0 %391
  %393 = vrot.lane.b32.xlu0 %v362, 9
  %v394 = vpop.permute.xlu0 %393
  %vm395 = vcmp.lt.s32.totalorder %v371, 9
  %v396 = vsel %vm395, %v392, %v394
  %v397 = vsel %vm395, %v390, %v392
  %v398 = vsel %vm395, %v394, %v390
  %s399 = scalar_lea.vmem %s1, 3
  %v400 = vld [vmem:[%s399] sm:$0x7]
  %v402 = vperm.slane %v400, 0
  %v403 = vperm.slane %v400, 1
  %v404 = vperm.slane %v400, 2
  %v408 = vmul.f32 %v398, %v402
  %v409 = vmul.f32 %v397, %v403
  %v410 = vmul.f32 %v396, %v404
  %s411 = scalar_lea.vmem %s6, 16
  %v412 = vld [vmem:[%s411] sm:$0xff]
  %v413 = vld [vmem:[%s411 + $0x8] sm:$0xff]
  %vm414 = vcmask 48128
  %v416 = vsel %vm414, %v412, 0
  %v419 = vsel %vm414, %v413, 0
  %vm421 = vcmask 1045504
  %v423 = vsel %vm421, %v408, 0
  %v426 = vsel %vm421, %v409, 0
  %v429 = vsel %vm421, %v410, 0
  %431 = vmatpush.msra.mxu0 0.0
  %432 = vmatpush.msra.mxu0 0.0
  %433 = vmatpush.msra.mxu0 0.0
  %434 = vmatpush.msra.mxu0 0.0
  %435 = vmatpush.msra.mxu0 0.0
  %436 = vmatpush.msra.mxu0 0.0
  %437 = vmatpush.msra.mxu0 0.0
  %438 = vmatpush.msra.mxu0 0.0
  %439 = vmatpush.msra.mxu0 0.0
  %440 = vmatpush.msra.mxu0 0.0
  %441 = vmatpush.msra.mxu0 0.0
  %442 = vmatpush.msra.mxu0 0.0
  %443 = vmatpush.msra.mxu0 0.0
  %444 = vmatpush.msra.mxu0 0.0
  %445 = vmatpush.msra.mxu0 0.0
  %446 = vmatpush.msra.mxu0 %v423
  %447 = vmatmul.f32.gmra.mxu0 %v416
  %v448 = vpop.f32.mrf.mxu0
  %v449 = vadd.f32 0.0, %v448
  %450 = vmatmul.f32.gmra.mxu0 %v419
  %v451 = vpop.f32.mrf.mxu0
  %v452 = vadd.f32 0.0, %v451
  %453 = vdwg.mxu0
  %454 = vmatpush.msra.mxu0 0.0
  %455 = vmatpush.msra.mxu0 0.0
  %456 = vmatpush.msra.mxu0 0.0
  %457 = vmatpush.msra.mxu0 0.0
  %458 = vmatpush.msra.mxu0 0.0
  %459 = vmatpush.msra.mxu0 0.0
  %460 = vmatpush.msra.mxu0 0.0
  %461 = vmatpush.msra.mxu0 0.0
  %462 = vmatpush.msra.mxu0 0.0
  %463 = vmatpush.msra.mxu0 0.0
  %464 = vmatpush.msra.mxu0 0.0
  %465 = vmatpush.msra.mxu0 0.0
  %466 = vmatpush.msra.mxu0 0.0
  %467 = vmatpush.msra.mxu0 0.0
  %468 = vmatpush.msra.mxu0 0.0
  %469 = vmatpush.msra.mxu0 %v426
  %470 = vmatmul.f32.gmra.mxu0 %v416
  %v471 = vpop.f32.mrf.mxu0
  %v472 = vadd.f32 0.0, %v471
  %473 = vmatmul.f32.gmra.mxu0 %v419
  %v474 = vpop.f32.mrf.mxu0
  %v475 = vadd.f32 0.0, %v474
  %476 = vdwg.mxu0
  %477 = vmatpush.msra.mxu0 0.0
  %478 = vmatpush.msra.mxu0 0.0
  %479 = vmatpush.msra.mxu0 0.0
  %480 = vmatpush.msra.mxu0 0.0
  %481 = vmatpush.msra.mxu0 0.0
  %482 = vmatpush.msra.mxu0 0.0
  %483 = vmatpush.msra.mxu0 0.0
  %484 = vmatpush.msra.mxu0 0.0
  %485 = vmatpush.msra.mxu0 0.0
  %486 = vmatpush.msra.mxu0 0.0
  %487 = vmatpush.msra.mxu0 0.0
  %488 = vmatpush.msra.mxu0 0.0
  %489 = vmatpush.msra.mxu0 0.0
  %490 = vmatpush.msra.mxu0 0.0
  %491 = vmatpush.msra.mxu0 0.0
  %492 = vmatpush.msra.mxu0 %v429
  %493 = vmatmul.f32.gmra.mxu0 %v416
  %v494 = vpop.f32.mrf.mxu0
  %v495 = vadd.f32 0.0, %v494
  %496 = vmatmul.f32.gmra.mxu0 %v419
  %v497 = vpop.f32.mrf.mxu0
  %v498 = vadd.f32 0.0, %v497
  %499 = vdwg.mxu0
  %v501 = vsel %vm414, %v387, 0
  %v504 = vsel %vm414, %v388, 0
  %v507 = vsel %vm421, %v384, 0
  %v510 = vsel %vm421, %v385, 0
  %v513 = vsel %vm421, %v386, 0
  %515 = vmatpush.msra.mxu0 0.0
  %516 = vmatpush.msra.mxu0 0.0
  %517 = vmatpush.msra.mxu0 0.0
  %518 = vmatpush.msra.mxu0 0.0
  %519 = vmatpush.msra.mxu0 0.0
  %520 = vmatpush.msra.mxu0 0.0
  %521 = vmatpush.msra.mxu0 0.0
  %522 = vmatpush.msra.mxu0 0.0
  %523 = vmatpush.msra.mxu0 0.0
  %524 = vmatpush.msra.mxu0 0.0
  %525 = vmatpush.msra.mxu0 0.0
  %526 = vmatpush.msra.mxu0 0.0
  %527 = vmatpush.msra.mxu0 0.0
  %528 = vmatpush.msra.mxu0 0.0
  %529 = vmatpush.msra.mxu0 0.0
  %530 = vmatpush.msra.mxu0 %v507
  %531 = vmatmul.f32.gmra.mxu0 %v501
  %v532 = vpop.f32.mrf.mxu0
  %v533 = vadd.f32 %v449, %v532
  %534 = vmatmul.f32.gmra.mxu0 %v504
  %v535 = vpop.f32.mrf.mxu0
  %v536 = vadd.f32 %v452, %v535
  %537 = vdwg.mxu0
  %538 = vmatpush.msra.mxu0 0.0
  %539 = vmatpush.msra.mxu0 0.0
  %540 = vmatpush.msra.mxu0 0.0
  %541 = vmatpush.msra.mxu0 0.0
  %542 = vmatpush.msra.mxu0 0.0
  %543 = vmatpush.msra.mxu0 0.0
  %544 = vmatpush.msra.mxu0 0.0
  %545 = vmatpush.msra.mxu0 0.0
  %546 = vmatpush.msra.mxu0 0.0
  %547 = vmatpush.msra.mxu0 0.0
  %548 = vmatpush.msra.mxu0 0.0
  %549 = vmatpush.msra.mxu0 0.0
  %550 = vmatpush.msra.mxu0 0.0
  %551 = vmatpush.msra.mxu0 0.0
  %552 = vmatpush.msra.mxu0 0.0
  %553 = vmatpush.msra.mxu0 %v510
  %554 = vmatmul.f32.gmra.mxu0 %v501
  %v555 = vpop.f32.mrf.mxu0
  %v556 = vadd.f32 %v472, %v555
  %557 = vmatmul.f32.gmra.mxu0 %v504
  %v558 = vpop.f32.mrf.mxu0
  %v559 = vadd.f32 %v475, %v558
  %560 = vdwg.mxu0
  %561 = vmatpush.msra.mxu0 0.0
  %562 = vmatpush.msra.mxu0 0.0
  %563 = vmatpush.msra.mxu0 0.0
  %564 = vmatpush.msra.mxu0 0.0
  %565 = vmatpush.msra.mxu0 0.0
  %566 = vmatpush.msra.mxu0 0.0
  %567 = vmatpush.msra.mxu0 0.0
  %568 = vmatpush.msra.mxu0 0.0
  %569 = vmatpush.msra.mxu0 0.0
  %570 = vmatpush.msra.mxu0 0.0
  %571 = vmatpush.msra.mxu0 0.0
  %572 = vmatpush.msra.mxu0 0.0
  %573 = vmatpush.msra.mxu0 0.0
  %574 = vmatpush.msra.mxu0 0.0
  %575 = vmatpush.msra.mxu0 0.0
  %576 = vmatpush.msra.mxu0 %v513
  %577 = vmatmul.f32.gmra.mxu0 %v501
  %v578 = vpop.f32.mrf.mxu0
  %v579 = vadd.f32 %v495, %v578
  %580 = vmatmul.f32.gmra.mxu0 %v504
  %v581 = vpop.f32.mrf.mxu0
  %v582 = vadd.f32 %v498, %v581
  %583 = vdwg.mxu0
  %584 = vrot.lane.b32.xlu0 %v282, 8
  %v585 = vpop.permute.xlu0 %584
  %586 = vrot.lane.b32.xlu0 %v322, 8
  %v587 = vpop.permute.xlu0 %586
  %588 = vrot.lane.b32.xlu0 %v362, 8
  %v589 = vpop.permute.xlu0 %588
  %vm590 = vcmp.lt.s32.totalorder %v371, 8
  %v591 = vsel %vm590, %v587, %v589
  %v592 = vsel %vm590, %v585, %v587
  %v593 = vsel %vm590, %v589, %v585
  %s594 = scalar_lea.vmem %s1, 6
  %v595 = vld [vmem:[%s594] sm:$0x7]
  %v597 = vperm.slane %v595, 0
  %v598 = vperm.slane %v595, 1
  %v599 = vperm.slane %v595, 2
  %v603 = vmul.f32 %v593, %v597
  %v604 = vmul.f32 %v592, %v598
  %v605 = vmul.f32 %v591, %v599
  %s606 = scalar_lea.vmem %s6, 32
  %v607 = vld [vmem:[%s606] sm:$0xff]
  %v608 = vld [vmem:[%s606 + $0x8] sm:$0xff]
  %v610 = vsel %vm414, %v607, 0
  %v613 = vsel %vm414, %v608, 0
  %v616 = vsel %vm421, %v603, 0
  %v619 = vsel %vm421, %v604, 0
  %v622 = vsel %vm421, %v605, 0
  %624 = vmatpush.msra.mxu0 0.0
  %625 = vmatpush.msra.mxu0 0.0
  %626 = vmatpush.msra.mxu0 0.0
  %627 = vmatpush.msra.mxu0 0.0
  %628 = vmatpush.msra.mxu0 0.0
  %629 = vmatpush.msra.mxu0 0.0
  %630 = vmatpush.msra.mxu0 0.0
  %631 = vmatpush.msra.mxu0 0.0
  %632 = vmatpush.msra.mxu0 0.0
  %633 = vmatpush.msra.mxu0 0.0
  %634 = vmatpush.msra.mxu0 0.0
  %635 = vmatpush.msra.mxu0 0.0
  %636 = vmatpush.msra.mxu0 0.0
  %637 = vmatpush.msra.mxu0 0.0
  %638 = vmatpush.msra.mxu0 0.0
  %639 = vmatpush.msra.mxu0 %v616
  %640 = vmatmul.f32.gmra.mxu0 %v610
  %v641 = vpop.f32.mrf.mxu0
  %v642 = vadd.f32 0.0, %v641
  %643 = vmatmul.f32.gmra.mxu0 %v613
  %v644 = vpop.f32.mrf.mxu0
  %v645 = vadd.f32 0.0, %v644
  %646 = vdwg.mxu0
  %647 = vmatpush.msra.mxu0 0.0
  %648 = vmatpush.msra.mxu0 0.0
  %649 = vmatpush.msra.mxu0 0.0
  %650 = vmatpush.msra.mxu0 0.0
  %651 = vmatpush.msra.mxu0 0.0
  %652 = vmatpush.msra.mxu0 0.0
  %653 = vmatpush.msra.mxu0 0.0
  %654 = vmatpush.msra.mxu0 0.0
  %655 = vmatpush.msra.mxu0 0.0
  %656 = vmatpush.msra.mxu0 0.0
  %657 = vmatpush.msra.mxu0 0.0
  %658 = vmatpush.msra.mxu0 0.0
  %659 = vmatpush.msra.mxu0 0.0
  %660 = vmatpush.msra.mxu0 0.0
  %661 = vmatpush.msra.mxu0 0.0
  %662 = vmatpush.msra.mxu0 %v619
  %663 = vmatmul.f32.gmra.mxu0 %v610
  %v664 = vpop.f32.mrf.mxu0
  %v665 = vadd.f32 0.0, %v664
  %666 = vmatmul.f32.gmra.mxu0 %v613
  %v667 = vpop.f32.mrf.mxu0
  %v668 = vadd.f32 0.0, %v667
  %669 = vdwg.mxu0
  %670 = vmatpush.msra.mxu0 0.0
  %671 = vmatpush.msra.mxu0 0.0
  %672 = vmatpush.msra.mxu0 0.0
  %673 = vmatpush.msra.mxu0 0.0
  %674 = vmatpush.msra.mxu0 0.0
  %675 = vmatpush.msra.mxu0 0.0
  %676 = vmatpush.msra.mxu0 0.0
  %677 = vmatpush.msra.mxu0 0.0
  %678 = vmatpush.msra.mxu0 0.0
  %679 = vmatpush.msra.mxu0 0.0
  %680 = vmatpush.msra.mxu0 0.0
  %681 = vmatpush.msra.mxu0 0.0
  %682 = vmatpush.msra.mxu0 0.0
  %683 = vmatpush.msra.mxu0 0.0
  %684 = vmatpush.msra.mxu0 0.0
  %685 = vmatpush.msra.mxu0 %v622
  %686 = vmatmul.f32.gmra.mxu0 %v610
  %v687 = vpop.f32.mrf.mxu0
  %v688 = vadd.f32 0.0, %v687
  %689 = vmatmul.f32.gmra.mxu0 %v613
  %v690 = vpop.f32.mrf.mxu0
  %v691 = vadd.f32 0.0, %v690
  %692 = vdwg.mxu0
  %v693 = vadd.f32 %v533, %v642
  %v694 = vadd.f32 %v556, %v665
  %v695 = vadd.f32 %v579, %v688
  %v696 = vadd.f32 %v536, %v645
  %v697 = vadd.f32 %v559, %v668
  %v698 = vadd.f32 %v582, %v691
  %699 = vrot.lane.b32.xlu0 %v282, 1
  %v700 = vpop.permute.xlu0 %699
  %701 = vrot.lane.b32.xlu0 %v322, 1
  %v702 = vpop.permute.xlu0 %701
  %703 = vrot.lane.b32.xlu0 %v362, 1
  %v704 = vpop.permute.xlu0 %703
  %vm705 = vcmp.lt.s32.totalorder %v371, 1
  %v706 = vsel %vm705, %v702, %v704
  %v707 = vsel %vm705, %v700, %v702
  %v708 = vsel %vm705, %v704, %v700
  %s709 = scalar_lea.vmem %s1, 9
  %v710 = vld [vmem:[%s709] sm:$0x7]
  %v712 = vperm.slane %v710, 0
  %v713 = vperm.slane %v710, 1
  %v714 = vperm.slane %v710, 2
  %v718 = vmul.f32 %v708, %v712
  %v719 = vmul.f32 %v707, %v713
  %v720 = vmul.f32 %v706, %v714
  %s721 = scalar_lea.vmem %s6, 48
  %v722 = vld [vmem:[%s721] sm:$0xff]
  %v723 = vld [vmem:[%s721 + $0x8] sm:$0xff]
  %v725 = vsel %vm414, %v722, 0
  %v728 = vsel %vm414, %v723, 0
  %v731 = vsel %vm421, %v718, 0
  %v734 = vsel %vm421, %v719, 0
  %v737 = vsel %vm421, %v720, 0
  %739 = vmatpush.msra.mxu0 0.0
  %740 = vmatpush.msra.mxu0 0.0
  %741 = vmatpush.msra.mxu0 0.0
  %742 = vmatpush.msra.mxu0 0.0
  %743 = vmatpush.msra.mxu0 0.0
  %744 = vmatpush.msra.mxu0 0.0
  %745 = vmatpush.msra.mxu0 0.0
  %746 = vmatpush.msra.mxu0 0.0
  %747 = vmatpush.msra.mxu0 0.0
  %748 = vmatpush.msra.mxu0 0.0
  %749 = vmatpush.msra.mxu0 0.0
  %750 = vmatpush.msra.mxu0 0.0
  %751 = vmatpush.msra.mxu0 0.0
  %752 = vmatpush.msra.mxu0 0.0
  %753 = vmatpush.msra.mxu0 0.0
  %754 = vmatpush.msra.mxu0 %v731
  %755 = vmatmul.f32.gmra.mxu0 %v725
  %v756 = vpop.f32.mrf.mxu0
  %v757 = vadd.f32 0.0, %v756
  %758 = vmatmul.f32.gmra.mxu0 %v728
  %v759 = vpop.f32.mrf.mxu0
  %v760 = vadd.f32 0.0, %v759
  %761 = vdwg.mxu0
  %762 = vmatpush.msra.mxu0 0.0
  %763 = vmatpush.msra.mxu0 0.0
  %764 = vmatpush.msra.mxu0 0.0
  %765 = vmatpush.msra.mxu0 0.0
  %766 = vmatpush.msra.mxu0 0.0
  %767 = vmatpush.msra.mxu0 0.0
  %768 = vmatpush.msra.mxu0 0.0
  %769 = vmatpush.msra.mxu0 0.0
  %770 = vmatpush.msra.mxu0 0.0
  %771 = vmatpush.msra.mxu0 0.0
  %772 = vmatpush.msra.mxu0 0.0
  %773 = vmatpush.msra.mxu0 0.0
  %774 = vmatpush.msra.mxu0 0.0
  %775 = vmatpush.msra.mxu0 0.0
  %776 = vmatpush.msra.mxu0 0.0
  %777 = vmatpush.msra.mxu0 %v734
  %778 = vmatmul.f32.gmra.mxu0 %v725
  %v779 = vpop.f32.mrf.mxu0
  %v780 = vadd.f32 0.0, %v779
  %781 = vmatmul.f32.gmra.mxu0 %v728
  %v782 = vpop.f32.mrf.mxu0
  %v783 = vadd.f32 0.0, %v782
  %784 = vdwg.mxu0
  %785 = vmatpush.msra.mxu0 0.0
  %786 = vmatpush.msra.mxu0 0.0
  %787 = vmatpush.msra.mxu0 0.0
  %788 = vmatpush.msra.mxu0 0.0
  %789 = vmatpush.msra.mxu0 0.0
  %790 = vmatpush.msra.mxu0 0.0
  %791 = vmatpush.msra.mxu0 0.0
  %792 = vmatpush.msra.mxu0 0.0
  %793 = vmatpush.msra.mxu0 0.0
  %794 = vmatpush.msra.mxu0 0.0
  %795 = vmatpush.msra.mxu0 0.0
  %796 = vmatpush.msra.mxu0 0.0
  %797 = vmatpush.msra.mxu0 0.0
  %798 = vmatpush.msra.mxu0 0.0
  %799 = vmatpush.msra.mxu0 0.0
  %800 = vmatpush.msra.mxu0 %v737
  %801 = vmatmul.f32.gmra.mxu0 %v725
  %v802 = vpop.f32.mrf.mxu0
  %v803 = vadd.f32 0.0, %v802
  %804 = vmatmul.f32.gmra.mxu0 %v728
  %v805 = vpop.f32.mrf.mxu0
  %v806 = vadd.f32 0.0, %v805
  %807 = vdwg.mxu0
  %v808 = vadd.f32 %v693, %v757
  %v809 = vadd.f32 %v694, %v780
  %v810 = vadd.f32 %v695, %v803
  %v811 = vadd.f32 %v696, %v760
  %v812 = vadd.f32 %v697, %v783
  %v813 = vadd.f32 %v698, %v806
  %s814 = scalar_lea.vmem %s1, 12
  %v815 = vld [vmem:[%s814] sm:$0x7]
  %v817 = vperm.slane %v815, 0
  %v818 = vperm.slane %v815, 1
  %v819 = vperm.slane %v815, 2
  %v823 = vmul.f32 %v282, %v817
  %v824 = vmul.f32 %v322, %v818
  %v825 = vmul.f32 %v362, %v819
  %s826 = scalar_lea.vmem %s6, 64
  %v827 = vld [vmem:[%s826] sm:$0xff]
  %v828 = vld [vmem:[%s826 + $0x8] sm:$0xff]
  %v830 = vsel %vm414, %v827, 0
  %v833 = vsel %vm414, %v828, 0
  %v836 = vsel %vm421, %v823, 0
  %v839 = vsel %vm421, %v824, 0
  %v842 = vsel %vm421, %v825, 0
  %844 = vmatpush.msra.mxu0 0.0
  %845 = vmatpush.msra.mxu0 0.0
  %846 = vmatpush.msra.mxu0 0.0
  %847 = vmatpush.msra.mxu0 0.0
  %848 = vmatpush.msra.mxu0 0.0
  %849 = vmatpush.msra.mxu0 0.0
  %850 = vmatpush.msra.mxu0 0.0
  %851 = vmatpush.msra.mxu0 0.0
  %852 = vmatpush.msra.mxu0 0.0
  %853 = vmatpush.msra.mxu0 0.0
  %854 = vmatpush.msra.mxu0 0.0
  %855 = vmatpush.msra.mxu0 0.0
  %856 = vmatpush.msra.mxu0 0.0
  %857 = vmatpush.msra.mxu0 0.0
  %858 = vmatpush.msra.mxu0 0.0
  %859 = vmatpush.msra.mxu0 %v836
  %860 = vmatmul.f32.gmra.mxu0 %v830
  %v861 = vpop.f32.mrf.mxu0
  %v862 = vadd.f32 0.0, %v861
  %863 = vmatmul.f32.gmra.mxu0 %v833
  %v864 = vpop.f32.mrf.mxu0
  %v865 = vadd.f32 0.0, %v864
  %866 = vdwg.mxu0
  %867 = vmatpush.msra.mxu0 0.0
  %868 = vmatpush.msra.mxu0 0.0
  %869 = vmatpush.msra.mxu0 0.0
  %870 = vmatpush.msra.mxu0 0.0
  %871 = vmatpush.msra.mxu0 0.0
  %872 = vmatpush.msra.mxu0 0.0
  %873 = vmatpush.msra.mxu0 0.0
  %874 = vmatpush.msra.mxu0 0.0
  %875 = vmatpush.msra.mxu0 0.0
  %876 = vmatpush.msra.mxu0 0.0
  %877 = vmatpush.msra.mxu0 0.0
  %878 = vmatpush.msra.mxu0 0.0
  %879 = vmatpush.msra.mxu0 0.0
  %880 = vmatpush.msra.mxu0 0.0
  %881 = vmatpush.msra.mxu0 0.0
  %882 = vmatpush.msra.mxu0 %v839
  %883 = vmatmul.f32.gmra.mxu0 %v830
  %v884 = vpop.f32.mrf.mxu0
  %v885 = vadd.f32 0.0, %v884
  %886 = vmatmul.f32.gmra.mxu0 %v833
  %v887 = vpop.f32.mrf.mxu0
  %v888 = vadd.f32 0.0, %v887
  %889 = vdwg.mxu0
  %890 = vmatpush.msra.mxu0 0.0
  %891 = vmatpush.msra.mxu0 0.0
  %892 = vmatpush.msra.mxu0 0.0
  %893 = vmatpush.msra.mxu0 0.0
  %894 = vmatpush.msra.mxu0 0.0
  %895 = vmatpush.msra.mxu0 0.0
  %896 = vmatpush.msra.mxu0 0.0
  %897 = vmatpush.msra.mxu0 0.0
  %898 = vmatpush.msra.mxu0 0.0
  %899 = vmatpush.msra.mxu0 0.0
  %900 = vmatpush.msra.mxu0 0.0
  %901 = vmatpush.msra.mxu0 0.0
  %902 = vmatpush.msra.mxu0 0.0
  %903 = vmatpush.msra.mxu0 0.0
  %904 = vmatpush.msra.mxu0 0.0
  %905 = vmatpush.msra.mxu0 %v842
  %906 = vmatmul.f32.gmra.mxu0 %v830
  %v907 = vpop.f32.mrf.mxu0
  %v908 = vadd.f32 0.0, %v907
  %909 = vmatmul.f32.gmra.mxu0 %v833
  %v910 = vpop.f32.mrf.mxu0
  %v911 = vadd.f32 0.0, %v910
  %912 = vdwg.mxu0
  %v913 = vadd.f32 %v808, %v862
  %v914 = vadd.f32 %v809, %v885
  %v915 = vadd.f32 %v810, %v908
  %v916 = vadd.f32 %v811, %v865
  %v917 = vadd.f32 %v812, %v888
  %v918 = vadd.f32 %v813, %v911
  %919 = vrot.lane.b32.xlu0 %v282, 127
  %v920 = vpop.permute.xlu0 %919
  %921 = vrot.lane.b32.xlu0 %v322, 127
  %v922 = vpop.permute.xlu0 %921
  %923 = vrot.lane.b32.xlu0 %v362, 127
  %v924 = vpop.permute.xlu0 %923
  %vm925 = vcmp.lt.s32.totalorder %v371, 127
  %v926 = vsel %vm925, %v922, %v924
  %v927 = vsel %vm925, %v920, %v922
  %v928 = vsel %vm925, %v924, %v920
  %s929 = scalar_lea.vmem %s1, 15
  %v930 = vld [vmem:[%s929] sm:$0x7]
  %v932 = vperm.slane %v930, 0
  %v933 = vperm.slane %v930, 1
  %v934 = vperm.slane %v930, 2
  %v938 = vmul.f32 %v927, %v932
  %v939 = vmul.f32 %v926, %v933
  %v940 = vmul.f32 %v928, %v934
  %s941 = scalar_lea.vmem %s6, 80
  %v942 = vld [vmem:[%s941] sm:$0xff]
  %v943 = vld [vmem:[%s941 + $0x8] sm:$0xff]
  %v945 = vsel %vm414, %v942, 0
  %v948 = vsel %vm414, %v943, 0
  %v951 = vsel %vm421, %v938, 0
  %v954 = vsel %vm421, %v939, 0
  %v957 = vsel %vm421, %v940, 0
  %959 = vmatpush.msra.mxu0 0.0
  %960 = vmatpush.msra.mxu0 0.0
  %961 = vmatpush.msra.mxu0 0.0
  %962 = vmatpush.msra.mxu0 0.0
  %963 = vmatpush.msra.mxu0 0.0
  %964 = vmatpush.msra.mxu0 0.0
  %965 = vmatpush.msra.mxu0 0.0
  %966 = vmatpush.msra.mxu0 0.0
  %967 = vmatpush.msra.mxu0 0.0
  %968 = vmatpush.msra.mxu0 0.0
  %969 = vmatpush.msra.mxu0 0.0
  %970 = vmatpush.msra.mxu0 0.0
  %971 = vmatpush.msra.mxu0 0.0
  %972 = vmatpush.msra.mxu0 0.0
  %973 = vmatpush.msra.mxu0 0.0
  %974 = vmatpush.msra.mxu0 %v951
  %975 = vmatmul.f32.gmra.mxu0 %v945
  %v976 = vpop.f32.mrf.mxu0
  %v977 = vadd.f32 0.0, %v976
  %978 = vmatmul.f32.gmra.mxu0 %v948
  %v979 = vpop.f32.mrf.mxu0
  %v980 = vadd.f32 0.0, %v979
  %981 = vdwg.mxu0
  %982 = vmatpush.msra.mxu0 0.0
  %983 = vmatpush.msra.mxu0 0.0
  %984 = vmatpush.msra.mxu0 0.0
  %985 = vmatpush.msra.mxu0 0.0
  %986 = vmatpush.msra.mxu0 0.0
  %987 = vmatpush.msra.mxu0 0.0
  %988 = vmatpush.msra.mxu0 0.0
  %989 = vmatpush.msra.mxu0 0.0
  %990 = vmatpush.msra.mxu0 0.0
  %991 = vmatpush.msra.mxu0 0.0
  %992 = vmatpush.msra.mxu0 0.0
  %993 = vmatpush.msra.mxu0 0.0
  %994 = vmatpush.msra.mxu0 0.0
  %995 = vmatpush.msra.mxu0 0.0
  %996 = vmatpush.msra.mxu0 0.0
  %997 = vmatpush.msra.mxu0 %v954
  %998 = vmatmul.f32.gmra.mxu0 %v945
  %v999 = vpop.f32.mrf.mxu0
  %v1000 = vadd.f32 0.0, %v999
  %1001 = vmatmul.f32.gmra.mxu0 %v948
  %v1002 = vpop.f32.mrf.mxu0
  %v1003 = vadd.f32 0.0, %v1002
  %1004 = vdwg.mxu0
  %1005 = vmatpush.msra.mxu0 0.0
  %1006 = vmatpush.msra.mxu0 0.0
  %1007 = vmatpush.msra.mxu0 0.0
  %1008 = vmatpush.msra.mxu0 0.0
  %1009 = vmatpush.msra.mxu0 0.0
  %1010 = vmatpush.msra.mxu0 0.0
  %1011 = vmatpush.msra.mxu0 0.0
  %1012 = vmatpush.msra.mxu0 0.0
  %1013 = vmatpush.msra.mxu0 0.0
  %1014 = vmatpush.msra.mxu0 0.0
  %1015 = vmatpush.msra.mxu0 0.0
  %1016 = vmatpush.msra.mxu0 0.0
  %1017 = vmatpush.msra.mxu0 0.0
  %1018 = vmatpush.msra.mxu0 0.0
  %1019 = vmatpush.msra.mxu0 0.0
  %1020 = vmatpush.msra.mxu0 %v957
  %1021 = vmatmul.f32.gmra.mxu0 %v945
  %v1022 = vpop.f32.mrf.mxu0
  %v1023 = vadd.f32 0.0, %v1022
  %1024 = vmatmul.f32.gmra.mxu0 %v948
  %v1025 = vpop.f32.mrf.mxu0
  %v1026 = vadd.f32 0.0, %v1025
  %1027 = vdwg.mxu0
  %v1028 = vadd.f32 %v913, %v977
  %v1029 = vadd.f32 %v914, %v1000
  %v1030 = vadd.f32 %v915, %v1023
  %v1031 = vadd.f32 %v916, %v980
  %v1032 = vadd.f32 %v917, %v1003
  %v1033 = vadd.f32 %v918, %v1026
  %1034 = vrot.lane.b32.xlu0 %v282, 120
  %v1035 = vpop.permute.xlu0 %1034
  %1036 = vrot.lane.b32.xlu0 %v322, 120
  %v1037 = vpop.permute.xlu0 %1036
  %1038 = vrot.lane.b32.xlu0 %v362, 120
  %v1039 = vpop.permute.xlu0 %1038
  %vm1040 = vcmp.lt.s32.totalorder %v371, 120
  %v1041 = vsel %vm1040, %v1037, %v1039
  %v1042 = vsel %vm1040, %v1035, %v1037
  %v1043 = vsel %vm1040, %v1039, %v1035
  %s1044 = scalar_lea.vmem %s1, 18
  %v1045 = vld [vmem:[%s1044] sm:$0x7]
  %v1047 = vperm.slane %v1045, 0
  %v1048 = vperm.slane %v1045, 1
  %v1049 = vperm.slane %v1045, 2
  %v1053 = vmul.f32 %v1042, %v1047
  %v1054 = vmul.f32 %v1041, %v1048
  %v1055 = vmul.f32 %v1043, %v1049
  %s1056 = scalar_lea.vmem %s6, 96
  %v1057 = vld [vmem:[%s1056] sm:$0xff]
  %v1058 = vld [vmem:[%s1056 + $0x8] sm:$0xff]
  %v1060 = vsel %vm414, %v1057, 0
  %v1063 = vsel %vm414, %v1058, 0
  %v1066 = vsel %vm421, %v1053, 0
  %v1069 = vsel %vm421, %v1054, 0
  %v1072 = vsel %vm421, %v1055, 0
  %1074 = vmatpush.msra.mxu0 0.0
  %1075 = vmatpush.msra.mxu0 0.0
  %1076 = vmatpush.msra.mxu0 0.0
  %1077 = vmatpush.msra.mxu0 0.0
  %1078 = vmatpush.msra.mxu0 0.0
  %1079 = vmatpush.msra.mxu0 0.0
  %1080 = vmatpush.msra.mxu0 0.0
  %1081 = vmatpush.msra.mxu0 0.0
  %1082 = vmatpush.msra.mxu0 0.0
  %1083 = vmatpush.msra.mxu0 0.0
  %1084 = vmatpush.msra.mxu0 0.0
  %1085 = vmatpush.msra.mxu0 0.0
  %1086 = vmatpush.msra.mxu0 0.0
  %1087 = vmatpush.msra.mxu0 0.0
  %1088 = vmatpush.msra.mxu0 0.0
  %1089 = vmatpush.msra.mxu0 %v1066
  %1090 = vmatmul.f32.gmra.mxu0 %v1060
  %v1091 = vpop.f32.mrf.mxu0
  %v1092 = vadd.f32 0.0, %v1091
  %1093 = vmatmul.f32.gmra.mxu0 %v1063
  %v1094 = vpop.f32.mrf.mxu0
  %v1095 = vadd.f32 0.0, %v1094
  %1096 = vdwg.mxu0
  %1097 = vmatpush.msra.mxu0 0.0
  %1098 = vmatpush.msra.mxu0 0.0
  %1099 = vmatpush.msra.mxu0 0.0
  %1100 = vmatpush.msra.mxu0 0.0
  %1101 = vmatpush.msra.mxu0 0.0
  %1102 = vmatpush.msra.mxu0 0.0
  %1103 = vmatpush.msra.mxu0 0.0
  %1104 = vmatpush.msra.mxu0 0.0
  %1105 = vmatpush.msra.mxu0 0.0
  %1106 = vmatpush.msra.mxu0 0.0
  %1107 = vmatpush.msra.mxu0 0.0
  %1108 = vmatpush.msra.mxu0 0.0
  %1109 = vmatpush.msra.mxu0 0.0
  %1110 = vmatpush.msra.mxu0 0.0
  %1111 = vmatpush.msra.mxu0 0.0
  %1112 = vmatpush.msra.mxu0 %v1069
  %1113 = vmatmul.f32.gmra.mxu0 %v1060
  %v1114 = vpop.f32.mrf.mxu0
  %v1115 = vadd.f32 0.0, %v1114
  %1116 = vmatmul.f32.gmra.mxu0 %v1063
  %v1117 = vpop.f32.mrf.mxu0
  %v1118 = vadd.f32 0.0, %v1117
  %1119 = vdwg.mxu0
  %1120 = vmatpush.msra.mxu0 0.0
  %1121 = vmatpush.msra.mxu0 0.0
  %1122 = vmatpush.msra.mxu0 0.0
  %1123 = vmatpush.msra.mxu0 0.0
  %1124 = vmatpush.msra.mxu0 0.0
  %1125 = vmatpush.msra.mxu0 0.0
  %1126 = vmatpush.msra.mxu0 0.0
  %1127 = vmatpush.msra.mxu0 0.0
  %1128 = vmatpush.msra.mxu0 0.0
  %1129 = vmatpush.msra.mxu0 0.0
  %1130 = vmatpush.msra.mxu0 0.0
  %1131 = vmatpush.msra.mxu0 0.0
  %1132 = vmatpush.msra.mxu0 0.0
  %1133 = vmatpush.msra.mxu0 0.0
  %1134 = vmatpush.msra.mxu0 0.0
  %1135 = vmatpush.msra.mxu0 %v1072
  %1136 = vmatmul.f32.gmra.mxu0 %v1060
  %v1137 = vpop.f32.mrf.mxu0
  %v1138 = vadd.f32 0.0, %v1137
  %1139 = vmatmul.f32.gmra.mxu0 %v1063
  %v1140 = vpop.f32.mrf.mxu0
  %v1141 = vadd.f32 0.0, %v1140
  %1142 = vdwg.mxu0
  %v1143 = vadd.f32 %v1028, %v1092
  %v1144 = vadd.f32 %v1029, %v1115
  %v1145 = vadd.f32 %v1030, %v1138
  %v1146 = vadd.f32 %v1031, %v1095
  %v1147 = vadd.f32 %v1032, %v1118
  %v1148 = vadd.f32 %v1033, %v1141
  %1149 = vrot.lane.b32.xlu0 %v282, 119
  %v1150 = vpop.permute.xlu0 %1149
  %1151 = vrot.lane.b32.xlu0 %v322, 119
  %v1152 = vpop.permute.xlu0 %1151
  %1153 = vrot.lane.b32.xlu0 %v362, 119
  %v1154 = vpop.permute.xlu0 %1153
  %vm1155 = vcmp.lt.s32.totalorder %v371, 119
  %v1156 = vsel %vm1155, %v1152, %v1154
  %v1157 = vsel %vm1155, %v1150, %v1152
  %v1158 = vsel %vm1155, %v1154, %v1150
  %s1159 = scalar_lea.vmem %s1, 21
  %v1160 = vld [vmem:[%s1159] sm:$0x7]
  %v1162 = vperm.slane %v1160, 0
  %v1163 = vperm.slane %v1160, 1
  %v1164 = vperm.slane %v1160, 2
  %v1168 = vmul.f32 %v1157, %v1162
  %v1169 = vmul.f32 %v1156, %v1163
  %v1170 = vmul.f32 %v1158, %v1164
  %s1171 = scalar_lea.vmem %s6, 112
  %v1172 = vld [vmem:[%s1171] sm:$0xff]
  %v1173 = vld [vmem:[%s1171 + $0x8] sm:$0xff]
  %v1175 = vsel %vm414, %v1172, 0
  %v1178 = vsel %vm414, %v1173, 0
  %v1181 = vsel %vm421, %v1168, 0
  %v1184 = vsel %vm421, %v1169, 0
  %v1187 = vsel %vm421, %v1170, 0
  %1189 = vmatpush.msra.mxu0 0.0
  %1190 = vmatpush.msra.mxu0 0.0
  %1191 = vmatpush.msra.mxu0 0.0
  %1192 = vmatpush.msra.mxu0 0.0
  %1193 = vmatpush.msra.mxu0 0.0
  %1194 = vmatpush.msra.mxu0 0.0
  %1195 = vmatpush.msra.mxu0 0.0
  %1196 = vmatpush.msra.mxu0 0.0
  %1197 = vmatpush.msra.mxu0 0.0
  %1198 = vmatpush.msra.mxu0 0.0
  %1199 = vmatpush.msra.mxu0 0.0
  %1200 = vmatpush.msra.mxu0 0.0
  %1201 = vmatpush.msra.mxu0 0.0
  %1202 = vmatpush.msra.mxu0 0.0
  %1203 = vmatpush.msra.mxu0 0.0
  %1204 = vmatpush.msra.mxu0 %v1181
  %1205 = vmatmul.f32.gmra.mxu0 %v1175
  %v1206 = vpop.f32.mrf.mxu0
  %v1207 = vadd.f32 0.0, %v1206
  %1208 = vmatmul.f32.gmra.mxu0 %v1178
  %v1209 = vpop.f32.mrf.mxu0
  %v1210 = vadd.f32 0.0, %v1209
  %1211 = vdwg.mxu0
  %1212 = vmatpush.msra.mxu0 0.0
  %1213 = vmatpush.msra.mxu0 0.0
  %1214 = vmatpush.msra.mxu0 0.0
  %1215 = vmatpush.msra.mxu0 0.0
  %1216 = vmatpush.msra.mxu0 0.0
  %1217 = vmatpush.msra.mxu0 0.0
  %1218 = vmatpush.msra.mxu0 0.0
  %1219 = vmatpush.msra.mxu0 0.0
  %1220 = vmatpush.msra.mxu0 0.0
  %1221 = vmatpush.msra.mxu0 0.0
  %1222 = vmatpush.msra.mxu0 0.0
  %1223 = vmatpush.msra.mxu0 0.0
  %1224 = vmatpush.msra.mxu0 0.0
  %1225 = vmatpush.msra.mxu0 0.0
  %1226 = vmatpush.msra.mxu0 0.0
  %1227 = vmatpush.msra.mxu0 %v1184
  %1228 = vmatmul.f32.gmra.mxu0 %v1175
  %v1229 = vpop.f32.mrf.mxu0
  %v1230 = vadd.f32 0.0, %v1229
  %1231 = vmatmul.f32.gmra.mxu0 %v1178
  %v1232 = vpop.f32.mrf.mxu0
  %v1233 = vadd.f32 0.0, %v1232
  %1234 = vdwg.mxu0
  %1235 = vmatpush.msra.mxu0 0.0
  %1236 = vmatpush.msra.mxu0 0.0
  %1237 = vmatpush.msra.mxu0 0.0
  %1238 = vmatpush.msra.mxu0 0.0
  %1239 = vmatpush.msra.mxu0 0.0
  %1240 = vmatpush.msra.mxu0 0.0
  %1241 = vmatpush.msra.mxu0 0.0
  %1242 = vmatpush.msra.mxu0 0.0
  %1243 = vmatpush.msra.mxu0 0.0
  %1244 = vmatpush.msra.mxu0 0.0
  %1245 = vmatpush.msra.mxu0 0.0
  %1246 = vmatpush.msra.mxu0 0.0
  %1247 = vmatpush.msra.mxu0 0.0
  %1248 = vmatpush.msra.mxu0 0.0
  %1249 = vmatpush.msra.mxu0 0.0
  %1250 = vmatpush.msra.mxu0 %v1187
  %1251 = vmatmul.f32.gmra.mxu0 %v1175
  %v1252 = vpop.f32.mrf.mxu0
  %v1253 = vadd.f32 0.0, %v1252
  %1254 = vmatmul.f32.gmra.mxu0 %v1178
  %v1255 = vpop.f32.mrf.mxu0
  %v1256 = vadd.f32 0.0, %v1255
  %1257 = vdwg.mxu0
  %v1258 = vadd.f32 %v1143, %v1207
  %v1259 = vadd.f32 %v1144, %v1230
  %v1260 = vadd.f32 %v1145, %v1253
  %v1261 = vadd.f32 %v1146, %v1210
  %v1262 = vadd.f32 %v1147, %v1233
  %v1263 = vadd.f32 %v1148, %v1256
  %1264 = vrot.lane.b32.xlu0 %v282, 118
  %v1265 = vpop.permute.xlu0 %1264
  %1266 = vrot.lane.b32.xlu0 %v322, 118
  %v1267 = vpop.permute.xlu0 %1266
  %1268 = vrot.lane.b32.xlu0 %v362, 118
  %v1269 = vpop.permute.xlu0 %1268
  %vm1270 = vcmp.lt.s32.totalorder %v371, 118
  %v1271 = vsel %vm1270, %v1267, %v1269
  %v1272 = vsel %vm1270, %v1265, %v1267
  %v1273 = vsel %vm1270, %v1269, %v1265
  %s1274 = scalar_lea.vmem %s1, 24
  %v1275 = vld [vmem:[%s1274] sm:$0x7]
  %v1277 = vperm.slane %v1275, 0
  %v1278 = vperm.slane %v1275, 1
  %v1279 = vperm.slane %v1275, 2
  %v1283 = vmul.f32 %v1272, %v1277
  %v1284 = vmul.f32 %v1271, %v1278
  %v1285 = vmul.f32 %v1273, %v1279
  %s1286 = scalar_lea.vmem %s6, 128
  %v1287 = vld [vmem:[%s1286] sm:$0xff]
  %v1288 = vld [vmem:[%s1286 + $0x8] sm:$0xff]
  %v1290 = vsel %vm414, %v1287, 0
  %v1293 = vsel %vm414, %v1288, 0
  %v1296 = vsel %vm421, %v1283, 0
  %v1299 = vsel %vm421, %v1284, 0
  %v1302 = vsel %vm421, %v1285, 0
  %1304 = vmatpush.msra.mxu0 0.0
  %1305 = vmatpush.msra.mxu0 0.0
  %1306 = vmatpush.msra.mxu0 0.0
  %1307 = vmatpush.msra.mxu0 0.0
  %1308 = vmatpush.msra.mxu0 0.0
  %1309 = vmatpush.msra.mxu0 0.0
  %1310 = vmatpush.msra.mxu0 0.0
  %1311 = vmatpush.msra.mxu0 0.0
  %1312 = vmatpush.msra.mxu0 0.0
  %1313 = vmatpush.msra.mxu0 0.0
  %1314 = vmatpush.msra.mxu0 0.0
  %1315 = vmatpush.msra.mxu0 0.0
  %1316 = vmatpush.msra.mxu0 0.0
  %1317 = vmatpush.msra.mxu0 0.0
  %1318 = vmatpush.msra.mxu0 0.0
  %1319 = vmatpush.msra.mxu0 %v1296
  %1320 = vmatmul.f32.gmra.mxu0 %v1290
  %v1321 = vpop.f32.mrf.mxu0
  %v1322 = vadd.f32 0.0, %v1321
  %1323 = vmatmul.f32.gmra.mxu0 %v1293
  %v1324 = vpop.f32.mrf.mxu0
  %v1325 = vadd.f32 0.0, %v1324
  %1326 = vdwg.mxu0
  %1327 = vmatpush.msra.mxu0 0.0
  %1328 = vmatpush.msra.mxu0 0.0
  %1329 = vmatpush.msra.mxu0 0.0
  %1330 = vmatpush.msra.mxu0 0.0
  %1331 = vmatpush.msra.mxu0 0.0
  %1332 = vmatpush.msra.mxu0 0.0
  %1333 = vmatpush.msra.mxu0 0.0
  %1334 = vmatpush.msra.mxu0 0.0
  %1335 = vmatpush.msra.mxu0 0.0
  %1336 = vmatpush.msra.mxu0 0.0
  %1337 = vmatpush.msra.mxu0 0.0
  %1338 = vmatpush.msra.mxu0 0.0
  %1339 = vmatpush.msra.mxu0 0.0
  %1340 = vmatpush.msra.mxu0 0.0
  %1341 = vmatpush.msra.mxu0 0.0
  %1342 = vmatpush.msra.mxu0 %v1299
  %1343 = vmatmul.f32.gmra.mxu0 %v1290
  %v1344 = vpop.f32.mrf.mxu0
  %v1345 = vadd.f32 0.0, %v1344
  %1346 = vmatmul.f32.gmra.mxu0 %v1293
  %v1347 = vpop.f32.mrf.mxu0
  %v1348 = vadd.f32 0.0, %v1347
  %1349 = vdwg.mxu0
  %1350 = vmatpush.msra.mxu0 0.0
  %1351 = vmatpush.msra.mxu0 0.0
  %1352 = vmatpush.msra.mxu0 0.0
  %1353 = vmatpush.msra.mxu0 0.0
  %1354 = vmatpush.msra.mxu0 0.0
  %1355 = vmatpush.msra.mxu0 0.0
  %1356 = vmatpush.msra.mxu0 0.0
  %1357 = vmatpush.msra.mxu0 0.0
  %1358 = vmatpush.msra.mxu0 0.0
  %1359 = vmatpush.msra.mxu0 0.0
  %1360 = vmatpush.msra.mxu0 0.0
  %1361 = vmatpush.msra.mxu0 0.0
  %1362 = vmatpush.msra.mxu0 0.0
  %1363 = vmatpush.msra.mxu0 0.0
  %1364 = vmatpush.msra.mxu0 0.0
  %1365 = vmatpush.msra.mxu0 %v1302
  %1366 = vmatmul.f32.gmra.mxu0 %v1290
  %v1367 = vpop.f32.mrf.mxu0
  %v1368 = vadd.f32 0.0, %v1367
  %1369 = vmatmul.f32.gmra.mxu0 %v1293
  %v1370 = vpop.f32.mrf.mxu0
  %v1371 = vadd.f32 0.0, %v1370
  %1372 = vdwg.mxu0
  %v1373 = vadd.f32 %v1258, %v1322
  %v1374 = vadd.f32 %v1259, %v1345
  %v1375 = vadd.f32 %v1260, %v1368
  %v1376 = vadd.f32 %v1261, %v1325
  %v1377 = vadd.f32 %v1262, %v1348
  %v1378 = vadd.f32 %v1263, %v1371
  %1380 = vset.pattern.permute.xlu0 0
  %1381 = vperm.xlu0 %1380, %v101
  %v1382 = vpop.permute.xlu0 %1381
  %1385 = vset.pattern.permute.xlu0 0
  %1386 = vperm.xlu0 %1385, %v102
  %v1387 = vpop.permute.xlu0 %1386
  %v1389 = vadd.f32 %v1373, %v1382
  %v1390 = vadd.f32 %v1374, %v1382
  %v1391 = vadd.f32 %v1375, %v1382
  %v1392 = vadd.f32 %v1376, %v1387
  %v1393 = vadd.f32 %v1377, %v1387
  %v1394 = vadd.f32 %v1378, %v1387
  %vm1395 = vcmp.gt.f32.partialorder %v1389, 0.0
  %vm1396 = vcmp.gt.f32.partialorder %v1390, 0.0
  %vm1397 = vcmp.gt.f32.partialorder %v1391, 0.0
  %vm1398 = vcmp.gt.f32.partialorder %v1392, 0.0
  %vm1399 = vcmp.gt.f32.partialorder %v1393, 0.0
  %vm1400 = vcmp.gt.f32.partialorder %v1394, 0.0
  %v1401 = vmul.f32 %v1389, 0.2
  %v1402 = vmul.f32 %v1390, 0.2
  %v1403 = vmul.f32 %v1391, 0.2
  %v1404 = vmul.f32 %v1392, 0.2
  %v1405 = vmul.f32 %v1393, 0.2
  %v1406 = vmul.f32 %v1394, 0.2
  %v1407 = vsel %vm1395, %v1389, %v1401
  %v1408 = vsel %vm1396, %v1390, %v1402
  %v1409 = vsel %vm1397, %v1391, %v1403
  %v1410 = vsel %vm1398, %v1392, %v1404
  %v1411 = vsel %vm1399, %v1393, %v1405
  %v1412 = vsel %vm1400, %v1394, %v1406
  %1413 = vrot.lane.b32.xlu0 %v1407, 10
  %v1414 = vpop.permute.xlu0 %1413
  %1415 = vrot.lane.b32.xlu0 %v1410, 10
  %v1416 = vpop.permute.xlu0 %1415
  %1417 = vrot.lane.b32.xlu0 %v1408, 10
  %v1418 = vpop.permute.xlu0 %1417
  %1419 = vrot.lane.b32.xlu0 %v1411, 10
  %v1420 = vpop.permute.xlu0 %1419
  %1421 = vrot.lane.b32.xlu0 %v1409, 10
  %v1422 = vpop.permute.xlu0 %1421
  %1423 = vrot.lane.b32.xlu0 %v1412, 10
  %v1424 = vpop.permute.xlu0 %1423
  %v1425 = vsel %vm372, %v1418, %v1422
  %v1426 = vsel %vm372, %v1420, %v1424
  %v1427 = vsel %vm372, %v1414, %v1418
  %v1428 = vsel %vm372, %v1416, %v1420
  %v1429 = vsel %vm372, %v1422, %v1414
  %v1430 = vsel %vm372, %v1424, %v1416
  %v1431 = vmul.f32 %v1429, %v378
  %v1432 = vmul.f32 %v1427, %v379
  %v1433 = vmul.f32 %v1425, %v380
  %v1434 = vmul.f32 %v1430, %v378
  %v1435 = vmul.f32 %v1428, %v379
  %v1436 = vmul.f32 %v1426, %v380
  %v1437 = vld [vmem:[%s7] sm:$0xff]
  %v1438 = vld [vmem:[%s7 + $0x8] sm:$0xff]
  %1439 = vrot.lane.b32.xlu0 %v1407, 9
  %v1440 = vpop.permute.xlu0 %1439
  %1441 = vrot.lane.b32.xlu0 %v1410, 9
  %v1442 = vpop.permute.xlu0 %1441
  %1443 = vrot.lane.b32.xlu0 %v1408, 9
  %v1444 = vpop.permute.xlu0 %1443
  %1445 = vrot.lane.b32.xlu0 %v1411, 9
  %v1446 = vpop.permute.xlu0 %1445
  %1447 = vrot.lane.b32.xlu0 %v1409, 9
  %v1448 = vpop.permute.xlu0 %1447
  %1449 = vrot.lane.b32.xlu0 %v1412, 9
  %v1450 = vpop.permute.xlu0 %1449
  %v1451 = vsel %vm395, %v1444, %v1448
  %v1452 = vsel %vm395, %v1446, %v1450
  %v1453 = vsel %vm395, %v1440, %v1444
  %v1454 = vsel %vm395, %v1442, %v1446
  %v1455 = vsel %vm395, %v1448, %v1440
  %v1456 = vsel %vm395, %v1450, %v1442
  %v1457 = vmul.f32 %v1455, %v402
  %v1458 = vmul.f32 %v1453, %v403
  %v1459 = vmul.f32 %v1451, %v404
  %v1460 = vmul.f32 %v1456, %v402
  %v1461 = vmul.f32 %v1454, %v403
  %v1462 = vmul.f32 %v1452, %v404
  %s1463 = scalar_lea.vmem %s7, 16
  %v1464 = vld [vmem:[%s1463] sm:$0xff]
  %v1465 = vld [vmem:[%s1463 + $0x8] sm:$0xff]
  %vm1466 = vcmask 130048
  %v1468 = vsel %vm1466, %v1464, 0
  %v1471 = vsel %vm1466, %v1465, 0
  %1473 = vmatpush.msra.mxu0 0.0
  %1474 = vmatpush.msra.mxu0 0.0
  %1475 = vmatpush.msra.mxu0 0.0
  %1476 = vmatpush.msra.mxu0 0.0
  %1477 = vmatpush.msra.mxu0 0.0
  %1478 = vmatpush.msra.mxu0 0.0
  %1479 = vmatpush.msra.mxu0 0.0
  %1480 = vmatpush.msra.mxu0 0.0
  %1481 = vmatpush.msra.mxu0 0.0
  %1482 = vmatpush.msra.mxu0 0.0
  %1483 = vmatpush.msra.mxu0 0.0
  %1484 = vmatpush.msra.mxu0 0.0
  %1485 = vmatpush.msra.mxu0 0.0
  %1486 = vmatpush.msra.mxu0 0.0
  %1487 = vmatpush.msra.mxu0 %v1460
  %1488 = vmatpush.msra.mxu0 %v1457
  %1489 = vmatmul.f32.gmra.mxu0 %v1468
  %v1490 = vpop.f32.mrf.mxu0
  %v1491 = vadd.f32 0.0, %v1490
  %1492 = vmatmul.f32.gmra.mxu0 %v1471
  %v1493 = vpop.f32.mrf.mxu0
  %v1494 = vadd.f32 0.0, %v1493
  %1495 = vdwg.mxu0
  %1496 = vmatpush.msra.mxu0 0.0
  %1497 = vmatpush.msra.mxu0 0.0
  %1498 = vmatpush.msra.mxu0 0.0
  %1499 = vmatpush.msra.mxu0 0.0
  %1500 = vmatpush.msra.mxu0 0.0
  %1501 = vmatpush.msra.mxu0 0.0
  %1502 = vmatpush.msra.mxu0 0.0
  %1503 = vmatpush.msra.mxu0 0.0
  %1504 = vmatpush.msra.mxu0 0.0
  %1505 = vmatpush.msra.mxu0 0.0
  %1506 = vmatpush.msra.mxu0 0.0
  %1507 = vmatpush.msra.mxu0 0.0
  %1508 = vmatpush.msra.mxu0 0.0
  %1509 = vmatpush.msra.mxu0 0.0
  %1510 = vmatpush.msra.mxu0 %v1461
  %1511 = vmatpush.msra.mxu0 %v1458
  %1512 = vmatmul.f32.gmra.mxu0 %v1468
  %v1513 = vpop.f32.mrf.mxu0
  %v1514 = vadd.f32 0.0, %v1513
  %1515 = vmatmul.f32.gmra.mxu0 %v1471
  %v1516 = vpop.f32.mrf.mxu0
  %v1517 = vadd.f32 0.0, %v1516
  %1518 = vdwg.mxu0
  %1519 = vmatpush.msra.mxu0 0.0
  %1520 = vmatpush.msra.mxu0 0.0
  %1521 = vmatpush.msra.mxu0 0.0
  %1522 = vmatpush.msra.mxu0 0.0
  %1523 = vmatpush.msra.mxu0 0.0
  %1524 = vmatpush.msra.mxu0 0.0
  %1525 = vmatpush.msra.mxu0 0.0
  %1526 = vmatpush.msra.mxu0 0.0
  %1527 = vmatpush.msra.mxu0 0.0
  %1528 = vmatpush.msra.mxu0 0.0
  %1529 = vmatpush.msra.mxu0 0.0
  %1530 = vmatpush.msra.mxu0 0.0
  %1531 = vmatpush.msra.mxu0 0.0
  %1532 = vmatpush.msra.mxu0 0.0
  %1533 = vmatpush.msra.mxu0 %v1462
  %1534 = vmatpush.msra.mxu0 %v1459
  %1535 = vmatmul.f32.gmra.mxu0 %v1468
  %v1536 = vpop.f32.mrf.mxu0
  %v1537 = vadd.f32 0.0, %v1536
  %1538 = vmatmul.f32.gmra.mxu0 %v1471
  %v1539 = vpop.f32.mrf.mxu0
  %v1540 = vadd.f32 0.0, %v1539
  %1541 = vdwg.mxu0
  %v1543 = vsel %vm1466, %v1437, 0
  %v1546 = vsel %vm1466, %v1438, 0
  %1548 = vmatpush.msra.mxu0 0.0
  %1549 = vmatpush.msra.mxu0 0.0
  %1550 = vmatpush.msra.mxu0 0.0
  %1551 = vmatpush.msra.mxu0 0.0
  %1552 = vmatpush.msra.mxu0 0.0
  %1553 = vmatpush.msra.mxu0 0.0
  %1554 = vmatpush.msra.mxu0 0.0
  %1555 = vmatpush.msra.mxu0 0.0
  %1556 = vmatpush.msra.mxu0 0.0
  %1557 = vmatpush.msra.mxu0 0.0
  %1558 = vmatpush.msra.mxu0 0.0
  %1559 = vmatpush.msra.mxu0 0.0
  %1560 = vmatpush.msra.mxu0 0.0
  %1561 = vmatpush.msra.mxu0 0.0
  %1562 = vmatpush.msra.mxu0 %v1434
  %1563 = vmatpush.msra.mxu0 %v1431
  %1564 = vmatmul.f32.gmra.mxu0 %v1543
  %v1565 = vpop.f32.mrf.mxu0
  %v1566 = vadd.f32 %v1491, %v1565
  %1567 = vmatmul.f32.gmra.mxu0 %v1546
  %v1568 = vpop.f32.mrf.mxu0
  %v1569 = vadd.f32 %v1494, %v1568
  %1570 = vdwg.mxu0
  %1571 = vmatpush.msra.mxu0 0.0
  %1572 = vmatpush.msra.mxu0 0.0
  %1573 = vmatpush.msra.mxu0 0.0
  %1574 = vmatpush.msra.mxu0 0.0
  %1575 = vmatpush.msra.mxu0 0.0
  %1576 = vmatpush.msra.mxu0 0.0
  %1577 = vmatpush.msra.mxu0 0.0
  %1578 = vmatpush.msra.mxu0 0.0
  %1579 = vmatpush.msra.mxu0 0.0
  %1580 = vmatpush.msra.mxu0 0.0
  %1581 = vmatpush.msra.mxu0 0.0
  %1582 = vmatpush.msra.mxu0 0.0
  %1583 = vmatpush.msra.mxu0 0.0
  %1584 = vmatpush.msra.mxu0 0.0
  %1585 = vmatpush.msra.mxu0 %v1435
  %1586 = vmatpush.msra.mxu0 %v1432
  %1587 = vmatmul.f32.gmra.mxu0 %v1543
  %v1588 = vpop.f32.mrf.mxu0
  %v1589 = vadd.f32 %v1514, %v1588
  %1590 = vmatmul.f32.gmra.mxu0 %v1546
  %v1591 = vpop.f32.mrf.mxu0
  %v1592 = vadd.f32 %v1517, %v1591
  %1593 = vdwg.mxu0
  %1594 = vmatpush.msra.mxu0 0.0
  %1595 = vmatpush.msra.mxu0 0.0
  %1596 = vmatpush.msra.mxu0 0.0
  %1597 = vmatpush.msra.mxu0 0.0
  %1598 = vmatpush.msra.mxu0 0.0
  %1599 = vmatpush.msra.mxu0 0.0
  %1600 = vmatpush.msra.mxu0 0.0
  %1601 = vmatpush.msra.mxu0 0.0
  %1602 = vmatpush.msra.mxu0 0.0
  %1603 = vmatpush.msra.mxu0 0.0
  %1604 = vmatpush.msra.mxu0 0.0
  %1605 = vmatpush.msra.mxu0 0.0
  %1606 = vmatpush.msra.mxu0 0.0
  %1607 = vmatpush.msra.mxu0 0.0
  %1608 = vmatpush.msra.mxu0 %v1436
  %1609 = vmatpush.msra.mxu0 %v1433
  %1610 = vmatmul.f32.gmra.mxu0 %v1543
  %v1611 = vpop.f32.mrf.mxu0
  %v1612 = vadd.f32 %v1537, %v1611
  %1613 = vmatmul.f32.gmra.mxu0 %v1546
  %v1614 = vpop.f32.mrf.mxu0
  %v1615 = vadd.f32 %v1540, %v1614
  %1616 = vdwg.mxu0
  %1617 = vrot.lane.b32.xlu0 %v1407, 8
  %v1618 = vpop.permute.xlu0 %1617
  %1619 = vrot.lane.b32.xlu0 %v1410, 8
  %v1620 = vpop.permute.xlu0 %1619
  %1621 = vrot.lane.b32.xlu0 %v1408, 8
  %v1622 = vpop.permute.xlu0 %1621
  %1623 = vrot.lane.b32.xlu0 %v1411, 8
  %v1624 = vpop.permute.xlu0 %1623
  %1625 = vrot.lane.b32.xlu0 %v1409, 8
  %v1626 = vpop.permute.xlu0 %1625
  %1627 = vrot.lane.b32.xlu0 %v1412, 8
  %v1628 = vpop.permute.xlu0 %1627
  %v1629 = vsel %vm590, %v1622, %v1626
  %v1630 = vsel %vm590, %v1624, %v1628
  %v1631 = vsel %vm590, %v1618, %v1622
  %v1632 = vsel %vm590, %v1620, %v1624
  %v1633 = vsel %vm590, %v1626, %v1618
  %v1634 = vsel %vm590, %v1628, %v1620
  %v1635 = vmul.f32 %v1633, %v597
  %v1636 = vmul.f32 %v1631, %v598
  %v1637 = vmul.f32 %v1629, %v599
  %v1638 = vmul.f32 %v1634, %v597
  %v1639 = vmul.f32 %v1632, %v598
  %v1640 = vmul.f32 %v1630, %v599
  %s1641 = scalar_lea.vmem %s7, 32
  %v1642 = vld [vmem:[%s1641] sm:$0xff]
  %v1643 = vld [vmem:[%s1641 + $0x8] sm:$0xff]
  %v1645 = vsel %vm1466, %v1642, 0
  %v1648 = vsel %vm1466, %v1643, 0
  %1650 = vmatpush.msra.mxu0 0.0
  %1651 = vmatpush.msra.mxu0 0.0
  %1652 = vmatpush.msra.mxu0 0.0
  %1653 = vmatpush.msra.mxu0 0.0
  %1654 = vmatpush.msra.mxu0 0.0
  %1655 = vmatpush.msra.mxu0 0.0
  %1656 = vmatpush.msra.mxu0 0.0
  %1657 = vmatpush.msra.mxu0 0.0
  %1658 = vmatpush.msra.mxu0 0.0
  %1659 = vmatpush.msra.mxu0 0.0
  %1660 = vmatpush.msra.mxu0 0.0
  %1661 = vmatpush.msra.mxu0 0.0
  %1662 = vmatpush.msra.mxu0 0.0
  %1663 = vmatpush.msra.mxu0 0.0
  %1664 = vmatpush.msra.mxu0 %v1638
  %1665 = vmatpush.msra.mxu0 %v1635
  %1666 = vmatmul.f32.gmra.mxu0 %v1645
  %v1667 = vpop.f32.mrf.mxu0
  %v1668 = vadd.f32 0.0, %v1667
  %1669 = vmatmul.f32.gmra.mxu0 %v1648
  %v1670 = vpop.f32.mrf.mxu0
  %v1671 = vadd.f32 0.0, %v1670
  %1672 = vdwg.mxu0
  %1673 = vmatpush.msra.mxu0 0.0
  %1674 = vmatpush.msra.mxu0 0.0
  %1675 = vmatpush.msra.mxu0 0.0
  %1676 = vmatpush.msra.mxu0 0.0
  %1677 = vmatpush.msra.mxu0 0.0
  %1678 = vmatpush.msra.mxu0 0.0
  %1679 = vmatpush.msra.mxu0 0.0
  %1680 = vmatpush.msra.mxu0 0.0
  %1681 = vmatpush.msra.mxu0 0.0
  %1682 = vmatpush.msra.mxu0 0.0
  %1683 = vmatpush.msra.mxu0 0.0
  %1684 = vmatpush.msra.mxu0 0.0
  %1685 = vmatpush.msra.mxu0 0.0
  %1686 = vmatpush.msra.mxu0 0.0
  %1687 = vmatpush.msra.mxu0 %v1639
  %1688 = vmatpush.msra.mxu0 %v1636
  %1689 = vmatmul.f32.gmra.mxu0 %v1645
  %v1690 = vpop.f32.mrf.mxu0
  %v1691 = vadd.f32 0.0, %v1690
  %1692 = vmatmul.f32.gmra.mxu0 %v1648
  %v1693 = vpop.f32.mrf.mxu0
  %v1694 = vadd.f32 0.0, %v1693
  %1695 = vdwg.mxu0
  %1696 = vmatpush.msra.mxu0 0.0
  %1697 = vmatpush.msra.mxu0 0.0
  %1698 = vmatpush.msra.mxu0 0.0
  %1699 = vmatpush.msra.mxu0 0.0
  %1700 = vmatpush.msra.mxu0 0.0
  %1701 = vmatpush.msra.mxu0 0.0
  %1702 = vmatpush.msra.mxu0 0.0
  %1703 = vmatpush.msra.mxu0 0.0
  %1704 = vmatpush.msra.mxu0 0.0
  %1705 = vmatpush.msra.mxu0 0.0
  %1706 = vmatpush.msra.mxu0 0.0
  %1707 = vmatpush.msra.mxu0 0.0
  %1708 = vmatpush.msra.mxu0 0.0
  %1709 = vmatpush.msra.mxu0 0.0
  %1710 = vmatpush.msra.mxu0 %v1640
  %1711 = vmatpush.msra.mxu0 %v1637
  %1712 = vmatmul.f32.gmra.mxu0 %v1645
  %v1713 = vpop.f32.mrf.mxu0
  %v1714 = vadd.f32 0.0, %v1713
  %1715 = vmatmul.f32.gmra.mxu0 %v1648
  %v1716 = vpop.f32.mrf.mxu0
  %v1717 = vadd.f32 0.0, %v1716
  %1718 = vdwg.mxu0
  %v1719 = vadd.f32 %v1566, %v1668
  %v1720 = vadd.f32 %v1589, %v1691
  %v1721 = vadd.f32 %v1612, %v1714
  %v1722 = vadd.f32 %v1569, %v1671
  %v1723 = vadd.f32 %v1592, %v1694
  %v1724 = vadd.f32 %v1615, %v1717
  %1725 = vrot.lane.b32.xlu0 %v1407, 1
  %v1726 = vpop.permute.xlu0 %1725
  %1727 = vrot.lane.b32.xlu0 %v1410, 1
  %v1728 = vpop.permute.xlu0 %1727
  %1729 = vrot.lane.b32.xlu0 %v1408, 1
  %v1730 = vpop.permute.xlu0 %1729
  %1731 = vrot.lane.b32.xlu0 %v1411, 1
  %v1732 = vpop.permute.xlu0 %1731
  %1733 = vrot.lane.b32.xlu0 %v1409, 1
  %v1734 = vpop.permute.xlu0 %1733
  %1735 = vrot.lane.b32.xlu0 %v1412, 1
  %v1736 = vpop.permute.xlu0 %1735
  %v1737 = vsel %vm705, %v1730, %v1734
  %v1738 = vsel %vm705, %v1732, %v1736
  %v1739 = vsel %vm705, %v1726, %v1730
  %v1740 = vsel %vm705, %v1728, %v1732
  %v1741 = vsel %vm705, %v1734, %v1726
  %v1742 = vsel %vm705, %v1736, %v1728
  %v1743 = vmul.f32 %v1741, %v712
  %v1744 = vmul.f32 %v1739, %v713
  %v1745 = vmul.f32 %v1737, %v714
  %v1746 = vmul.f32 %v1742, %v712
  %v1747 = vmul.f32 %v1740, %v713
  %v1748 = vmul.f32 %v1738, %v714
  %s1749 = scalar_lea.vmem %s7, 48
  %v1750 = vld [vmem:[%s1749] sm:$0xff]
  %v1751 = vld [vmem:[%s1749 + $0x8] sm:$0xff]
  %v1753 = vsel %vm1466, %v1750, 0
  %v1756 = vsel %vm1466, %v1751, 0
  %1758 = vmatpush.msra.mxu0 0.0
  %1759 = vmatpush.msra.mxu0 0.0
  %1760 = vmatpush.msra.mxu0 0.0
  %1761 = vmatpush.msra.mxu0 0.0
  %1762 = vmatpush.msra.mxu0 0.0
  %1763 = vmatpush.msra.mxu0 0.0
  %1764 = vmatpush.msra.mxu0 0.0
  %1765 = vmatpush.msra.mxu0 0.0
  %1766 = vmatpush.msra.mxu0 0.0
  %1767 = vmatpush.msra.mxu0 0.0
  %1768 = vmatpush.msra.mxu0 0.0
  %1769 = vmatpush.msra.mxu0 0.0
  %1770 = vmatpush.msra.mxu0 0.0
  %1771 = vmatpush.msra.mxu0 0.0
  %1772 = vmatpush.msra.mxu0 %v1746
  %1773 = vmatpush.msra.mxu0 %v1743
  %1774 = vmatmul.f32.gmra.mxu0 %v1753
  %v1775 = vpop.f32.mrf.mxu0
  %v1776 = vadd.f32 0.0, %v1775
  %1777 = vmatmul.f32.gmra.mxu0 %v1756
  %v1778 = vpop.f32.mrf.mxu0
  %v1779 = vadd.f32 0.0, %v1778
  %1780 = vdwg.mxu0
  %1781 = vmatpush.msra.mxu0 0.0
  %1782 = vmatpush.msra.mxu0 0.0
  %1783 = vmatpush.msra.mxu0 0.0
  %1784 = vmatpush.msra.mxu0 0.0
  %1785 = vmatpush.msra.mxu0 0.0
  %1786 = vmatpush.msra.mxu0 0.0
  %1787 = vmatpush.msra.mxu0 0.0
  %1788 = vmatpush.msra.mxu0 0.0
  %1789 = vmatpush.msra.mxu0 0.0
  %1790 = vmatpush.msra.mxu0 0.0
  %1791 = vmatpush.msra.mxu0 0.0
  %1792 = vmatpush.msra.mxu0 0.0
  %1793 = vmatpush.msra.mxu0 0.0
  %1794 = vmatpush.msra.mxu0 0.0
  %1795 = vmatpush.msra.mxu0 %v1747
  %1796 = vmatpush.msra.mxu0 %v1744
  %1797 = vmatmul.f32.gmra.mxu0 %v1753
  %v1798 = vpop.f32.mrf.mxu0
  %v1799 = vadd.f32 0.0, %v1798
  %1800 = vmatmul.f32.gmra.mxu0 %v1756
  %v1801 = vpop.f32.mrf.mxu0
  %v1802 = vadd.f32 0.0, %v1801
  %1803 = vdwg.mxu0
  %1804 = vmatpush.msra.mxu0 0.0
  %1805 = vmatpush.msra.mxu0 0.0
  %1806 = vmatpush.msra.mxu0 0.0
  %1807 = vmatpush.msra.mxu0 0.0
  %1808 = vmatpush.msra.mxu0 0.0
  %1809 = vmatpush.msra.mxu0 0.0
  %1810 = vmatpush.msra.mxu0 0.0
  %1811 = vmatpush.msra.mxu0 0.0
  %1812 = vmatpush.msra.mxu0 0.0
  %1813 = vmatpush.msra.mxu0 0.0
  %1814 = vmatpush.msra.mxu0 0.0
  %1815 = vmatpush.msra.mxu0 0.0
  %1816 = vmatpush.msra.mxu0 0.0
  %1817 = vmatpush.msra.mxu0 0.0
  %1818 = vmatpush.msra.mxu0 %v1748
  %1819 = vmatpush.msra.mxu0 %v1745
  %1820 = vmatmul.f32.gmra.mxu0 %v1753
  %v1821 = vpop.f32.mrf.mxu0
  %v1822 = vadd.f32 0.0, %v1821
  %1823 = vmatmul.f32.gmra.mxu0 %v1756
  %v1824 = vpop.f32.mrf.mxu0
  %v1825 = vadd.f32 0.0, %v1824
  %1826 = vdwg.mxu0
  %v1827 = vadd.f32 %v1719, %v1776
  %v1828 = vadd.f32 %v1720, %v1799
  %v1829 = vadd.f32 %v1721, %v1822
  %v1830 = vadd.f32 %v1722, %v1779
  %v1831 = vadd.f32 %v1723, %v1802
  %v1832 = vadd.f32 %v1724, %v1825
  %v1833 = vmul.f32 %v1407, %v817
  %v1834 = vmul.f32 %v1408, %v818
  %v1835 = vmul.f32 %v1409, %v819
  %v1836 = vmul.f32 %v1410, %v817
  %v1837 = vmul.f32 %v1411, %v818
  %v1838 = vmul.f32 %v1412, %v819
  %s1839 = scalar_lea.vmem %s7, 64
  %v1840 = vld [vmem:[%s1839] sm:$0xff]
  %v1841 = vld [vmem:[%s1839 + $0x8] sm:$0xff]
  %v1843 = vsel %vm1466, %v1840, 0
  %v1846 = vsel %vm1466, %v1841, 0
  %1848 = vmatpush.msra.mxu0 0.0
  %1849 = vmatpush.msra.mxu0 0.0
  %1850 = vmatpush.msra.mxu0 0.0
  %1851 = vmatpush.msra.mxu0 0.0
  %1852 = vmatpush.msra.mxu0 0.0
  %1853 = vmatpush.msra.mxu0 0.0
  %1854 = vmatpush.msra.mxu0 0.0
  %1855 = vmatpush.msra.mxu0 0.0
  %1856 = vmatpush.msra.mxu0 0.0
  %1857 = vmatpush.msra.mxu0 0.0
  %1858 = vmatpush.msra.mxu0 0.0
  %1859 = vmatpush.msra.mxu0 0.0
  %1860 = vmatpush.msra.mxu0 0.0
  %1861 = vmatpush.msra.mxu0 0.0
  %1862 = vmatpush.msra.mxu0 %v1836
  %1863 = vmatpush.msra.mxu0 %v1833
  %1864 = vmatmul.f32.gmra.mxu0 %v1843
  %v1865 = vpop.f32.mrf.mxu0
  %v1866 = vadd.f32 0.0, %v1865
  %1867 = vmatmul.f32.gmra.mxu0 %v1846
  %v1868 = vpop.f32.mrf.mxu0
  %v1869 = vadd.f32 0.0, %v1868
  %1870 = vdwg.mxu0
  %1871 = vmatpush.msra.mxu0 0.0
  %1872 = vmatpush.msra.mxu0 0.0
  %1873 = vmatpush.msra.mxu0 0.0
  %1874 = vmatpush.msra.mxu0 0.0
  %1875 = vmatpush.msra.mxu0 0.0
  %1876 = vmatpush.msra.mxu0 0.0
  %1877 = vmatpush.msra.mxu0 0.0
  %1878 = vmatpush.msra.mxu0 0.0
  %1879 = vmatpush.msra.mxu0 0.0
  %1880 = vmatpush.msra.mxu0 0.0
  %1881 = vmatpush.msra.mxu0 0.0
  %1882 = vmatpush.msra.mxu0 0.0
  %1883 = vmatpush.msra.mxu0 0.0
  %1884 = vmatpush.msra.mxu0 0.0
  %1885 = vmatpush.msra.mxu0 %v1837
  %1886 = vmatpush.msra.mxu0 %v1834
  %1887 = vmatmul.f32.gmra.mxu0 %v1843
  %v1888 = vpop.f32.mrf.mxu0
  %v1889 = vadd.f32 0.0, %v1888
  %1890 = vmatmul.f32.gmra.mxu0 %v1846
  %v1891 = vpop.f32.mrf.mxu0
  %v1892 = vadd.f32 0.0, %v1891
  %1893 = vdwg.mxu0
  %1894 = vmatpush.msra.mxu0 0.0
  %1895 = vmatpush.msra.mxu0 0.0
  %1896 = vmatpush.msra.mxu0 0.0
  %1897 = vmatpush.msra.mxu0 0.0
  %1898 = vmatpush.msra.mxu0 0.0
  %1899 = vmatpush.msra.mxu0 0.0
  %1900 = vmatpush.msra.mxu0 0.0
  %1901 = vmatpush.msra.mxu0 0.0
  %1902 = vmatpush.msra.mxu0 0.0
  %1903 = vmatpush.msra.mxu0 0.0
  %1904 = vmatpush.msra.mxu0 0.0
  %1905 = vmatpush.msra.mxu0 0.0
  %1906 = vmatpush.msra.mxu0 0.0
  %1907 = vmatpush.msra.mxu0 0.0
  %1908 = vmatpush.msra.mxu0 %v1838
  %1909 = vmatpush.msra.mxu0 %v1835
  %1910 = vmatmul.f32.gmra.mxu0 %v1843
  %v1911 = vpop.f32.mrf.mxu0
  %v1912 = vadd.f32 0.0, %v1911
  %1913 = vmatmul.f32.gmra.mxu0 %v1846
  %v1914 = vpop.f32.mrf.mxu0
  %v1915 = vadd.f32 0.0, %v1914
  %1916 = vdwg.mxu0
  %v1917 = vadd.f32 %v1827, %v1866
  %v1918 = vadd.f32 %v1828, %v1889
  %v1919 = vadd.f32 %v1829, %v1912
  %v1920 = vadd.f32 %v1830, %v1869
  %v1921 = vadd.f32 %v1831, %v1892
  %v1922 = vadd.f32 %v1832, %v1915
  %1923 = vrot.lane.b32.xlu0 %v1407, 127
  %v1924 = vpop.permute.xlu0 %1923
  %1925 = vrot.lane.b32.xlu0 %v1410, 127
  %v1926 = vpop.permute.xlu0 %1925
  %1927 = vrot.lane.b32.xlu0 %v1408, 127
  %v1928 = vpop.permute.xlu0 %1927
  %1929 = vrot.lane.b32.xlu0 %v1411, 127
  %v1930 = vpop.permute.xlu0 %1929
  %1931 = vrot.lane.b32.xlu0 %v1409, 127
  %v1932 = vpop.permute.xlu0 %1931
  %1933 = vrot.lane.b32.xlu0 %v1412, 127
  %v1934 = vpop.permute.xlu0 %1933
  %v1935 = vsel %vm925, %v1928, %v1932
  %v1936 = vsel %vm925, %v1930, %v1934
  %v1937 = vsel %vm925, %v1924, %v1928
  %v1938 = vsel %vm925, %v1926, %v1930
  %v1939 = vsel %vm925, %v1932, %v1924
  %v1940 = vsel %vm925, %v1934, %v1926
  %v1941 = vmul.f32 %v1937, %v932
  %v1942 = vmul.f32 %v1935, %v933
  %v1943 = vmul.f32 %v1939, %v934
  %v1944 = vmul.f32 %v1938, %v932
  %v1945 = vmul.f32 %v1936, %v933
  %v1946 = vmul.f32 %v1940, %v934
  %s1947 = scalar_lea.vmem %s7, 80
  %v1948 = vld [vmem:[%s1947] sm:$0xff]
  %v1949 = vld [vmem:[%s1947 + $0x8] sm:$0xff]
  %v1951 = vsel %vm1466, %v1948, 0
  %v1954 = vsel %vm1466, %v1949, 0
  %1956 = vmatpush.msra.mxu0 0.0
  %1957 = vmatpush.msra.mxu0 0.0
  %1958 = vmatpush.msra.mxu0 0.0
  %1959 = vmatpush.msra.mxu0 0.0
  %1960 = vmatpush.msra.mxu0 0.0
  %1961 = vmatpush.msra.mxu0 0.0
  %1962 = vmatpush.msra.mxu0 0.0
  %1963 = vmatpush.msra.mxu0 0.0
  %1964 = vmatpush.msra.mxu0 0.0
  %1965 = vmatpush.msra.mxu0 0.0
  %1966 = vmatpush.msra.mxu0 0.0
  %1967 = vmatpush.msra.mxu0 0.0
  %1968 = vmatpush.msra.mxu0 0.0
  %1969 = vmatpush.msra.mxu0 0.0
  %1970 = vmatpush.msra.mxu0 %v1944
  %1971 = vmatpush.msra.mxu0 %v1941
  %1972 = vmatmul.f32.gmra.mxu0 %v1951
  %v1973 = vpop.f32.mrf.mxu0
  %v1974 = vadd.f32 0.0, %v1973
  %1975 = vmatmul.f32.gmra.mxu0 %v1954
  %v1976 = vpop.f32.mrf.mxu0
  %v1977 = vadd.f32 0.0, %v1976
  %1978 = vdwg.mxu0
  %1979 = vmatpush.msra.mxu0 0.0
  %1980 = vmatpush.msra.mxu0 0.0
  %1981 = vmatpush.msra.mxu0 0.0
  %1982 = vmatpush.msra.mxu0 0.0
  %1983 = vmatpush.msra.mxu0 0.0
  %1984 = vmatpush.msra.mxu0 0.0
  %1985 = vmatpush.msra.mxu0 0.0
  %1986 = vmatpush.msra.mxu0 0.0
  %1987 = vmatpush.msra.mxu0 0.0
  %1988 = vmatpush.msra.mxu0 0.0
  %1989 = vmatpush.msra.mxu0 0.0
  %1990 = vmatpush.msra.mxu0 0.0
  %1991 = vmatpush.msra.mxu0 0.0
  %1992 = vmatpush.msra.mxu0 0.0
  %1993 = vmatpush.msra.mxu0 %v1945
  %1994 = vmatpush.msra.mxu0 %v1942
  %1995 = vmatmul.f32.gmra.mxu0 %v1951
  %v1996 = vpop.f32.mrf.mxu0
  %v1997 = vadd.f32 0.0, %v1996
  %1998 = vmatmul.f32.gmra.mxu0 %v1954
  %v1999 = vpop.f32.mrf.mxu0
  %v2000 = vadd.f32 0.0, %v1999
  %2001 = vdwg.mxu0
  %2002 = vmatpush.msra.mxu0 0.0
  %2003 = vmatpush.msra.mxu0 0.0
  %2004 = vmatpush.msra.mxu0 0.0
  %2005 = vmatpush.msra.mxu0 0.0
  %2006 = vmatpush.msra.mxu0 0.0
  %2007 = vmatpush.msra.mxu0 0.0
  %2008 = vmatpush.msra.mxu0 0.0
  %2009 = vmatpush.msra.mxu0 0.0
  %2010 = vmatpush.msra.mxu0 0.0
  %2011 = vmatpush.msra.mxu0 0.0
  %2012 = vmatpush.msra.mxu0 0.0
  %2013 = vmatpush.msra.mxu0 0.0
  %2014 = vmatpush.msra.mxu0 0.0
  %2015 = vmatpush.msra.mxu0 0.0
  %2016 = vmatpush.msra.mxu0 %v1946
  %2017 = vmatpush.msra.mxu0 %v1943
  %2018 = vmatmul.f32.gmra.mxu0 %v1951
  %v2019 = vpop.f32.mrf.mxu0
  %v2020 = vadd.f32 0.0, %v2019
  %2021 = vmatmul.f32.gmra.mxu0 %v1954
  %v2022 = vpop.f32.mrf.mxu0
  %v2023 = vadd.f32 0.0, %v2022
  %2024 = vdwg.mxu0
  %v2025 = vadd.f32 %v1917, %v1974
  %v2026 = vadd.f32 %v1918, %v1997
  %v2027 = vadd.f32 %v1919, %v2020
  %v2028 = vadd.f32 %v1920, %v1977
  %v2029 = vadd.f32 %v1921, %v2000
  %v2030 = vadd.f32 %v1922, %v2023
  %2031 = vrot.lane.b32.xlu0 %v1407, 120
  %v2032 = vpop.permute.xlu0 %2031
  %2033 = vrot.lane.b32.xlu0 %v1410, 120
  %v2034 = vpop.permute.xlu0 %2033
  %2035 = vrot.lane.b32.xlu0 %v1408, 120
  %v2036 = vpop.permute.xlu0 %2035
  %2037 = vrot.lane.b32.xlu0 %v1411, 120
  %v2038 = vpop.permute.xlu0 %2037
  %2039 = vrot.lane.b32.xlu0 %v1409, 120
  %v2040 = vpop.permute.xlu0 %2039
  %2041 = vrot.lane.b32.xlu0 %v1412, 120
  %v2042 = vpop.permute.xlu0 %2041
  %v2043 = vsel %vm1040, %v2036, %v2040
  %v2044 = vsel %vm1040, %v2038, %v2042
  %v2045 = vsel %vm1040, %v2032, %v2036
  %v2046 = vsel %vm1040, %v2034, %v2038
  %v2047 = vsel %vm1040, %v2040, %v2032
  %v2048 = vsel %vm1040, %v2042, %v2034
  %v2049 = vmul.f32 %v2045, %v1047
  %v2050 = vmul.f32 %v2043, %v1048
  %v2051 = vmul.f32 %v2047, %v1049
  %v2052 = vmul.f32 %v2046, %v1047
  %v2053 = vmul.f32 %v2044, %v1048
  %v2054 = vmul.f32 %v2048, %v1049
  %s2055 = scalar_lea.vmem %s7, 96
  %v2056 = vld [vmem:[%s2055] sm:$0xff]
  %v2057 = vld [vmem:[%s2055 + $0x8] sm:$0xff]
  %v2059 = vsel %vm1466, %v2056, 0
  %v2062 = vsel %vm1466, %v2057, 0
  %2064 = vmatpush.msra.mxu0 0.0
  %2065 = vmatpush.msra.mxu0 0.0
  %2066 = vmatpush.msra.mxu0 0.0
  %2067 = vmatpush.msra.mxu0 0.0
  %2068 = vmatpush.msra.mxu0 0.0
  %2069 = vmatpush.msra.mxu0 0.0
  %2070 = vmatpush.msra.mxu0 0.0
  %2071 = vmatpush.msra.mxu0 0.0
  %2072 = vmatpush.msra.mxu0 0.0
  %2073 = vmatpush.msra.mxu0 0.0
  %2074 = vmatpush.msra.mxu0 0.0
  %2075 = vmatpush.msra.mxu0 0.0
  %2076 = vmatpush.msra.mxu0 0.0
  %2077 = vmatpush.msra.mxu0 0.0
  %2078 = vmatpush.msra.mxu0 %v2052
  %2079 = vmatpush.msra.mxu0 %v2049
  %2080 = vmatmul.f32.gmra.mxu0 %v2059
  %v2081 = vpop.f32.mrf.mxu0
  %v2082 = vadd.f32 0.0, %v2081
  %2083 = vmatmul.f32.gmra.mxu0 %v2062
  %v2084 = vpop.f32.mrf.mxu0
  %v2085 = vadd.f32 0.0, %v2084
  %2086 = vdwg.mxu0
  %2087 = vmatpush.msra.mxu0 0.0
  %2088 = vmatpush.msra.mxu0 0.0
  %2089 = vmatpush.msra.mxu0 0.0
  %2090 = vmatpush.msra.mxu0 0.0
  %2091 = vmatpush.msra.mxu0 0.0
  %2092 = vmatpush.msra.mxu0 0.0
  %2093 = vmatpush.msra.mxu0 0.0
  %2094 = vmatpush.msra.mxu0 0.0
  %2095 = vmatpush.msra.mxu0 0.0
  %2096 = vmatpush.msra.mxu0 0.0
  %2097 = vmatpush.msra.mxu0 0.0
  %2098 = vmatpush.msra.mxu0 0.0
  %2099 = vmatpush.msra.mxu0 0.0
  %2100 = vmatpush.msra.mxu0 0.0
  %2101 = vmatpush.msra.mxu0 %v2053
  %2102 = vmatpush.msra.mxu0 %v2050
  %2103 = vmatmul.f32.gmra.mxu0 %v2059
  %v2104 = vpop.f32.mrf.mxu0
  %v2105 = vadd.f32 0.0, %v2104
  %2106 = vmatmul.f32.gmra.mxu0 %v2062
  %v2107 = vpop.f32.mrf.mxu0
  %v2108 = vadd.f32 0.0, %v2107
  %2109 = vdwg.mxu0
  %2110 = vmatpush.msra.mxu0 0.0
  %2111 = vmatpush.msra.mxu0 0.0
  %2112 = vmatpush.msra.mxu0 0.0
  %2113 = vmatpush.msra.mxu0 0.0
  %2114 = vmatpush.msra.mxu0 0.0
  %2115 = vmatpush.msra.mxu0 0.0
  %2116 = vmatpush.msra.mxu0 0.0
  %2117 = vmatpush.msra.mxu0 0.0
  %2118 = vmatpush.msra.mxu0 0.0
  %2119 = vmatpush.msra.mxu0 0.0
  %2120 = vmatpush.msra.mxu0 0.0
  %2121 = vmatpush.msra.mxu0 0.0
  %2122 = vmatpush.msra.mxu0 0.0
  %2123 = vmatpush.msra.mxu0 0.0
  %2124 = vmatpush.msra.mxu0 %v2054
  %2125 = vmatpush.msra.mxu0 %v2051
  %2126 = vmatmul.f32.gmra.mxu0 %v2059
  %v2127 = vpop.f32.mrf.mxu0
  %v2128 = vadd.f32 0.0, %v2127
  %2129 = vmatmul.f32.gmra.mxu0 %v2062
  %v2130 = vpop.f32.mrf.mxu0
  %v2131 = vadd.f32 0.0, %v2130
  %2132 = vdwg.mxu0
  %v2133 = vadd.f32 %v2025, %v2082
  %v2134 = vadd.f32 %v2026, %v2105
  %v2135 = vadd.f32 %v2027, %v2128
  %v2136 = vadd.f32 %v2028, %v2085
  %v2137 = vadd.f32 %v2029, %v2108
  %v2138 = vadd.f32 %v2030, %v2131
  %2139 = vrot.lane.b32.xlu0 %v1407, 119
  %v2140 = vpop.permute.xlu0 %2139
  %2141 = vrot.lane.b32.xlu0 %v1410, 119
  %v2142 = vpop.permute.xlu0 %2141
  %2143 = vrot.lane.b32.xlu0 %v1408, 119
  %v2144 = vpop.permute.xlu0 %2143
  %2145 = vrot.lane.b32.xlu0 %v1411, 119
  %v2146 = vpop.permute.xlu0 %2145
  %2147 = vrot.lane.b32.xlu0 %v1409, 119
  %v2148 = vpop.permute.xlu0 %2147
  %2149 = vrot.lane.b32.xlu0 %v1412, 119
  %v2150 = vpop.permute.xlu0 %2149
  %v2151 = vsel %vm1155, %v2144, %v2148
  %v2152 = vsel %vm1155, %v2146, %v2150
  %v2153 = vsel %vm1155, %v2140, %v2144
  %v2154 = vsel %vm1155, %v2142, %v2146
  %v2155 = vsel %vm1155, %v2148, %v2140
  %v2156 = vsel %vm1155, %v2150, %v2142
  %v2157 = vmul.f32 %v2153, %v1162
  %v2158 = vmul.f32 %v2151, %v1163
  %v2159 = vmul.f32 %v2155, %v1164
  %v2160 = vmul.f32 %v2154, %v1162
  %v2161 = vmul.f32 %v2152, %v1163
  %v2162 = vmul.f32 %v2156, %v1164
  %s2163 = scalar_lea.vmem %s7, 112
  %v2164 = vld [vmem:[%s2163] sm:$0xff]
  %v2165 = vld [vmem:[%s2163 + $0x8] sm:$0xff]
  %v2167 = vsel %vm1466, %v2164, 0
  %v2170 = vsel %vm1466, %v2165, 0
  %2172 = vmatpush.msra.mxu0 0.0
  %2173 = vmatpush.msra.mxu0 0.0
  %2174 = vmatpush.msra.mxu0 0.0
  %2175 = vmatpush.msra.mxu0 0.0
  %2176 = vmatpush.msra.mxu0 0.0
  %2177 = vmatpush.msra.mxu0 0.0
  %2178 = vmatpush.msra.mxu0 0.0
  %2179 = vmatpush.msra.mxu0 0.0
  %2180 = vmatpush.msra.mxu0 0.0
  %2181 = vmatpush.msra.mxu0 0.0
  %2182 = vmatpush.msra.mxu0 0.0
  %2183 = vmatpush.msra.mxu0 0.0
  %2184 = vmatpush.msra.mxu0 0.0
  %2185 = vmatpush.msra.mxu0 0.0
  %2186 = vmatpush.msra.mxu0 %v2160
  %2187 = vmatpush.msra.mxu0 %v2157
  %2188 = vmatmul.f32.gmra.mxu0 %v2167
  %v2189 = vpop.f32.mrf.mxu0
  %v2190 = vadd.f32 0.0, %v2189
  %2191 = vmatmul.f32.gmra.mxu0 %v2170
  %v2192 = vpop.f32.mrf.mxu0
  %v2193 = vadd.f32 0.0, %v2192
  %2194 = vdwg.mxu0
  %2195 = vmatpush.msra.mxu0 0.0
  %2196 = vmatpush.msra.mxu0 0.0
  %2197 = vmatpush.msra.mxu0 0.0
  %2198 = vmatpush.msra.mxu0 0.0
  %2199 = vmatpush.msra.mxu0 0.0
  %2200 = vmatpush.msra.mxu0 0.0
  %2201 = vmatpush.msra.mxu0 0.0
  %2202 = vmatpush.msra.mxu0 0.0
  %2203 = vmatpush.msra.mxu0 0.0
  %2204 = vmatpush.msra.mxu0 0.0
  %2205 = vmatpush.msra.mxu0 0.0
  %2206 = vmatpush.msra.mxu0 0.0
  %2207 = vmatpush.msra.mxu0 0.0
  %2208 = vmatpush.msra.mxu0 0.0
  %2209 = vmatpush.msra.mxu0 %v2161
  %2210 = vmatpush.msra.mxu0 %v2158
  %2211 = vmatmul.f32.gmra.mxu0 %v2167
  %v2212 = vpop.f32.mrf.mxu0
  %v2213 = vadd.f32 0.0, %v2212
  %2214 = vmatmul.f32.gmra.mxu0 %v2170
  %v2215 = vpop.f32.mrf.mxu0
  %v2216 = vadd.f32 0.0, %v2215
  %2217 = vdwg.mxu0
  %2218 = vmatpush.msra.mxu0 0.0
  %2219 = vmatpush.msra.mxu0 0.0
  %2220 = vmatpush.msra.mxu0 0.0
  %2221 = vmatpush.msra.mxu0 0.0
  %2222 = vmatpush.msra.mxu0 0.0
  %2223 = vmatpush.msra.mxu0 0.0
  %2224 = vmatpush.msra.mxu0 0.0
  %2225 = vmatpush.msra.mxu0 0.0
  %2226 = vmatpush.msra.mxu0 0.0
  %2227 = vmatpush.msra.mxu0 0.0
  %2228 = vmatpush.msra.mxu0 0.0
  %2229 = vmatpush.msra.mxu0 0.0
  %2230 = vmatpush.msra.mxu0 0.0
  %2231 = vmatpush.msra.mxu0 0.0
  %2232 = vmatpush.msra.mxu0 %v2162
  %2233 = vmatpush.msra.mxu0 %v2159
  %2234 = vmatmul.f32.gmra.mxu0 %v2167
  %v2235 = vpop.f32.mrf.mxu0
  %v2236 = vadd.f32 0.0, %v2235
  %2237 = vmatmul.f32.gmra.mxu0 %v2170
  %v2238 = vpop.f32.mrf.mxu0
  %v2239 = vadd.f32 0.0, %v2238
  %2240 = vdwg.mxu0
  %v2241 = vadd.f32 %v2133, %v2190
  %v2242 = vadd.f32 %v2134, %v2213
  %v2243 = vadd.f32 %v2135, %v2236
  %v2244 = vadd.f32 %v2136, %v2193
  %v2245 = vadd.f32 %v2137, %v2216
  %v2246 = vadd.f32 %v2138, %v2239
  %2247 = vrot.lane.b32.xlu0 %v1407, 118
  %v2248 = vpop.permute.xlu0 %2247
  %2249 = vrot.lane.b32.xlu0 %v1410, 118
  %v2250 = vpop.permute.xlu0 %2249
  %2251 = vrot.lane.b32.xlu0 %v1408, 118
  %v2252 = vpop.permute.xlu0 %2251
  %2253 = vrot.lane.b32.xlu0 %v1411, 118
  %v2254 = vpop.permute.xlu0 %2253
  %2255 = vrot.lane.b32.xlu0 %v1409, 118
  %v2256 = vpop.permute.xlu0 %2255
  %2257 = vrot.lane.b32.xlu0 %v1412, 118
  %v2258 = vpop.permute.xlu0 %2257
  %v2259 = vsel %vm1270, %v2252, %v2256
  %v2260 = vsel %vm1270, %v2254, %v2258
  %v2261 = vsel %vm1270, %v2248, %v2252
  %v2262 = vsel %vm1270, %v2250, %v2254
  %v2263 = vsel %vm1270, %v2256, %v2248
  %v2264 = vsel %vm1270, %v2258, %v2250
  %v2265 = vmul.f32 %v2261, %v1277
  %v2266 = vmul.f32 %v2259, %v1278
  %v2267 = vmul.f32 %v2263, %v1279
  %v2268 = vmul.f32 %v2262, %v1277
  %v2269 = vmul.f32 %v2260, %v1278
  %v2270 = vmul.f32 %v2264, %v1279
  %s2271 = scalar_lea.vmem %s7, 128
  %v2272 = vld [vmem:[%s2271] sm:$0xff]
  %v2273 = vld [vmem:[%s2271 + $0x8] sm:$0xff]
  %v2275 = vsel %vm1466, %v2272, 0
  %v2278 = vsel %vm1466, %v2273, 0
  %2280 = vmatpush.msra.mxu0 0.0
  %2281 = vmatpush.msra.mxu0 0.0
  %2282 = vmatpush.msra.mxu0 0.0
  %2283 = vmatpush.msra.mxu0 0.0
  %2284 = vmatpush.msra.mxu0 0.0
  %2285 = vmatpush.msra.mxu0 0.0
  %2286 = vmatpush.msra.mxu0 0.0
  %2287 = vmatpush.msra.mxu0 0.0
  %2288 = vmatpush.msra.mxu0 0.0
  %2289 = vmatpush.msra.mxu0 0.0
  %2290 = vmatpush.msra.mxu0 0.0
  %2291 = vmatpush.msra.mxu0 0.0
  %2292 = vmatpush.msra.mxu0 0.0
  %2293 = vmatpush.msra.mxu0 0.0
  %2294 = vmatpush.msra.mxu0 %v2268
  %2295 = vmatpush.msra.mxu0 %v2265
  %2296 = vmatmul.f32.gmra.mxu0 %v2275
  %v2297 = vpop.f32.mrf.mxu0
  %v2298 = vadd.f32 0.0, %v2297
  %2299 = vmatmul.f32.gmra.mxu0 %v2278
  %v2300 = vpop.f32.mrf.mxu0
  %v2301 = vadd.f32 0.0, %v2300
  %2302 = vdwg.mxu0
  %2303 = vmatpush.msra.mxu0 0.0
  %2304 = vmatpush.msra.mxu0 0.0
  %2305 = vmatpush.msra.mxu0 0.0
  %2306 = vmatpush.msra.mxu0 0.0
  %2307 = vmatpush.msra.mxu0 0.0
  %2308 = vmatpush.msra.mxu0 0.0
  %2309 = vmatpush.msra.mxu0 0.0
  %2310 = vmatpush.msra.mxu0 0.0
  %2311 = vmatpush.msra.mxu0 0.0
  %2312 = vmatpush.msra.mxu0 0.0
  %2313 = vmatpush.msra.mxu0 0.0
  %2314 = vmatpush.msra.mxu0 0.0
  %2315 = vmatpush.msra.mxu0 0.0
  %2316 = vmatpush.msra.mxu0 0.0
  %2317 = vmatpush.msra.mxu0 %v2269
  %2318 = vmatpush.msra.mxu0 %v2266
  %2319 = vmatmul.f32.gmra.mxu0 %v2275
  %v2320 = vpop.f32.mrf.mxu0
  %v2321 = vadd.f32 0.0, %v2320
  %2322 = vmatmul.f32.gmra.mxu0 %v2278
  %v2323 = vpop.f32.mrf.mxu0
  %v2324 = vadd.f32 0.0, %v2323
  %2325 = vdwg.mxu0
  %2326 = vmatpush.msra.mxu0 0.0
  %2327 = vmatpush.msra.mxu0 0.0
  %2328 = vmatpush.msra.mxu0 0.0
  %2329 = vmatpush.msra.mxu0 0.0
  %2330 = vmatpush.msra.mxu0 0.0
  %2331 = vmatpush.msra.mxu0 0.0
  %2332 = vmatpush.msra.mxu0 0.0
  %2333 = vmatpush.msra.mxu0 0.0
  %2334 = vmatpush.msra.mxu0 0.0
  %2335 = vmatpush.msra.mxu0 0.0
  %2336 = vmatpush.msra.mxu0 0.0
  %2337 = vmatpush.msra.mxu0 0.0
  %2338 = vmatpush.msra.mxu0 0.0
  %2339 = vmatpush.msra.mxu0 0.0
  %2340 = vmatpush.msra.mxu0 %v2270
  %2341 = vmatpush.msra.mxu0 %v2267
  %2342 = vmatmul.f32.gmra.mxu0 %v2275
  %v2343 = vpop.f32.mrf.mxu0
  %v2344 = vadd.f32 0.0, %v2343
  %2345 = vmatmul.f32.gmra.mxu0 %v2278
  %v2346 = vpop.f32.mrf.mxu0
  %v2347 = vadd.f32 0.0, %v2346
  %2348 = vdwg.mxu0
  %v2349 = vadd.f32 %v2241, %v2298
  %v2350 = vadd.f32 %v2242, %v2321
  %v2351 = vadd.f32 %v2243, %v2344
  %v2352 = vadd.f32 %v2244, %v2301
  %v2353 = vadd.f32 %v2245, %v2324
  %v2354 = vadd.f32 %v2246, %v2347
  %2355 = vset.pattern.permute.xlu0 1
  %2356 = vperm.xlu0 %2355, %v101
  %v2357 = vpop.permute.xlu0 %2356
  %2359 = vset.pattern.permute.xlu0 1
  %2360 = vperm.xlu0 %2359, %v102
  %v2361 = vpop.permute.xlu0 %2360
  %v2363 = vadd.f32 %v2349, %v2357
  %v2364 = vadd.f32 %v2350, %v2357
  %v2365 = vadd.f32 %v2351, %v2357
  %v2366 = vadd.f32 %v2352, %v2361
  %v2367 = vadd.f32 %v2353, %v2361
  %v2368 = vadd.f32 %v2354, %v2361
  %vm2369 = vcmp.gt.f32.partialorder %v2363, 0.0
  %vm2370 = vcmp.gt.f32.partialorder %v2364, 0.0
  %vm2371 = vcmp.gt.f32.partialorder %v2365, 0.0
  %vm2372 = vcmp.gt.f32.partialorder %v2366, 0.0
  %vm2373 = vcmp.gt.f32.partialorder %v2367, 0.0
  %vm2374 = vcmp.gt.f32.partialorder %v2368, 0.0
  %v2375 = vmul.f32 %v2363, 0.2
  %v2376 = vmul.f32 %v2364, 0.2
  %v2377 = vmul.f32 %v2365, 0.2
  %v2378 = vmul.f32 %v2366, 0.2
  %v2379 = vmul.f32 %v2367, 0.2
  %v2380 = vmul.f32 %v2368, 0.2
  %v2381 = vsel %vm2369, %v2363, %v2375
  %v2382 = vsel %vm2370, %v2364, %v2376
  %v2383 = vsel %vm2371, %v2365, %v2377
  %v2384 = vsel %vm2372, %v2366, %v2378
  %v2385 = vsel %vm2373, %v2367, %v2379
  %v2386 = vsel %vm2374, %v2368, %v2380
  %2387 = vrot.lane.b32.xlu0 %v2381, 10
  %v2388 = vpop.permute.xlu0 %2387
  %2389 = vrot.lane.b32.xlu0 %v2384, 10
  %v2390 = vpop.permute.xlu0 %2389
  %2391 = vrot.lane.b32.xlu0 %v2382, 10
  %v2392 = vpop.permute.xlu0 %2391
  %2393 = vrot.lane.b32.xlu0 %v2385, 10
  %v2394 = vpop.permute.xlu0 %2393
  %2395 = vrot.lane.b32.xlu0 %v2383, 10
  %v2396 = vpop.permute.xlu0 %2395
  %2397 = vrot.lane.b32.xlu0 %v2386, 10
  %v2398 = vpop.permute.xlu0 %2397
  %v2399 = vsel %vm372, %v2392, %v2396
  %v2400 = vsel %vm372, %v2394, %v2398
  %v2401 = vsel %vm372, %v2388, %v2392
  %v2402 = vsel %vm372, %v2390, %v2394
  %v2403 = vsel %vm372, %v2396, %v2388
  %v2404 = vsel %vm372, %v2398, %v2390
  %v2405 = vmul.f32 %v2403, %v378
  %v2406 = vmul.f32 %v2401, %v379
  %v2407 = vmul.f32 %v2399, %v380
  %v2408 = vmul.f32 %v2404, %v378
  %v2409 = vmul.f32 %v2402, %v379
  %v2410 = vmul.f32 %v2400, %v380
  %v2411 = vld [vmem:[%s8] sm:$0x3f]
  %2412 = vrot.lane.b32.xlu0 %v2381, 9
  %v2413 = vpop.permute.xlu0 %2412
  %2414 = vrot.lane.b32.xlu0 %v2384, 9
  %v2415 = vpop.permute.xlu0 %2414
  %2416 = vrot.lane.b32.xlu0 %v2382, 9
  %v2417 = vpop.permute.xlu0 %2416
  %2418 = vrot.lane.b32.xlu0 %v2385, 9
  %v2419 = vpop.permute.xlu0 %2418
  %2420 = vrot.lane.b32.xlu0 %v2383, 9
  %v2421 = vpop.permute.xlu0 %2420
  %2422 = vrot.lane.b32.xlu0 %v2386, 9
  %v2423 = vpop.permute.xlu0 %2422
  %v2424 = vsel %vm395, %v2417, %v2421
  %v2425 = vsel %vm395, %v2419, %v2423
  %v2426 = vsel %vm395, %v2413, %v2417
  %v2427 = vsel %vm395, %v2415, %v2419
  %v2428 = vsel %vm395, %v2421, %v2413
  %v2429 = vsel %vm395, %v2423, %v2415
  %v2430 = vmul.f32 %v2428, %v402
  %v2431 = vmul.f32 %v2426, %v403
  %v2432 = vmul.f32 %v2424, %v404
  %v2433 = vmul.f32 %v2429, %v402
  %v2434 = vmul.f32 %v2427, %v403
  %v2435 = vmul.f32 %v2425, %v404
  %s2436 = scalar_lea.vmem %s8, 8
  %v2437 = vld [vmem:[%s2436] sm:$0x3f]
  %v2439 = vsel %vm1466, %v2437, 0
  %2441 = vmatpush.msra.mxu0 0.0
  %2442 = vmatpush.msra.mxu0 0.0
  %2443 = vmatpush.msra.mxu0 0.0
  %2444 = vmatpush.msra.mxu0 0.0
  %2445 = vmatpush.msra.mxu0 0.0
  %2446 = vmatpush.msra.mxu0 0.0
  %2447 = vmatpush.msra.mxu0 0.0
  %2448 = vmatpush.msra.mxu0 0.0
  %2449 = vmatpush.msra.mxu0 0.0
  %2450 = vmatpush.msra.mxu0 0.0
  %2451 = vmatpush.msra.mxu0 0.0
  %2452 = vmatpush.msra.mxu0 0.0
  %2453 = vmatpush.msra.mxu0 0.0
  %2454 = vmatpush.msra.mxu0 0.0
  %2455 = vmatpush.msra.mxu0 %v2433
  %2456 = vmatpush.msra.mxu0 %v2430
  %2457 = vmatmul.f32.gmra.mxu0 %v2439
  %v2458 = vpop.f32.mrf.mxu0
  %v2459 = vadd.f32 0.0, %v2458
  %2460 = vdwg.mxu0
  %2461 = vmatpush.msra.mxu0 0.0
  %2462 = vmatpush.msra.mxu0 0.0
  %2463 = vmatpush.msra.mxu0 0.0
  %2464 = vmatpush.msra.mxu0 0.0
  %2465 = vmatpush.msra.mxu0 0.0
  %2466 = vmatpush.msra.mxu0 0.0
  %2467 = vmatpush.msra.mxu0 0.0
  %2468 = vmatpush.msra.mxu0 0.0
  %2469 = vmatpush.msra.mxu0 0.0
  %2470 = vmatpush.msra.mxu0 0.0
  %2471 = vmatpush.msra.mxu0 0.0
  %2472 = vmatpush.msra.mxu0 0.0
  %2473 = vmatpush.msra.mxu0 0.0
  %2474 = vmatpush.msra.mxu0 0.0
  %2475 = vmatpush.msra.mxu0 %v2434
  %2476 = vmatpush.msra.mxu0 %v2431
  %2477 = vmatmul.f32.gmra.mxu0 %v2439
  %v2478 = vpop.f32.mrf.mxu0
  %v2479 = vadd.f32 0.0, %v2478
  %2480 = vdwg.mxu0
  %2481 = vmatpush.msra.mxu0 0.0
  %2482 = vmatpush.msra.mxu0 0.0
  %2483 = vmatpush.msra.mxu0 0.0
  %2484 = vmatpush.msra.mxu0 0.0
  %2485 = vmatpush.msra.mxu0 0.0
  %2486 = vmatpush.msra.mxu0 0.0
  %2487 = vmatpush.msra.mxu0 0.0
  %2488 = vmatpush.msra.mxu0 0.0
  %2489 = vmatpush.msra.mxu0 0.0
  %2490 = vmatpush.msra.mxu0 0.0
  %2491 = vmatpush.msra.mxu0 0.0
  %2492 = vmatpush.msra.mxu0 0.0
  %2493 = vmatpush.msra.mxu0 0.0
  %2494 = vmatpush.msra.mxu0 0.0
  %2495 = vmatpush.msra.mxu0 %v2435
  %2496 = vmatpush.msra.mxu0 %v2432
  %2497 = vmatmul.f32.gmra.mxu0 %v2439
  %v2498 = vpop.f32.mrf.mxu0
  %v2499 = vadd.f32 0.0, %v2498
  %2500 = vdwg.mxu0
  %v2502 = vsel %vm1466, %v2411, 0
  %2504 = vmatpush.msra.mxu0 0.0
  %2505 = vmatpush.msra.mxu0 0.0
  %2506 = vmatpush.msra.mxu0 0.0
  %2507 = vmatpush.msra.mxu0 0.0
  %2508 = vmatpush.msra.mxu0 0.0
  %2509 = vmatpush.msra.mxu0 0.0
  %2510 = vmatpush.msra.mxu0 0.0
  %2511 = vmatpush.msra.mxu0 0.0
  %2512 = vmatpush.msra.mxu0 0.0
  %2513 = vmatpush.msra.mxu0 0.0
  %2514 = vmatpush.msra.mxu0 0.0
  %2515 = vmatpush.msra.mxu0 0.0
  %2516 = vmatpush.msra.mxu0 0.0
  %2517 = vmatpush.msra.mxu0 0.0
  %2518 = vmatpush.msra.mxu0 %v2408
  %2519 = vmatpush.msra.mxu0 %v2405
  %2520 = vmatmul.f32.gmra.mxu0 %v2502
  %v2521 = vpop.f32.mrf.mxu0
  %v2522 = vadd.f32 %v2459, %v2521
  %2523 = vdwg.mxu0
  %2524 = vmatpush.msra.mxu0 0.0
  %2525 = vmatpush.msra.mxu0 0.0
  %2526 = vmatpush.msra.mxu0 0.0
  %2527 = vmatpush.msra.mxu0 0.0
  %2528 = vmatpush.msra.mxu0 0.0
  %2529 = vmatpush.msra.mxu0 0.0
  %2530 = vmatpush.msra.mxu0 0.0
  %2531 = vmatpush.msra.mxu0 0.0
  %2532 = vmatpush.msra.mxu0 0.0
  %2533 = vmatpush.msra.mxu0 0.0
  %2534 = vmatpush.msra.mxu0 0.0
  %2535 = vmatpush.msra.mxu0 0.0
  %2536 = vmatpush.msra.mxu0 0.0
  %2537 = vmatpush.msra.mxu0 0.0
  %2538 = vmatpush.msra.mxu0 %v2409
  %2539 = vmatpush.msra.mxu0 %v2406
  %2540 = vmatmul.f32.gmra.mxu0 %v2502
  %v2541 = vpop.f32.mrf.mxu0
  %v2542 = vadd.f32 %v2479, %v2541
  %2543 = vdwg.mxu0
  %2544 = vmatpush.msra.mxu0 0.0
  %2545 = vmatpush.msra.mxu0 0.0
  %2546 = vmatpush.msra.mxu0 0.0
  %2547 = vmatpush.msra.mxu0 0.0
  %2548 = vmatpush.msra.mxu0 0.0
  %2549 = vmatpush.msra.mxu0 0.0
  %2550 = vmatpush.msra.mxu0 0.0
  %2551 = vmatpush.msra.mxu0 0.0
  %2552 = vmatpush.msra.mxu0 0.0
  %2553 = vmatpush.msra.mxu0 0.0
  %2554 = vmatpush.msra.mxu0 0.0
  %2555 = vmatpush.msra.mxu0 0.0
  %2556 = vmatpush.msra.mxu0 0.0
  %2557 = vmatpush.msra.mxu0 0.0
  %2558 = vmatpush.msra.mxu0 %v2410
  %2559 = vmatpush.msra.mxu0 %v2407
  %2560 = vmatmul.f32.gmra.mxu0 %v2502
  %v2561 = vpop.f32.mrf.mxu0
  %v2562 = vadd.f32 %v2499, %v2561
  %2563 = vdwg.mxu0
  %2564 = vrot.lane.b32.xlu0 %v2381, 8
  %v2565 = vpop.permute.xlu0 %2564
  %2566 = vrot.lane.b32.xlu0 %v2384, 8
  %v2567 = vpop.permute.xlu0 %2566
  %2568 = vrot.lane.b32.xlu0 %v2382, 8
  %v2569 = vpop.permute.xlu0 %2568
  %2570 = vrot.lane.b32.xlu0 %v2385, 8
  %v2571 = vpop.permute.xlu0 %2570
  %2572 = vrot.lane.b32.xlu0 %v2383, 8
  %v2573 = vpop.permute.xlu0 %2572
  %2574 = vrot.lane.b32.xlu0 %v2386, 8
  %v2575 = vpop.permute.xlu0 %2574
  %v2576 = vsel %vm590, %v2569, %v2573
  %v2577 = vsel %vm590, %v2571, %v2575
  %v2578 = vsel %vm590, %v2565, %v2569
  %v2579 = vsel %vm590, %v2567, %v2571
  %v2580 = vsel %vm590, %v2573, %v2565
  %v2581 = vsel %vm590, %v2575, %v2567
  %v2582 = vmul.f32 %v2580, %v597
  %v2583 = vmul.f32 %v2578, %v598
  %v2584 = vmul.f32 %v2576, %v599
  %v2585 = vmul.f32 %v2581, %v597
  %v2586 = vmul.f32 %v2579, %v598
  %v2587 = vmul.f32 %v2577, %v599
  %s2588 = scalar_lea.vmem %s8, 16
  %v2589 = vld [vmem:[%s2588] sm:$0x3f]
  %v2591 = vsel %vm1466, %v2589, 0
  %2593 = vmatpush.msra.mxu0 0.0
  %2594 = vmatpush.msra.mxu0 0.0
  %2595 = vmatpush.msra.mxu0 0.0
  %2596 = vmatpush.msra.mxu0 0.0
  %2597 = vmatpush.msra.mxu0 0.0
  %2598 = vmatpush.msra.mxu0 0.0
  %2599 = vmatpush.msra.mxu0 0.0
  %2600 = vmatpush.msra.mxu0 0.0
  %2601 = vmatpush.msra.mxu0 0.0
  %2602 = vmatpush.msra.mxu0 0.0
  %2603 = vmatpush.msra.mxu0 0.0
  %2604 = vmatpush.msra.mxu0 0.0
  %2605 = vmatpush.msra.mxu0 0.0
  %2606 = vmatpush.msra.mxu0 0.0
  %2607 = vmatpush.msra.mxu0 %v2585
  %2608 = vmatpush.msra.mxu0 %v2582
  %2609 = vmatmul.f32.gmra.mxu0 %v2591
  %v2610 = vpop.f32.mrf.mxu0
  %v2611 = vadd.f32 0.0, %v2610
  %2612 = vdwg.mxu0
  %2613 = vmatpush.msra.mxu0 0.0
  %2614 = vmatpush.msra.mxu0 0.0
  %2615 = vmatpush.msra.mxu0 0.0
  %2616 = vmatpush.msra.mxu0 0.0
  %2617 = vmatpush.msra.mxu0 0.0
  %2618 = vmatpush.msra.mxu0 0.0
  %2619 = vmatpush.msra.mxu0 0.0
  %2620 = vmatpush.msra.mxu0 0.0
  %2621 = vmatpush.msra.mxu0 0.0
  %2622 = vmatpush.msra.mxu0 0.0
  %2623 = vmatpush.msra.mxu0 0.0
  %2624 = vmatpush.msra.mxu0 0.0
  %2625 = vmatpush.msra.mxu0 0.0
  %2626 = vmatpush.msra.mxu0 0.0
  %2627 = vmatpush.msra.mxu0 %v2586
  %2628 = vmatpush.msra.mxu0 %v2583
  %2629 = vmatmul.f32.gmra.mxu0 %v2591
  %v2630 = vpop.f32.mrf.mxu0
  %v2631 = vadd.f32 0.0, %v2630
  %2632 = vdwg.mxu0
  %2633 = vmatpush.msra.mxu0 0.0
  %2634 = vmatpush.msra.mxu0 0.0
  %2635 = vmatpush.msra.mxu0 0.0
  %2636 = vmatpush.msra.mxu0 0.0
  %2637 = vmatpush.msra.mxu0 0.0
  %2638 = vmatpush.msra.mxu0 0.0
  %2639 = vmatpush.msra.mxu0 0.0
  %2640 = vmatpush.msra.mxu0 0.0
  %2641 = vmatpush.msra.mxu0 0.0
  %2642 = vmatpush.msra.mxu0 0.0
  %2643 = vmatpush.msra.mxu0 0.0
  %2644 = vmatpush.msra.mxu0 0.0
  %2645 = vmatpush.msra.mxu0 0.0
  %2646 = vmatpush.msra.mxu0 0.0
  %2647 = vmatpush.msra.mxu0 %v2587
  %2648 = vmatpush.msra.mxu0 %v2584
  %2649 = vmatmul.f32.gmra.mxu0 %v2591
  %v2650 = vpop.f32.mrf.mxu0
  %v2651 = vadd.f32 0.0, %v2650
  %2652 = vdwg.mxu0
  %v2653 = vadd.f32 %v2522, %v2611
  %v2654 = vadd.f32 %v2542, %v2631
  %v2655 = vadd.f32 %v2562, %v2651
  %2656 = vrot.lane.b32.xlu0 %v2381, 1
  %v2657 = vpop.permute.xlu0 %2656
  %2658 = vrot.lane.b32.xlu0 %v2384, 1
  %v2659 = vpop.permute.xlu0 %2658
  %2660 = vrot.lane.b32.xlu0 %v2382, 1
  %v2661 = vpop.permute.xlu0 %2660
  %2662 = vrot.lane.b32.xlu0 %v2385, 1
  %v2663 = vpop.permute.xlu0 %2662
  %2664 = vrot.lane.b32.xlu0 %v2383, 1
  %v2665 = vpop.permute.xlu0 %2664
  %2666 = vrot.lane.b32.xlu0 %v2386, 1
  %v2667 = vpop.permute.xlu0 %2666
  %v2668 = vsel %vm705, %v2661, %v2665
  %v2669 = vsel %vm705, %v2663, %v2667
  %v2670 = vsel %vm705, %v2657, %v2661
  %v2671 = vsel %vm705, %v2659, %v2663
  %v2672 = vsel %vm705, %v2665, %v2657
  %v2673 = vsel %vm705, %v2667, %v2659
  %v2674 = vmul.f32 %v2672, %v712
  %v2675 = vmul.f32 %v2670, %v713
  %v2676 = vmul.f32 %v2668, %v714
  %v2677 = vmul.f32 %v2673, %v712
  %v2678 = vmul.f32 %v2671, %v713
  %v2679 = vmul.f32 %v2669, %v714
  %s2680 = scalar_lea.vmem %s8, 24
  %v2681 = vld [vmem:[%s2680] sm:$0x3f]
  %v2683 = vsel %vm1466, %v2681, 0
  %2685 = vmatpush.msra.mxu0 0.0
  %2686 = vmatpush.msra.mxu0 0.0
  %2687 = vmatpush.msra.mxu0 0.0
  %2688 = vmatpush.msra.mxu0 0.0
  %2689 = vmatpush.msra.mxu0 0.0
  %2690 = vmatpush.msra.mxu0 0.0
  %2691 = vmatpush.msra.mxu0 0.0
  %2692 = vmatpush.msra.mxu0 0.0
  %2693 = vmatpush.msra.mxu0 0.0
  %2694 = vmatpush.msra.mxu0 0.0
  %2695 = vmatpush.msra.mxu0 0.0
  %2696 = vmatpush.msra.mxu0 0.0
  %2697 = vmatpush.msra.mxu0 0.0
  %2698 = vmatpush.msra.mxu0 0.0
  %2699 = vmatpush.msra.mxu0 %v2677
  %2700 = vmatpush.msra.mxu0 %v2674
  %2701 = vmatmul.f32.gmra.mxu0 %v2683
  %v2702 = vpop.f32.mrf.mxu0
  %v2703 = vadd.f32 0.0, %v2702
  %2704 = vdwg.mxu0
  %2705 = vmatpush.msra.mxu0 0.0
  %2706 = vmatpush.msra.mxu0 0.0
  %2707 = vmatpush.msra.mxu0 0.0
  %2708 = vmatpush.msra.mxu0 0.0
  %2709 = vmatpush.msra.mxu0 0.0
  %2710 = vmatpush.msra.mxu0 0.0
  %2711 = vmatpush.msra.mxu0 0.0
  %2712 = vmatpush.msra.mxu0 0.0
  %2713 = vmatpush.msra.mxu0 0.0
  %2714 = vmatpush.msra.mxu0 0.0
  %2715 = vmatpush.msra.mxu0 0.0
  %2716 = vmatpush.msra.mxu0 0.0
  %2717 = vmatpush.msra.mxu0 0.0
  %2718 = vmatpush.msra.mxu0 0.0
  %2719 = vmatpush.msra.mxu0 %v2678
  %2720 = vmatpush.msra.mxu0 %v2675
  %2721 = vmatmul.f32.gmra.mxu0 %v2683
  %v2722 = vpop.f32.mrf.mxu0
  %v2723 = vadd.f32 0.0, %v2722
  %2724 = vdwg.mxu0
  %2725 = vmatpush.msra.mxu0 0.0
  %2726 = vmatpush.msra.mxu0 0.0
  %2727 = vmatpush.msra.mxu0 0.0
  %2728 = vmatpush.msra.mxu0 0.0
  %2729 = vmatpush.msra.mxu0 0.0
  %2730 = vmatpush.msra.mxu0 0.0
  %2731 = vmatpush.msra.mxu0 0.0
  %2732 = vmatpush.msra.mxu0 0.0
  %2733 = vmatpush.msra.mxu0 0.0
  %2734 = vmatpush.msra.mxu0 0.0
  %2735 = vmatpush.msra.mxu0 0.0
  %2736 = vmatpush.msra.mxu0 0.0
  %2737 = vmatpush.msra.mxu0 0.0
  %2738 = vmatpush.msra.mxu0 0.0
  %2739 = vmatpush.msra.mxu0 %v2679
  %2740 = vmatpush.msra.mxu0 %v2676
  %2741 = vmatmul.f32.gmra.mxu0 %v2683
  %v2742 = vpop.f32.mrf.mxu0
  %v2743 = vadd.f32 0.0, %v2742
  %2744 = vdwg.mxu0
  %v2745 = vadd.f32 %v2653, %v2703
  %v2746 = vadd.f32 %v2654, %v2723
  %v2747 = vadd.f32 %v2655, %v2743
  %v2748 = vmul.f32 %v2381, %v817
  %v2749 = vmul.f32 %v2382, %v818
  %v2750 = vmul.f32 %v2383, %v819
  %v2751 = vmul.f32 %v2384, %v817
  %v2752 = vmul.f32 %v2385, %v818
  %v2753 = vmul.f32 %v2386, %v819
  %s2754 = scalar_lea.vmem %s8, 32
  %v2755 = vld [vmem:[%s2754] sm:$0x3f]
  %v2757 = vsel %vm1466, %v2755, 0
  %2759 = vmatpush.msra.mxu0 0.0
  %2760 = vmatpush.msra.mxu0 0.0
  %2761 = vmatpush.msra.mxu0 0.0
  %2762 = vmatpush.msra.mxu0 0.0
  %2763 = vmatpush.msra.mxu0 0.0
  %2764 = vmatpush.msra.mxu0 0.0
  %2765 = vmatpush.msra.mxu0 0.0
  %2766 = vmatpush.msra.mxu0 0.0
  %2767 = vmatpush.msra.mxu0 0.0
  %2768 = vmatpush.msra.mxu0 0.0
  %2769 = vmatpush.msra.mxu0 0.0
  %2770 = vmatpush.msra.mxu0 0.0
  %2771 = vmatpush.msra.mxu0 0.0
  %2772 = vmatpush.msra.mxu0 0.0
  %2773 = vmatpush.msra.mxu0 %v2751
  %2774 = vmatpush.msra.mxu0 %v2748
  %2775 = vmatmul.f32.gmra.mxu0 %v2757
  %v2776 = vpop.f32.mrf.mxu0
  %v2777 = vadd.f32 0.0, %v2776
  %2778 = vdwg.mxu0
  %2779 = vmatpush.msra.mxu0 0.0
  %2780 = vmatpush.msra.mxu0 0.0
  %2781 = vmatpush.msra.mxu0 0.0
  %2782 = vmatpush.msra.mxu0 0.0
  %2783 = vmatpush.msra.mxu0 0.0
  %2784 = vmatpush.msra.mxu0 0.0
  %2785 = vmatpush.msra.mxu0 0.0
  %2786 = vmatpush.msra.mxu0 0.0
  %2787 = vmatpush.msra.mxu0 0.0
  %2788 = vmatpush.msra.mxu0 0.0
  %2789 = vmatpush.msra.mxu0 0.0
  %2790 = vmatpush.msra.mxu0 0.0
  %2791 = vmatpush.msra.mxu0 0.0
  %2792 = vmatpush.msra.mxu0 0.0
  %2793 = vmatpush.msra.mxu0 %v2752
  %2794 = vmatpush.msra.mxu0 %v2749
  %2795 = vmatmul.f32.gmra.mxu0 %v2757
  %v2796 = vpop.f32.mrf.mxu0
  %v2797 = vadd.f32 0.0, %v2796
  %2798 = vdwg.mxu0
  %2799 = vmatpush.msra.mxu0 0.0
  %2800 = vmatpush.msra.mxu0 0.0
  %2801 = vmatpush.msra.mxu0 0.0
  %2802 = vmatpush.msra.mxu0 0.0
  %2803 = vmatpush.msra.mxu0 0.0
  %2804 = vmatpush.msra.mxu0 0.0
  %2805 = vmatpush.msra.mxu0 0.0
  %2806 = vmatpush.msra.mxu0 0.0
  %2807 = vmatpush.msra.mxu0 0.0
  %2808 = vmatpush.msra.mxu0 0.0
  %2809 = vmatpush.msra.mxu0 0.0
  %2810 = vmatpush.msra.mxu0 0.0
  %2811 = vmatpush.msra.mxu0 0.0
  %2812 = vmatpush.msra.mxu0 0.0
  %2813 = vmatpush.msra.mxu0 %v2753
  %2814 = vmatpush.msra.mxu0 %v2750
  %2815 = vmatmul.f32.gmra.mxu0 %v2757
  %v2816 = vpop.f32.mrf.mxu0
  %v2817 = vadd.f32 0.0, %v2816
  %2818 = vdwg.mxu0
  %v2819 = vadd.f32 %v2745, %v2777
  %v2820 = vadd.f32 %v2746, %v2797
  %v2821 = vadd.f32 %v2747, %v2817
  %2822 = vrot.lane.b32.xlu0 %v2381, 127
  %v2823 = vpop.permute.xlu0 %2822
  %2824 = vrot.lane.b32.xlu0 %v2384, 127
  %v2825 = vpop.permute.xlu0 %2824
  %2826 = vrot.lane.b32.xlu0 %v2382, 127
  %v2827 = vpop.permute.xlu0 %2826
  %2828 = vrot.lane.b32.xlu0 %v2385, 127
  %v2829 = vpop.permute.xlu0 %2828
  %2830 = vrot.lane.b32.xlu0 %v2383, 127
  %v2831 = vpop.permute.xlu0 %2830
  %2832 = vrot.lane.b32.xlu0 %v2386, 127
  %v2833 = vpop.permute.xlu0 %2832
  %v2834 = vsel %vm925, %v2827, %v2831
  %v2835 = vsel %vm925, %v2829, %v2833
  %v2836 = vsel %vm925, %v2823, %v2827
  %v2837 = vsel %vm925, %v2825, %v2829
  %v2838 = vsel %vm925, %v2831, %v2823
  %v2839 = vsel %vm925, %v2833, %v2825
  %v2840 = vmul.f32 %v2836, %v932
  %v2841 = vmul.f32 %v2834, %v933
  %v2842 = vmul.f32 %v2838, %v934
  %v2843 = vmul.f32 %v2837, %v932
  %v2844 = vmul.f32 %v2835, %v933
  %v2845 = vmul.f32 %v2839, %v934
  %s2846 = scalar_lea.vmem %s8, 40
  %v2847 = vld [vmem:[%s2846] sm:$0x3f]
  %v2849 = vsel %vm1466, %v2847, 0
  %2851 = vmatpush.msra.mxu0 0.0
  %2852 = vmatpush.msra.mxu0 0.0
  %2853 = vmatpush.msra.mxu0 0.0
  %2854 = vmatpush.msra.mxu0 0.0
  %2855 = vmatpush.msra.mxu0 0.0
  %2856 = vmatpush.msra.mxu0 0.0
  %2857 = vmatpush.msra.mxu0 0.0
  %2858 = vmatpush.msra.mxu0 0.0
  %2859 = vmatpush.msra.mxu0 0.0
  %2860 = vmatpush.msra.mxu0 0.0
  %2861 = vmatpush.msra.mxu0 0.0
  %2862 = vmatpush.msra.mxu0 0.0
  %2863 = vmatpush.msra.mxu0 0.0
  %2864 = vmatpush.msra.mxu0 0.0
  %2865 = vmatpush.msra.mxu0 %v2843
  %2866 = vmatpush.msra.mxu0 %v2840
  %2867 = vmatmul.f32.gmra.mxu0 %v2849
  %v2868 = vpop.f32.mrf.mxu0
  %v2869 = vadd.f32 0.0, %v2868
  %2870 = vdwg.mxu0
  %2871 = vmatpush.msra.mxu0 0.0
  %2872 = vmatpush.msra.mxu0 0.0
  %2873 = vmatpush.msra.mxu0 0.0
  %2874 = vmatpush.msra.mxu0 0.0
  %2875 = vmatpush.msra.mxu0 0.0
  %2876 = vmatpush.msra.mxu0 0.0
  %2877 = vmatpush.msra.mxu0 0.0
  %2878 = vmatpush.msra.mxu0 0.0
  %2879 = vmatpush.msra.mxu0 0.0
  %2880 = vmatpush.msra.mxu0 0.0
  %2881 = vmatpush.msra.mxu0 0.0
  %2882 = vmatpush.msra.mxu0 0.0
  %2883 = vmatpush.msra.mxu0 0.0
  %2884 = vmatpush.msra.mxu0 0.0
  %2885 = vmatpush.msra.mxu0 %v2844
  %2886 = vmatpush.msra.mxu0 %v2841
  %2887 = vmatmul.f32.gmra.mxu0 %v2849
  %v2888 = vpop.f32.mrf.mxu0
  %v2889 = vadd.f32 0.0, %v2888
  %2890 = vdwg.mxu0
  %2891 = vmatpush.msra.mxu0 0.0
  %2892 = vmatpush.msra.mxu0 0.0
  %2893 = vmatpush.msra.mxu0 0.0
  %2894 = vmatpush.msra.mxu0 0.0
  %2895 = vmatpush.msra.mxu0 0.0
  %2896 = vmatpush.msra.mxu0 0.0
  %2897 = vmatpush.msra.mxu0 0.0
  %2898 = vmatpush.msra.mxu0 0.0
  %2899 = vmatpush.msra.mxu0 0.0
  %2900 = vmatpush.msra.mxu0 0.0
  %2901 = vmatpush.msra.mxu0 0.0
  %2902 = vmatpush.msra.mxu0 0.0
  %2903 = vmatpush.msra.mxu0 0.0
  %2904 = vmatpush.msra.mxu0 0.0
  %2905 = vmatpush.msra.mxu0 %v2845
  %2906 = vmatpush.msra.mxu0 %v2842
  %2907 = vmatmul.f32.gmra.mxu0 %v2849
  %v2908 = vpop.f32.mrf.mxu0
  %v2909 = vadd.f32 0.0, %v2908
  %2910 = vdwg.mxu0
  %v2911 = vadd.f32 %v2819, %v2869
  %v2912 = vadd.f32 %v2820, %v2889
  %v2913 = vadd.f32 %v2821, %v2909
  %2914 = vrot.lane.b32.xlu0 %v2381, 120
  %v2915 = vpop.permute.xlu0 %2914
  %2916 = vrot.lane.b32.xlu0 %v2384, 120
  %v2917 = vpop.permute.xlu0 %2916
  %2918 = vrot.lane.b32.xlu0 %v2382, 120
  %v2919 = vpop.permute.xlu0 %2918
  %2920 = vrot.lane.b32.xlu0 %v2385, 120
  %v2921 = vpop.permute.xlu0 %2920
  %2922 = vrot.lane.b32.xlu0 %v2383, 120
  %v2923 = vpop.permute.xlu0 %2922
  %2924 = vrot.lane.b32.xlu0 %v2386, 120
  %v2925 = vpop.permute.xlu0 %2924
  %v2926 = vsel %vm1040, %v2919, %v2923
  %v2927 = vsel %vm1040, %v2921, %v2925
  %v2928 = vsel %vm1040, %v2915, %v2919
  %v2929 = vsel %vm1040, %v2917, %v2921
  %v2930 = vsel %vm1040, %v2923, %v2915
  %v2931 = vsel %vm1040, %v2925, %v2917
  %v2932 = vmul.f32 %v2928, %v1047
  %v2933 = vmul.f32 %v2926, %v1048
  %v2934 = vmul.f32 %v2930, %v1049
  %v2935 = vmul.f32 %v2929, %v1047
  %v2936 = vmul.f32 %v2927, %v1048
  %v2937 = vmul.f32 %v2931, %v1049
  %s2938 = scalar_lea.vmem %s8, 48
  %v2939 = vld [vmem:[%s2938] sm:$0x3f]
  %v2941 = vsel %vm1466, %v2939, 0
  %2943 = vmatpush.msra.mxu0 0.0
  %2944 = vmatpush.msra.mxu0 0.0
  %2945 = vmatpush.msra.mxu0 0.0
  %2946 = vmatpush.msra.mxu0 0.0
  %2947 = vmatpush.msra.mxu0 0.0
  %2948 = vmatpush.msra.mxu0 0.0
  %2949 = vmatpush.msra.mxu0 0.0
  %2950 = vmatpush.msra.mxu0 0.0
  %2951 = vmatpush.msra.mxu0 0.0
  %2952 = vmatpush.msra.mxu0 0.0
  %2953 = vmatpush.msra.mxu0 0.0
  %2954 = vmatpush.msra.mxu0 0.0
  %2955 = vmatpush.msra.mxu0 0.0
  %2956 = vmatpush.msra.mxu0 0.0
  %2957 = vmatpush.msra.mxu0 %v2935
  %2958 = vmatpush.msra.mxu0 %v2932
  %2959 = vmatmul.f32.gmra.mxu0 %v2941
  %v2960 = vpop.f32.mrf.mxu0
  %v2961 = vadd.f32 0.0, %v2960
  %2962 = vdwg.mxu0
  %2963 = vmatpush.msra.mxu0 0.0
  %2964 = vmatpush.msra.mxu0 0.0
  %2965 = vmatpush.msra.mxu0 0.0
  %2966 = vmatpush.msra.mxu0 0.0
  %2967 = vmatpush.msra.mxu0 0.0
  %2968 = vmatpush.msra.mxu0 0.0
  %2969 = vmatpush.msra.mxu0 0.0
  %2970 = vmatpush.msra.mxu0 0.0
  %2971 = vmatpush.msra.mxu0 0.0
  %2972 = vmatpush.msra.mxu0 0.0
  %2973 = vmatpush.msra.mxu0 0.0
  %2974 = vmatpush.msra.mxu0 0.0
  %2975 = vmatpush.msra.mxu0 0.0
  %2976 = vmatpush.msra.mxu0 0.0
  %2977 = vmatpush.msra.mxu0 %v2936
  %2978 = vmatpush.msra.mxu0 %v2933
  %2979 = vmatmul.f32.gmra.mxu0 %v2941
  %v2980 = vpop.f32.mrf.mxu0
  %v2981 = vadd.f32 0.0, %v2980
  %2982 = vdwg.mxu0
  %2983 = vmatpush.msra.mxu0 0.0
  %2984 = vmatpush.msra.mxu0 0.0
  %2985 = vmatpush.msra.mxu0 0.0
  %2986 = vmatpush.msra.mxu0 0.0
  %2987 = vmatpush.msra.mxu0 0.0
  %2988 = vmatpush.msra.mxu0 0.0
  %2989 = vmatpush.msra.mxu0 0.0
  %2990 = vmatpush.msra.mxu0 0.0
  %2991 = vmatpush.msra.mxu0 0.0
  %2992 = vmatpush.msra.mxu0 0.0
  %2993 = vmatpush.msra.mxu0 0.0
  %2994 = vmatpush.msra.mxu0 0.0
  %2995 = vmatpush.msra.mxu0 0.0
  %2996 = vmatpush.msra.mxu0 0.0
  %2997 = vmatpush.msra.mxu0 %v2937
  %2998 = vmatpush.msra.mxu0 %v2934
  %2999 = vmatmul.f32.gmra.mxu0 %v2941
  %v3000 = vpop.f32.mrf.mxu0
  %v3001 = vadd.f32 0.0, %v3000
  %3002 = vdwg.mxu0
  %v3003 = vadd.f32 %v2911, %v2961
  %v3004 = vadd.f32 %v2912, %v2981
  %v3005 = vadd.f32 %v2913, %v3001
  %3006 = vrot.lane.b32.xlu0 %v2381, 119
  %v3007 = vpop.permute.xlu0 %3006
  %3008 = vrot.lane.b32.xlu0 %v2384, 119
  %v3009 = vpop.permute.xlu0 %3008
  %3010 = vrot.lane.b32.xlu0 %v2382, 119
  %v3011 = vpop.permute.xlu0 %3010
  %3012 = vrot.lane.b32.xlu0 %v2385, 119
  %v3013 = vpop.permute.xlu0 %3012
  %3014 = vrot.lane.b32.xlu0 %v2383, 119
  %v3015 = vpop.permute.xlu0 %3014
  %3016 = vrot.lane.b32.xlu0 %v2386, 119
  %v3017 = vpop.permute.xlu0 %3016
  %v3018 = vsel %vm1155, %v3011, %v3015
  %v3019 = vsel %vm1155, %v3013, %v3017
  %v3020 = vsel %vm1155, %v3007, %v3011
  %v3021 = vsel %vm1155, %v3009, %v3013
  %v3022 = vsel %vm1155, %v3015, %v3007
  %v3023 = vsel %vm1155, %v3017, %v3009
  %v3024 = vmul.f32 %v3020, %v1162
  %v3025 = vmul.f32 %v3018, %v1163
  %v3026 = vmul.f32 %v3022, %v1164
  %v3027 = vmul.f32 %v3021, %v1162
  %v3028 = vmul.f32 %v3019, %v1163
  %v3029 = vmul.f32 %v3023, %v1164
  %s3030 = scalar_lea.vmem %s8, 56
  %v3031 = vld [vmem:[%s3030] sm:$0x3f]
  %v3033 = vsel %vm1466, %v3031, 0
  %3035 = vmatpush.msra.mxu0 0.0
  %3036 = vmatpush.msra.mxu0 0.0
  %3037 = vmatpush.msra.mxu0 0.0
  %3038 = vmatpush.msra.mxu0 0.0
  %3039 = vmatpush.msra.mxu0 0.0
  %3040 = vmatpush.msra.mxu0 0.0
  %3041 = vmatpush.msra.mxu0 0.0
  %3042 = vmatpush.msra.mxu0 0.0
  %3043 = vmatpush.msra.mxu0 0.0
  %3044 = vmatpush.msra.mxu0 0.0
  %3045 = vmatpush.msra.mxu0 0.0
  %3046 = vmatpush.msra.mxu0 0.0
  %3047 = vmatpush.msra.mxu0 0.0
  %3048 = vmatpush.msra.mxu0 0.0
  %3049 = vmatpush.msra.mxu0 %v3027
  %3050 = vmatpush.msra.mxu0 %v3024
  %3051 = vmatmul.f32.gmra.mxu0 %v3033
  %v3052 = vpop.f32.mrf.mxu0
  %v3053 = vadd.f32 0.0, %v3052
  %3054 = vdwg.mxu0
  %3055 = vmatpush.msra.mxu0 0.0
  %3056 = vmatpush.msra.mxu0 0.0
  %3057 = vmatpush.msra.mxu0 0.0
  %3058 = vmatpush.msra.mxu0 0.0
  %3059 = vmatpush.msra.mxu0 0.0
  %3060 = vmatpush.msra.mxu0 0.0
  %3061 = vmatpush.msra.mxu0 0.0
  %3062 = vmatpush.msra.mxu0 0.0
  %3063 = vmatpush.msra.mxu0 0.0
  %3064 = vmatpush.msra.mxu0 0.0
  %3065 = vmatpush.msra.mxu0 0.0
  %3066 = vmatpush.msra.mxu0 0.0
  %3067 = vmatpush.msra.mxu0 0.0
  %3068 = vmatpush.msra.mxu0 0.0
  %3069 = vmatpush.msra.mxu0 %v3028
  %3070 = vmatpush.msra.mxu0 %v3025
  %3071 = vmatmul.f32.gmra.mxu0 %v3033
  %v3072 = vpop.f32.mrf.mxu0
  %v3073 = vadd.f32 0.0, %v3072
  %3074 = vdwg.mxu0
  %3075 = vmatpush.msra.mxu0 0.0
  %3076 = vmatpush.msra.mxu0 0.0
  %3077 = vmatpush.msra.mxu0 0.0
  %3078 = vmatpush.msra.mxu0 0.0
  %3079 = vmatpush.msra.mxu0 0.0
  %3080 = vmatpush.msra.mxu0 0.0
  %3081 = vmatpush.msra.mxu0 0.0
  %3082 = vmatpush.msra.mxu0 0.0
  %3083 = vmatpush.msra.mxu0 0.0
  %3084 = vmatpush.msra.mxu0 0.0
  %3085 = vmatpush.msra.mxu0 0.0
  %3086 = vmatpush.msra.mxu0 0.0
  %3087 = vmatpush.msra.mxu0 0.0
  %3088 = vmatpush.msra.mxu0 0.0
  %3089 = vmatpush.msra.mxu0 %v3029
  %3090 = vmatpush.msra.mxu0 %v3026
  %3091 = vmatmul.f32.gmra.mxu0 %v3033
  %v3092 = vpop.f32.mrf.mxu0
  %v3093 = vadd.f32 0.0, %v3092
  %3094 = vdwg.mxu0
  %v3095 = vadd.f32 %v3003, %v3053
  %v3096 = vadd.f32 %v3004, %v3073
  %v3097 = vadd.f32 %v3005, %v3093
  %3098 = vrot.lane.b32.xlu0 %v2381, 118
  %v3099 = vpop.permute.xlu0 %3098
  %3100 = vrot.lane.b32.xlu0 %v2384, 118
  %v3101 = vpop.permute.xlu0 %3100
  %3102 = vrot.lane.b32.xlu0 %v2382, 118
  %v3103 = vpop.permute.xlu0 %3102
  %3104 = vrot.lane.b32.xlu0 %v2385, 118
  %v3105 = vpop.permute.xlu0 %3104
  %3106 = vrot.lane.b32.xlu0 %v2383, 118
  %v3107 = vpop.permute.xlu0 %3106
  %3108 = vrot.lane.b32.xlu0 %v2386, 118
  %v3109 = vpop.permute.xlu0 %3108
  %v3110 = vsel %vm1270, %v3103, %v3107
  %v3111 = vsel %vm1270, %v3105, %v3109
  %v3112 = vsel %vm1270, %v3099, %v3103
  %v3113 = vsel %vm1270, %v3101, %v3105
  %v3114 = vsel %vm1270, %v3107, %v3099
  %v3115 = vsel %vm1270, %v3109, %v3101
  %v3116 = vmul.f32 %v3112, %v1277
  %v3117 = vmul.f32 %v3110, %v1278
  %v3118 = vmul.f32 %v3114, %v1279
  %v3119 = vmul.f32 %v3113, %v1277
  %v3120 = vmul.f32 %v3111, %v1278
  %v3121 = vmul.f32 %v3115, %v1279
  %s3122 = scalar_lea.vmem %s8, 64
  %v3123 = vld [vmem:[%s3122] sm:$0x3f]
  %v3125 = vsel %vm1466, %v3123, 0
  %3127 = vmatpush.msra.mxu0 0.0
  %3128 = vmatpush.msra.mxu0 0.0
  %3129 = vmatpush.msra.mxu0 0.0
  %3130 = vmatpush.msra.mxu0 0.0
  %3131 = vmatpush.msra.mxu0 0.0
  %3132 = vmatpush.msra.mxu0 0.0
  %3133 = vmatpush.msra.mxu0 0.0
  %3134 = vmatpush.msra.mxu0 0.0
  %3135 = vmatpush.msra.mxu0 0.0
  %3136 = vmatpush.msra.mxu0 0.0
  %3137 = vmatpush.msra.mxu0 0.0
  %3138 = vmatpush.msra.mxu0 0.0
  %3139 = vmatpush.msra.mxu0 0.0
  %3140 = vmatpush.msra.mxu0 0.0
  %3141 = vmatpush.msra.mxu0 %v3119
  %3142 = vmatpush.msra.mxu0 %v3116
  %3143 = vmatmul.f32.gmra.mxu0 %v3125
  %v3144 = vpop.f32.mrf.mxu0
  %v3145 = vadd.f32 0.0, %v3144
  %3146 = vdwg.mxu0
  %3147 = vmatpush.msra.mxu0 0.0
  %3148 = vmatpush.msra.mxu0 0.0
  %3149 = vmatpush.msra.mxu0 0.0
  %3150 = vmatpush.msra.mxu0 0.0
  %3151 = vmatpush.msra.mxu0 0.0
  %3152 = vmatpush.msra.mxu0 0.0
  %3153 = vmatpush.msra.mxu0 0.0
  %3154 = vmatpush.msra.mxu0 0.0
  %3155 = vmatpush.msra.mxu0 0.0
  %3156 = vmatpush.msra.mxu0 0.0
  %3157 = vmatpush.msra.mxu0 0.0
  %3158 = vmatpush.msra.mxu0 0.0
  %3159 = vmatpush.msra.mxu0 0.0
  %3160 = vmatpush.msra.mxu0 0.0
  %3161 = vmatpush.msra.mxu0 %v3120
  %3162 = vmatpush.msra.mxu0 %v3117
  %3163 = vmatmul.f32.gmra.mxu0 %v3125
  %v3164 = vpop.f32.mrf.mxu0
  %v3165 = vadd.f32 0.0, %v3164
  %3166 = vdwg.mxu0
  %3167 = vmatpush.msra.mxu0 0.0
  %3168 = vmatpush.msra.mxu0 0.0
  %3169 = vmatpush.msra.mxu0 0.0
  %3170 = vmatpush.msra.mxu0 0.0
  %3171 = vmatpush.msra.mxu0 0.0
  %3172 = vmatpush.msra.mxu0 0.0
  %3173 = vmatpush.msra.mxu0 0.0
  %3174 = vmatpush.msra.mxu0 0.0
  %3175 = vmatpush.msra.mxu0 0.0
  %3176 = vmatpush.msra.mxu0 0.0
  %3177 = vmatpush.msra.mxu0 0.0
  %3178 = vmatpush.msra.mxu0 0.0
  %3179 = vmatpush.msra.mxu0 0.0
  %3180 = vmatpush.msra.mxu0 0.0
  %3181 = vmatpush.msra.mxu0 %v3121
  %3182 = vmatpush.msra.mxu0 %v3118
  %3183 = vmatmul.f32.gmra.mxu0 %v3125
  %v3184 = vpop.f32.mrf.mxu0
  %v3185 = vadd.f32 0.0, %v3184
  %3186 = vdwg.mxu0
  %v3187 = vadd.f32 %v3095, %v3145
  %v3188 = vadd.f32 %v3096, %v3165
  %v3189 = vadd.f32 %v3097, %v3185
  %3190 = vset.pattern.permute.xlu0 2
  %3191 = vperm.xlu0 %3190, %v101
  %v3192 = vpop.permute.xlu0 %3191
  %v3194 = vadd.f32 %v3187, %v3192
  %v3195 = vadd.f32 %v3188, %v3192
  %v3196 = vadd.f32 %v3189, %v3192
  %v3197 = vsub.f32 %v282, %v3194
  %v3198 = vsub.f32 %v322, %v3195
  %v3199 = vsub.f32 %v362, %v3196
  %v3200 = vld [vmem:[%s9] sm:$0xff]
  %v3201 = vld [vmem:[%s9 + $0x8] sm:$0xff]
  %v3202 = vld [vmem:[%s10] sm:$0xff]
  %v3203 = vld [vmem:[%s10 + $0x8] sm:$0xff]
  %v3205 = vsel %vm414, %v3202, 0
  %v3208 = vsel %vm414, %v3203, 0
  %v3211 = vsel %vm421, %v3197, 0
  %v3214 = vsel %vm421, %v3198, 0
  %v3217 = vsel %vm421, %v3199, 0
  %3219 = vmatpush.msra.mxu0 0.0
  %3220 = vmatpush.msra.mxu0 0.0
  %3221 = vmatpush.msra.mxu0 0.0
  %3222 = vmatpush.msra.mxu0 0.0
  %3223 = vmatpush.msra.mxu0 0.0
  %3224 = vmatpush.msra.mxu0 0.0
  %3225 = vmatpush.msra.mxu0 0.0
  %3226 = vmatpush.msra.mxu0 0.0
  %3227 = vmatpush.msra.mxu0 0.0
  %3228 = vmatpush.msra.mxu0 0.0
  %3229 = vmatpush.msra.mxu0 0.0
  %3230 = vmatpush.msra.mxu0 0.0
  %3231 = vmatpush.msra.mxu0 0.0
  %3232 = vmatpush.msra.mxu0 0.0
  %3233 = vmatpush.msra.mxu0 0.0
  %3234 = vmatpush.msra.mxu0 %v3211
  %3235 = vmatmul.f32.gmra.mxu0 %v3205
  %v3236 = vpop.f32.mrf.mxu0
  %v3237 = vadd.f32 0.0, %v3236
  %3238 = vmatmul.f32.gmra.mxu0 %v3208
  %v3239 = vpop.f32.mrf.mxu0
  %v3240 = vadd.f32 0.0, %v3239
  %3241 = vdwg.mxu0
  %3242 = vmatpush.msra.mxu0 0.0
  %3243 = vmatpush.msra.mxu0 0.0
  %3244 = vmatpush.msra.mxu0 0.0
  %3245 = vmatpush.msra.mxu0 0.0
  %3246 = vmatpush.msra.mxu0 0.0
  %3247 = vmatpush.msra.mxu0 0.0
  %3248 = vmatpush.msra.mxu0 0.0
  %3249 = vmatpush.msra.mxu0 0.0
  %3250 = vmatpush.msra.mxu0 0.0
  %3251 = vmatpush.msra.mxu0 0.0
  %3252 = vmatpush.msra.mxu0 0.0
  %3253 = vmatpush.msra.mxu0 0.0
  %3254 = vmatpush.msra.mxu0 0.0
  %3255 = vmatpush.msra.mxu0 0.0
  %3256 = vmatpush.msra.mxu0 0.0
  %3257 = vmatpush.msra.mxu0 %v3214
  %3258 = vmatmul.f32.gmra.mxu0 %v3205
  %v3259 = vpop.f32.mrf.mxu0
  %v3260 = vadd.f32 0.0, %v3259
  %3261 = vmatmul.f32.gmra.mxu0 %v3208
  %v3262 = vpop.f32.mrf.mxu0
  %v3263 = vadd.f32 0.0, %v3262
  %3264 = vdwg.mxu0
  %3265 = vmatpush.msra.mxu0 0.0
  %3266 = vmatpush.msra.mxu0 0.0
  %3267 = vmatpush.msra.mxu0 0.0
  %3268 = vmatpush.msra.mxu0 0.0
  %3269 = vmatpush.msra.mxu0 0.0
  %3270 = vmatpush.msra.mxu0 0.0
  %3271 = vmatpush.msra.mxu0 0.0
  %3272 = vmatpush.msra.mxu0 0.0
  %3273 = vmatpush.msra.mxu0 0.0
  %3274 = vmatpush.msra.mxu0 0.0
  %3275 = vmatpush.msra.mxu0 0.0
  %3276 = vmatpush.msra.mxu0 0.0
  %3277 = vmatpush.msra.mxu0 0.0
  %3278 = vmatpush.msra.mxu0 0.0
  %3279 = vmatpush.msra.mxu0 0.0
  %3280 = vmatpush.msra.mxu0 %v3217
  %3281 = vmatmul.f32.gmra.mxu0 %v3205
  %v3282 = vpop.f32.mrf.mxu0
  %v3283 = vadd.f32 0.0, %v3282
  %3284 = vmatmul.f32.gmra.mxu0 %v3208
  %v3285 = vpop.f32.mrf.mxu0
  %v3286 = vadd.f32 0.0, %v3285
  %3287 = vdwg.mxu0
  %v3289 = vsel %vm414, %v3200, 0
  %v3292 = vsel %vm414, %v3201, 0
  %v3295 = vsel %vm421, %v157, 0
  %v3298 = vsel %vm421, %v197, 0
  %v3301 = vsel %vm421, %v237, 0
  %3303 = vmatpush.msra.mxu0 0.0
  %3304 = vmatpush.msra.mxu0 0.0
  %3305 = vmatpush.msra.mxu0 0.0
  %3306 = vmatpush.msra.mxu0 0.0
  %3307 = vmatpush.msra.mxu0 0.0
  %3308 = vmatpush.msra.mxu0 0.0
  %3309 = vmatpush.msra.mxu0 0.0
  %3310 = vmatpush.msra.mxu0 0.0
  %3311 = vmatpush.msra.mxu0 0.0
  %3312 = vmatpush.msra.mxu0 0.0
  %3313 = vmatpush.msra.mxu0 0.0
  %3314 = vmatpush.msra.mxu0 0.0
  %3315 = vmatpush.msra.mxu0 0.0
  %3316 = vmatpush.msra.mxu0 0.0
  %3317 = vmatpush.msra.mxu0 0.0
  %3318 = vmatpush.msra.mxu0 %v3295
  %3319 = vmatmul.f32.gmra.mxu0 %v3289
  %v3320 = vpop.f32.mrf.mxu0
  %v3321 = vadd.f32 %v3237, %v3320
  %3322 = vmatmul.f32.gmra.mxu0 %v3292
  %v3323 = vpop.f32.mrf.mxu0
  %v3324 = vadd.f32 %v3240, %v3323
  %3325 = vdwg.mxu0
  %3326 = vmatpush.msra.mxu0 0.0
  %3327 = vmatpush.msra.mxu0 0.0
  %3328 = vmatpush.msra.mxu0 0.0
  %3329 = vmatpush.msra.mxu0 0.0
  %3330 = vmatpush.msra.mxu0 0.0
  %3331 = vmatpush.msra.mxu0 0.0
  %3332 = vmatpush.msra.mxu0 0.0
  %3333 = vmatpush.msra.mxu0 0.0
  %3334 = vmatpush.msra.mxu0 0.0
  %3335 = vmatpush.msra.mxu0 0.0
  %3336 = vmatpush.msra.mxu0 0.0
  %3337 = vmatpush.msra.mxu0 0.0
  %3338 = vmatpush.msra.mxu0 0.0
  %3339 = vmatpush.msra.mxu0 0.0
  %3340 = vmatpush.msra.mxu0 0.0
  %3341 = vmatpush.msra.mxu0 %v3298
  %3342 = vmatmul.f32.gmra.mxu0 %v3289
  %v3343 = vpop.f32.mrf.mxu0
  %v3344 = vadd.f32 %v3260, %v3343
  %3345 = vmatmul.f32.gmra.mxu0 %v3292
  %v3346 = vpop.f32.mrf.mxu0
  %v3347 = vadd.f32 %v3263, %v3346
  %3348 = vdwg.mxu0
  %3349 = vmatpush.msra.mxu0 0.0
  %3350 = vmatpush.msra.mxu0 0.0
  %3351 = vmatpush.msra.mxu0 0.0
  %3352 = vmatpush.msra.mxu0 0.0
  %3353 = vmatpush.msra.mxu0 0.0
  %3354 = vmatpush.msra.mxu0 0.0
  %3355 = vmatpush.msra.mxu0 0.0
  %3356 = vmatpush.msra.mxu0 0.0
  %3357 = vmatpush.msra.mxu0 0.0
  %3358 = vmatpush.msra.mxu0 0.0
  %3359 = vmatpush.msra.mxu0 0.0
  %3360 = vmatpush.msra.mxu0 0.0
  %3361 = vmatpush.msra.mxu0 0.0
  %3362 = vmatpush.msra.mxu0 0.0
  %3363 = vmatpush.msra.mxu0 0.0
  %3364 = vmatpush.msra.mxu0 %v3301
  %3365 = vmatmul.f32.gmra.mxu0 %v3289
  %v3366 = vpop.f32.mrf.mxu0
  %v3367 = vadd.f32 %v3283, %v3366
  %3368 = vmatmul.f32.gmra.mxu0 %v3292
  %v3369 = vpop.f32.mrf.mxu0
  %v3370 = vadd.f32 %v3286, %v3369
  %3371 = vdwg.mxu0
  %3372 = vset.pattern.permute.xlu0 3
  %3373 = vperm.xlu0 %3372, %v101
  %v3374 = vpop.permute.xlu0 %3373
  %3376 = vset.pattern.permute.xlu0 3
  %3377 = vperm.xlu0 %3376, %v102
  %v3378 = vpop.permute.xlu0 %3377
  %v3380 = vadd.f32 %v3321, %v3374
  %v3381 = vadd.f32 %v3344, %v3374
  %v3382 = vadd.f32 %v3367, %v3374
  %v3383 = vadd.f32 %v3324, %v3378
  %v3384 = vadd.f32 %v3347, %v3378
  %v3385 = vadd.f32 %v3370, %v3378
  %v3386 = vmax.f32 %v3380, 0.0
  %v3387 = vmax.f32 %v3381, 0.0
  %v3388 = vmax.f32 %v3382, 0.0
  %v3389 = vmax.f32 %v3383, 0.0
  %v3390 = vmax.f32 %v3384, 0.0
  %v3391 = vmax.f32 %v3385, 0.0
  %v3392 = vld [vmem:[%s11] sm:$0x3f]
  %3393 = vset.pattern.permute.xlu0 4
  %3394 = vperm.xlu0 %3393, %v101
  %v3395 = vpop.permute.xlu0 %3394
  %v3398 = vsel %vm1466, %v3392, 0
  %3400 = vmatpush.msra.mxu0 0.0
  %3401 = vmatpush.msra.mxu0 0.0
  %3402 = vmatpush.msra.mxu0 0.0
  %3403 = vmatpush.msra.mxu0 0.0
  %3404 = vmatpush.msra.mxu0 0.0
  %3405 = vmatpush.msra.mxu0 0.0
  %3406 = vmatpush.msra.mxu0 0.0
  %3407 = vmatpush.msra.mxu0 0.0
  %3408 = vmatpush.msra.mxu0 0.0
  %3409 = vmatpush.msra.mxu0 0.0
  %3410 = vmatpush.msra.mxu0 0.0
  %3411 = vmatpush.msra.mxu0 0.0
  %3412 = vmatpush.msra.mxu0 0.0
  %3413 = vmatpush.msra.mxu0 0.0
  %3414 = vmatpush.msra.mxu0 %v3389
  %3415 = vmatpush.msra.mxu0 %v3386
  %3416 = vmatmul.f32.gmra.mxu0 %v3398
  %v3417 = vpop.f32.mrf.mxu0
  %v3418 = vadd.f32 %v3395, %v3417
  %3419 = vdwg.mxu0
  %3420 = vmatpush.msra.mxu0 0.0
  %3421 = vmatpush.msra.mxu0 0.0
  %3422 = vmatpush.msra.mxu0 0.0
  %3423 = vmatpush.msra.mxu0 0.0
  %3424 = vmatpush.msra.mxu0 0.0
  %3425 = vmatpush.msra.mxu0 0.0
  %3426 = vmatpush.msra.mxu0 0.0
  %3427 = vmatpush.msra.mxu0 0.0
  %3428 = vmatpush.msra.mxu0 0.0
  %3429 = vmatpush.msra.mxu0 0.0
  %3430 = vmatpush.msra.mxu0 0.0
  %3431 = vmatpush.msra.mxu0 0.0
  %3432 = vmatpush.msra.mxu0 0.0
  %3433 = vmatpush.msra.mxu0 0.0
  %3434 = vmatpush.msra.mxu0 %v3390
  %3435 = vmatpush.msra.mxu0 %v3387
  %3436 = vmatmul.f32.gmra.mxu0 %v3398
  %v3437 = vpop.f32.mrf.mxu0
  %v3438 = vadd.f32 %v3395, %v3437
  %3439 = vdwg.mxu0
  %3440 = vmatpush.msra.mxu0 0.0
  %3441 = vmatpush.msra.mxu0 0.0
  %3442 = vmatpush.msra.mxu0 0.0
  %3443 = vmatpush.msra.mxu0 0.0
  %3444 = vmatpush.msra.mxu0 0.0
  %3445 = vmatpush.msra.mxu0 0.0
  %3446 = vmatpush.msra.mxu0 0.0
  %3447 = vmatpush.msra.mxu0 0.0
  %3448 = vmatpush.msra.mxu0 0.0
  %3449 = vmatpush.msra.mxu0 0.0
  %3450 = vmatpush.msra.mxu0 0.0
  %3451 = vmatpush.msra.mxu0 0.0
  %3452 = vmatpush.msra.mxu0 0.0
  %3453 = vmatpush.msra.mxu0 0.0
  %3454 = vmatpush.msra.mxu0 %v3391
  %3455 = vmatpush.msra.mxu0 %v3388
  %3456 = vmatmul.f32.gmra.mxu0 %v3398
  %v3457 = vpop.f32.mrf.mxu0
  %v3458 = vadd.f32 %v3395, %v3457
  %3459 = vdwg.mxu0
  %v3460 = vsub.f32 0.0, %v3418
  %v3461 = vsub.f32 0.0, %v3438
  %v3462 = vsub.f32 0.0, %v3458
  %v3463 = vmul.f32 %v3460, 1.442695
  %v3464 = vpow.pop %v3463
  %v3465 = vmul.f32 %v3461, 1.442695
  %v3466 = vpow.pop %v3465
  %v3467 = vmul.f32 %v3462, 1.442695
  %v3468 = vpow.pop %v3467
  %v3469 = vadd.f32 %v3464, 1.0
  %v3470 = vadd.f32 %v3466, 1.0
  %v3471 = vadd.f32 %v3468, 1.0
  %v3472 = vrcp.pop %v3469
  %v3473 = vmul.f32 %v3469, %v3472
  %v3474 = vsub.f32 1.0, %v3473
  %v3475 = vmul.f32 %v3472, %v3474
  %v3476 = vadd.f32 %v3472, %v3475
  %vm3477 = vweird.f32 %v3469
  %vm3478 = vweird.f32 %v3472
  %vm3479 = vmor %vm3477, %vm3478
  %v3480 = vsel %vm3479, %v3472, %v3476
  %v3481 = vand.u32 2147483647, %v3469
  %vm3482 = vcmp.eq.f32.partialorder %v3481, 8.507059e+37
  %v3483 = vand.u32 %v3469, 2147483648
  %v3484 = vor.u32 1.1754944e-38, %v3483
  %v3485 = vsel %vm3482, %v3484, %v3480
  %v3486 = vmul.f32 1.0, %v3485
  %v3487 = vrcp.pop %v3470
  %v3488 = vmul.f32 %v3470, %v3487
  %v3489 = vsub.f32 1.0, %v3488
  %v3490 = vmul.f32 %v3487, %v3489
  %v3491 = vadd.f32 %v3487, %v3490
  %vm3492 = vweird.f32 %v3470
  %vm3493 = vweird.f32 %v3487
  %vm3494 = vmor %vm3492, %vm3493
  %v3495 = vsel %vm3494, %v3487, %v3491
  %v3496 = vand.u32 2147483647, %v3470
  %vm3497 = vcmp.eq.f32.partialorder %v3496, 8.507059e+37
  %v3498 = vand.u32 %v3470, 2147483648
  %v3499 = vor.u32 1.1754944e-38, %v3498
  %v3500 = vsel %vm3497, %v3499, %v3495
  %v3501 = vmul.f32 1.0, %v3500
  %v3502 = vrcp.pop %v3471
  %v3503 = vmul.f32 %v3471, %v3502
  %v3504 = vsub.f32 1.0, %v3503
  %v3505 = vmul.f32 %v3502, %v3504
  %v3506 = vadd.f32 %v3502, %v3505
  %vm3507 = vweird.f32 %v3471
  %vm3508 = vweird.f32 %v3502
  %vm3509 = vmor %vm3507, %vm3508
  %v3510 = vsel %vm3509, %v3502, %v3506
  %v3511 = vand.u32 2147483647, %v3471
  %vm3512 = vcmp.eq.f32.partialorder %v3511, 8.507059e+37
  %v3513 = vand.u32 %v3471, 2147483648
  %v3514 = vor.u32 1.1754944e-38, %v3513
  %v3515 = vsel %vm3512, %v3514, %v3510
  %v3516 = vmul.f32 1.0, %v3515
  %v3517 = vmul.f32 %v157, %v3486
  %v3518 = vmul.f32 %v197, %v3501
  %v3519 = vmul.f32 %v237, %v3516
  %v3520 = vsub.f32 1.0, %v3486
  %v3521 = vsub.f32 1.0, %v3501
  %v3522 = vsub.f32 1.0, %v3516
  %v3523 = vmul.f32 %v3197, %v3520
  %v3524 = vmul.f32 %v3198, %v3521
  %v3525 = vmul.f32 %v3199, %v3522
  %v3526 = vadd.f32 %v3517, %v3523
  %v3527 = vadd.f32 %v3518, %v3524
  %v3528 = vadd.f32 %v3519, %v3525
  %v3529 = vld [vmem:[%s2] sm:$0x3f]
  %v3530 = vld [vmem:[%s2 + $0x8] sm:$0x3f]
  %v3531 = vld [vmem:[%s2 + $0x10] sm:$0x3f]
  %v3532 = vmul.f32 %v3526, %v3529
  %v3533 = vmul.f32 %v3527, %v3530
  %v3534 = vmul.f32 %v3528, %v3531
  %v3535 = vld [vmem:[%s3] sm:$0x3f]
  %v3536 = vld [vmem:[%s3 + $0x8] sm:$0x3f]
  %v3537 = vld [vmem:[%s3 + $0x10] sm:$0x3f]
  %v3538 = vadd.f32 %v3532, %v3535
  %v3539 = vadd.f32 %v3533, %v3536
  %v3540 = vadd.f32 %v3534, %v3537
  %3541 = vst [vmem:[%s13] sm:$0x3f] %v3538
  %3542 = vst [vmem:[%s13 + $0x8] sm:$0x3f] %v3539
  %3543 = vst [vmem:[%s13 + $0x10] sm:$0x3f] %v3540
  // Predicated region
  $region54: #{frequency_domain_enhancer.1} parent=0 // pred_check
    _
  $region55: #{frequency_domain_enhancer.1} parent=0 // pred_check_branch
    %3545 = sbr.rel (0) target = $region57
  $region56: #{frequency_domain_enhancer.1} parent=0 // pred_region
    _
  $region57: #{frequency_domain_enhancer.1} parent=0 // pred_fallthru
    _
  // Predicated region
  $region58: #{frequency_domain_enhancer.1} parent=0 // pred_check
    _
  $region59: #{frequency_domain_enhancer.1} parent=0 // pred_check_branch
    %3547 = sbr.rel (0) target = $region61
  $region60: #{frequency_domain_enhancer.1} parent=0 // pred_region
    _
  $region61: #{frequency_domain_enhancer.1} parent=0 // pred_fallthru
    _

</llo_original>
